<compile_context>
chip_gen: v7x
topology: tpu7x:2x2x1
jax: 0.10.0
libtpu: 0.0.40
codegen_flags: <defaults>
</compile_context>

<pallas_src>
import functools
import math

import jax
import jax.numpy as jnp
from jax.experimental import pallas as pl
from jax.experimental.pallas import tpu as pltpu

LORA_R = 64
LORA_ALPHA = 128
LORA_SCALING = LORA_ALPHA / LORA_R      # dropout = 0 -> identity
TIME_MIX_EXTRA_DIM = 32                 # no '7b' in load_model
TIME_DECAY_EXTRA_DIM = 64


# ---------------------------------------------------------------------------
# Small tiling helpers
# ---------------------------------------------------------------------------
def _round_up(x, m):
    return ((x + m - 1) // m) * m


def _tile(dim, pref, align):
    """Pick (tile, padded_extent) for one dimension.

    For small dims use a full-extent block (always legal).  For big dims use
    `pref` (a multiple of `align`) and pad the array up to a multiple of it.
    """
    if dim <= pref:
        return dim, dim
    return pref, _round_up(dim, pref)


def _pad2(a, rows, cols):
    pr, pc = rows - a.shape[0], cols - a.shape[1]
    if pr or pc:
        a = jnp.pad(a, ((0, pr), (0, pc)))
    return a


def _pad_last(a, n):
    p = n - a.shape[-1]
    if p:
        a = jnp.pad(a, [(0, 0)] * (a.ndim - 1) + [(0, p)])
    return a


# ---------------------------------------------------------------------------
# Fused LoRA linear:  y = x @ W + scale * ((x @ A) @ B)
#   weights stored pre-transposed: W (K,N), A (K,R), B (R,N)
# ---------------------------------------------------------------------------
def _lora_kernel(x_ref, w_ref, a_ref, b_ref, o_ref, acc_ref, xa_ref, *, scale):
    k = pl.program_id(2)

    @pl.when(k == 0)
    def _():
        acc_ref[...] = jnp.zeros_like(acc_ref)
        xa_ref[...] = jnp.zeros_like(xa_ref)

    x = x_ref[...]
    acc_ref[...] += jnp.dot(x, w_ref[...], preferred_element_type=jnp.float32)
    xa_ref[...] += jnp.dot(x, a_ref[...], preferred_element_type=jnp.float32)

    @pl.when(k == pl.num_programs(2) - 1)
    def _():
        lora = jnp.dot(xa_ref[...].astype(b_ref.dtype), b_ref[...],
                       preferred_element_type=jnp.float32)
        o_ref[...] = (acc_ref[...] + scale * lora).astype(o_ref.dtype)


def lora_linear(x2d, p):
    """x2d: (M, K) f32 -> (M, N) f32 using bf16 MXU operands, f32 accum."""
    M, K = x2d.shape
    N = p['weight'].shape[1]
    R = p['lora_A'].shape[1]
    tm, Mp = _tile(M, 256, 8)
    tn, Np = _tile(N, 512, 128)
    tk, Kp = _tile(K, 512, 128)

    xb = _pad2(x2d.astype(jnp.bfloat16), Mp, Kp)
    wb = _pad2(p['weight'].astype(jnp.bfloat16), Kp, Np)
    ab = _pad2(p['lora_A'].astype(jnp.bfloat16), Kp, R)
    bb = _pad2(p['lora_B'].astype(jnp.bfloat16), R, Np)

    out = pl.pallas_call(
        functools.partial(_lora_kernel, scale=LORA_SCALING),
        out_shape=jax.ShapeDtypeStruct((Mp, Np), jnp.float32),
        grid=(Mp // tm, Np // tn, Kp // tk),
        in_specs=[pl.BlockSpec((tm, tk), lambda i, j, k: (i, k)),
                  pl.BlockSpec((tk, tn), lambda i, j, k: (k, j)),
                  pl.BlockSpec((tk, R), lambda i, j, k: (k, 0)),
                  pl.BlockSpec((R, tn), lambda i, j, k: (0, j))],
        out_specs=pl.BlockSpec((tm, tn), lambda i, j, k: (i, j)),
        scratch_shapes=[pltpu.VMEM((tm, tn), jnp.float32),
                        pltpu.VMEM((tm, R), jnp.float32)],
        compiler_params=pltpu.CompilerParams(
            dimension_semantics=("parallel", "parallel", "arbitrary")),
    )(xb, wb, ab, bb)
    if Mp != M or Np != N:
        out = out[:M, :N]
    return out


# ---------------------------------------------------------------------------
# Fused two-stage projection:  out[e] = tanh(x @ W1[e]) @ W2[e]
#   used for time_maa (E=5) and time_decay (E=1)
# ---------------------------------------------------------------------------
def _two_stage_kernel(x_ref, w1_ref, w2_ref, o_ref):
    t = jnp.tanh(jnp.dot(x_ref[...], w1_ref[...],
                         preferred_element_type=jnp.float32))
    o_ref[...] = jnp.dot(t.astype(w2_ref.dtype), w2_ref[...],
                         preferred_element_type=jnp.float32).astype(o_ref.dtype)


def fused_tanh_two_stage(x2d, w1, w2):
    """x2d (M,K), w1 (E,K,R), w2 (E,R,N) -> (E,M,N) f32."""
    M, K = x2d.shape
    E, _, R = w1.shape
    N = w2.shape[2]
    tm, Mp = _tile(M, 256, 8)
    tn, Np = _tile(N, 512, 128)

    xb = _pad2(x2d.astype(jnp.bfloat16), Mp, K)
    w1b = w1.astype(jnp.bfloat16)
    w2b = _pad_last(w2.astype(jnp.bfloat16), Np)

    out = pl.pallas_call(
        _two_stage_kernel,
        out_shape=jax.ShapeDtypeStruct((E, Mp, Np), jnp.float32),
        grid=(E, Mp // tm, Np // tn),
        in_specs=[pl.BlockSpec((tm, K), lambda e, i, j: (i, 0)),
                  pl.BlockSpec((None, K, R), lambda e, i, j: (e, 0, 0)),
                  pl.BlockSpec((None, R, tn), lambda e, i, j: (e, 0, j))],
        out_specs=pl.BlockSpec((None, tm, tn), lambda e, i, j: (e, i, j)),
        compiler_params=pltpu.CompilerParams(
            dimension_semantics=("parallel", "parallel", "parallel")),
    )(xb, w1b, w2b)
    if Mp != M or Np != N:
        out = out[:, :M, :N]
    return out


# ---------------------------------------------------------------------------
# LayerNorm / GroupNorm (row-tiled)
# ---------------------------------------------------------------------------
def _ln_kernel(x_ref, w_ref, b_ref, o_ref, *, eps):
    x = x_ref[...]
    mu = jnp.mean(x, axis=-1, keepdims=True)
    xc = x - mu
    var = jnp.mean(xc * xc, axis=-1, keepdims=True)
    o_ref[...] = xc * jax.lax.rsqrt(var + eps) * w_ref[...] + b_ref[...]


def pallas_layernorm(x2d, w, b, eps=1e-5):
    M, C = x2d.shape
    tm, Mp = _tile(M, 256, 8)
    xb = _pad2(x2d, Mp, C)
    out = pl.pallas_call(
        functools.partial(_ln_kernel, eps=eps),
        out_shape=jax.ShapeDtypeStruct((Mp, C), jnp.float32),
        grid=(Mp // tm,),
        in_specs=[pl.BlockSpec((tm, C), lambda i: (i, 0)),
                  pl.BlockSpec((1, C), lambda i: (0, 0)),
                  pl.BlockSpec((1, C), lambda i: (0, 0))],
        out_specs=pl.BlockSpec((tm, C), lambda i: (i, 0)),
        compiler_params=pltpu.CompilerParams(dimension_semantics=("parallel",)),
    )(xb, w.reshape(1, C), b.reshape(1, C))
    return out[:M] if Mp != M else out


def _gn_kernel(x_ref, w_ref, b_ref, o_ref, *, n_groups, eps):
    M, C = x_ref.shape
    ng = C // n_groups
    x = x_ref[...].reshape(M, n_groups, ng)
    mu = jnp.mean(x, axis=-1, keepdims=True)
    xc = x - mu
    var = jnp.mean(xc * xc, axis=-1, keepdims=True)
    xn = (xc * jax.lax.rsqrt(var + eps)).reshape(M, C)
    o_ref[...] = xn * w_ref[...] + b_ref[...]


def pallas_groupnorm(x2d, w, b, n_groups, eps):
    M, C = x2d.shape
    tm, Mp = _tile(M, 256, 8)
    xb = _pad2(x2d, Mp, C)
    out = pl.pallas_call(
        functools.partial(_gn_kernel, n_groups=n_groups, eps=eps),
        out_shape=jax.ShapeDtypeStruct((Mp, C), jnp.float32),
        grid=(Mp // tm,),
        in_specs=[pl.BlockSpec((tm, C), lambda i: (i, 0)),
                  pl.BlockSpec((1, C), lambda i: (0, 0)),
                  pl.BlockSpec((1, C), lambda i: (0, 0))],
        out_specs=pl.BlockSpec((tm, C), lambda i: (i, 0)),
        compiler_params=pltpu.CompilerParams(dimension_semantics=("parallel",)),
    )(xb, w.reshape(1, C), b.reshape(1, C))
    return out[:M] if Mp != M else out


# ---------------------------------------------------------------------------
# Chunked WKV6 recurrence
#   per (b, h) head:  y_t[i] = sum_j r_t[j] (u[j] k_t[j] v_t[i] + S[j,i])
#                     S[j,i] <- exp(-exp(w_t[j])) S[j,i] + k_t[j] v_t[i]
#   State is stored transposed (S[i,j]) in a VMEM scratch and carried across
#   the chunk grid axis; intra-chunk work is MXU matmuls with causal masks.
# ---------------------------------------------------------------------------
def _wkv6_kernel(r_ref, k_ref, v_ref, w_ref, u_ref, o_ref, s_ref, *, L, N):
    c = pl.program_id(2)

    @pl.when(c == 0)
    def _():
        s_ref[...] = jnp.zeros_like(s_ref)

    r = r_ref[...].astype(jnp.float32)            # (L, N)
    k = k_ref[...].astype(jnp.float32)            # (L, N)
    v = v_ref[...].astype(jnp.float32)            # (L, N)
    w = w_ref[...].astype(jnp.float32)            # (L, N)
    u = u_ref[...].astype(jnp.float32)            # (1, N)

    logd = -jnp.exp(w)                            # per-step log decay (<= 0)

    # Inclusive cumulative log-decay via lower-triangular matmul (MXU).
    row = jax.lax.broadcasted_iota(jnp.int32, (L, L), 0)
    col = jax.lax.broadcasted_iota(jnp.int32, (L, L), 1)
    tri_incl = (row >= col).astype(jnp.float32)
    g = jnp.dot(tri_incl, logd, preferred_element_type=jnp.float32)  # g[s]
    g_excl = g - logd                                                # g[s-1], g_excl[0]=0
    g_last = g[L - 1:L, :]                                           # (1, N)

    # Cross-chunk contribution from the carried state S[i, j].
    y = jax.lax.dot_general(r * jnp.exp(g_excl), s_ref[...],
                            (((1,), (1,)), ((), ())),
                            preferred_element_type=jnp.float32)      # (L, N)

    # Intra-chunk (strictly causal) + diagonal u-bonus.  Mid-chunk shift keeps
    # the two exponents bounded by ~half the chunk's total decay.
    mid = L // 2
    shift = g_excl[mid:mid + 1, :]
    r_hat = r * jnp.exp(jnp.minimum(g_excl - shift, 80.0))
    k_hat = k * jnp.exp(jnp.minimum(shift - g, 80.0))
    att = jax.lax.dot_general(r_hat, k_hat, (((1,), (1,)), ((), ())),
                              preferred_element_type=jnp.float32)    # (L, L)
    diag = jnp.sum(r * u * k, axis=-1, keepdims=True)                # (L, 1)
    att = jnp.where(row > col, att, 0.0)
    att = jnp.where(row == col, diag, att)
    y = y + jnp.dot(att, v, preferred_element_type=jnp.float32)
    o_ref[...] = y.astype(o_ref.dtype)

    # State carry to the next chunk: S[i,j] = exp(g_last[j]) S[i,j]
    #                                        + sum_p exp(g_last-g_p)[j] k_p[j] v_p[i]
    k_end = k * jnp.exp(g_last - g)                                  # (L, N), exps <= 1
    s_ref[...] = (jnp.exp(g_last) * s_ref[...] +
                  jax.lax.dot_general(v, k_end, (((0,), (0,)), ((), ())),
                                      preferred_element_type=jnp.float32))


def wkv6(r, k, v, w, u, head_size):
    """r,k,v,w: (B,T,C) f32; u: (H,N) -> y: (B,T,C) f32 (bf16 kernel I/O)."""
    B, T, C = r.shape
    N = head_size
    H = C // N
    L = 64 if T >= 64 else _round_up(T, 8)       # chunk length
    Tp = _round_up(T, L)

    def prep(a):
        a = a.astype(jnp.bfloat16).reshape(B, T, H, N).transpose(0, 2, 1, 3)
        if Tp != T:
            a = jnp.pad(a, ((0, 0), (0, 0), (0, Tp - T), (0, 0)))
        return a

    r4, k4, v4, w4 = prep(r), prep(k), prep(v), prep(w)
    u2 = u.astype(jnp.bfloat16)                  # (H, N)

    def tok_spec():
        return pl.BlockSpec((None, None, L, N), lambda b, h, c: (b, h, c, 0))

    y = pl.pallas_call(
        functools.partial(_wkv6_kernel, L=L, N=N),
        out_shape=jax.ShapeDtypeStruct((B, H, Tp, N), jnp.float32),
        grid=(B, H, Tp // L),
        in_specs=[tok_spec(), tok_spec(), tok_spec(), tok_spec(),
                  pl.BlockSpec((1, N), lambda b, h, c: (h, 0))],
        out_specs=tok_spec(),
        scratch_shapes=[pltpu.VMEM((N, N), jnp.float32)],
        compiler_params=pltpu.CompilerParams(
            dimension_semantics=("parallel", "parallel", "arbitrary")),
    )(r4, k4, v4, w4, u2)
    if Tp != T:
        y = y[:, :, :T, :]
    return y.transpose(0, 2, 1, 3).reshape(B, T, C)


# ---------------------------------------------------------------------------
# Fused LM head + cross entropy (online logsumexp over vocab tiles)
# ---------------------------------------------------------------------------
def _ce_kernel(x_ref, w_ref, tgt_ref, nll_ref, m_sc, l_sc, t_sc, *, tv, v_real):
    j = pl.program_id(1)

    @pl.when(j == 0)
    def _():
        m_sc[...] = jnp.full_like(m_sc, -jnp.inf)
        l_sc[...] = jnp.zeros_like(l_sc)
        t_sc[...] = jnp.zeros_like(t_sc)

    logits = jnp.dot(x_ref[...], w_ref[...],
                     preferred_element_type=jnp.float32)             # (tm, tv)
    col = j * tv + jax.lax.broadcasted_iota(jnp.int32, logits.shape, 1)
    logits = jnp.where(col < v_real, logits, -jnp.inf)               # mask vocab pad
    tgt = tgt_ref[...]                                               # (tm, 1) int32
    t_sc[...] += jnp.sum(jnp.where(col == tgt, logits, 0.0),
                         axis=1, keepdims=True)
    m_new = jnp.maximum(m_sc[...], jnp.max(logits, axis=1, keepdims=True))
    l_sc[...] = (l_sc[...] * jnp.exp(m_sc[...] - m_new)
                 + jnp.sum(jnp.exp(logits - m_new), axis=1, keepdims=True))
    m_sc[...] = m_new

    @pl.when(j == pl.num_programs(1) - 1)
    def _():
        nll_ref[...] = m_sc[...] + jnp.log(l_sc[...]) - t_sc[...]


def pallas_cross_entropy(x2d, head_w, targets):
    """x2d (M,C) f32, head_w (C,V), targets (M,) int -> per-token NLL (M,) f32."""
    M, C = x2d.shape
    V = head_w.shape[1]
    tm, Mp = _tile(M, 256, 8)
    tv, Vp = _tile(V, 512, 128)

    xb = _pad2(x2d.astype(jnp.bfloat16), Mp, C)
    wb = _pad2(head_w.astype(jnp.bfloat16), C, Vp)
    tgt = targets.astype(jnp.int32)
    if Mp != M:
        tgt = jnp.pad(tgt, (0, Mp - M))
    tgt2 = tgt.reshape(Mp, 1)

    nll = pl.pallas_call(
        functools.partial(_ce_kernel, tv=tv, v_real=V),
        out_shape=jax.ShapeDtypeStruct((Mp, 1), jnp.float32),
        grid=(Mp // tm, Vp // tv),
        in_specs=[pl.BlockSpec((tm, C), lambda i, j: (i, 0)),
                  pl.BlockSpec((C, tv), lambda i, j: (0, j)),
                  pl.BlockSpec((tm, 1), lambda i, j: (i, 0))],
        out_specs=pl.BlockSpec((tm, 1), lambda i, j: (i, 0)),
        scratch_shapes=[pltpu.VMEM((tm, 1), jnp.float32) for _ in range(3)],
        compiler_params=pltpu.CompilerParams(
            dimension_semantics=("parallel", "arbitrary")),
    )(xb, wb, tgt2)
    return nll[:M, 0]


# ---------------------------------------------------------------------------
# Model glue (plain JAX) around the Pallas kernels
# ---------------------------------------------------------------------------
def token_shift(x):
    # nn.ZeroPad2d((0, 0, 1, -1))(x) - x   on a (B, T, C) tensor
    T = x.shape[1]
    shifted = jnp.pad(x, ((0, 0), (1, 0), (0, 0)))[:, :T, :]
    return shifted - x


def tmix_forward(p, x, cfg):
    B, T, C = x.shape
    head_size = cfg['head_size']
    dim_att = cfg['dim_att']
    n_head = dim_att // head_size
    eps_gn = 1e-5 * (cfg['head_size_divisor'] ** 2)
    M = B * T

    xx = token_shift(x)
    xxx = x + xx * p['time_maa_x']
    mixes = fused_tanh_two_stage(xxx.reshape(M, C),
                                 p['time_maa_w1'], p['time_maa_w2'])   # (5, M, C)
    mw, mk, mv, mr, mg = [mixes[e].reshape(B, T, C) for e in range(5)]

    xw = x + xx * (p['time_maa_w'] + mw)
    xk = x + xx * (p['time_maa_k'] + mk)
    xv = x + xx * (p['time_maa_v'] + mv)
    xr = x + xx * (p['time_maa_r'] + mr)
    xg = x + xx * (p['time_maa_g'] + mg)

    r = lora_linear(xr.reshape(M, C), p['receptance']).reshape(B, T, dim_att)
    k = lora_linear(xk.reshape(M, C), p['key']).reshape(B, T, dim_att)
    v = lora_linear(xv.reshape(M, C), p['value']).reshape(B, T, dim_att)
    g = jax.nn.silu(lora_linear(xg.reshape(M, C), p['gate'])).reshape(B, T, dim_att)

    ww = fused_tanh_two_stage(xw.reshape(M, C),
                              p['time_decay_w1'][None],
                              p['time_decay_w2'][None])[0]
    w = p['time_decay'] + ww.reshape(B, T, dim_att)

    y = wkv6(r, k, v, w, p['time_faaaa'], head_size)       # (B, T, dim_att) f32

    yf = pallas_groupnorm(y.reshape(M, dim_att), p['ln_x_w'], p['ln_x_b'],
                          n_head, eps_gn)
    yf = yf.reshape(B, T, dim_att) * g
    return lora_linear(yf.reshape(M, dim_att), p['output']).reshape(B, T, C)


def cmix_forward(p, x):
    B, T, C = x.shape
    xx = token_shift(x)
    xk = x + xx * p['time_maa_k']
    xr = x + xx * p['time_maa_r']
    k = lora_linear(xk.reshape(B * T, C), p['key'])
    k = jnp.square(jax.nn.relu(k))
    kv = lora_linear(k, p['value'])
    r = lora_linear(xr.reshape(B * T, C), p['receptance'])
    return (jax.nn.sigmoid(r) * kv).reshape(B, T, C)


def block_forward(bp, x, cfg):
    B, T, C = x.shape
    if 'ln0_w' in bp:  # layer 0 only
        x = pallas_layernorm(x.reshape(B * T, C),
                             bp['ln0_w'], bp['ln0_b']).reshape(B, T, C)
    h = pallas_layernorm(x.reshape(B * T, C),
                         bp['ln1_w'], bp['ln1_b']).reshape(B, T, C)
    x = x + tmix_forward(bp['att'], h, cfg)
    h = pallas_layernorm(x.reshape(B * T, C),
                         bp['ln2_w'], bp['ln2_b']).reshape(B, T, C)
    x = x + cmix_forward(bp['ffn'], h)
    return x


def rwkv_forward(params, idx, targets, mask, cfg):
    B, T = idx.shape
    C = cfg['n_embd']
    x = jnp.take(params['emb'], idx, axis=0)               # (B, T, C)
    for bp in params['blocks']:
        x = block_forward(bp, x, cfg)
    x2 = pallas_layernorm(x.reshape(B * T, C),
                          params['ln_out_w'], params['ln_out_b'])
    nll = pallas_cross_entropy(x2, params['head_w'], targets.reshape(-1))
    m = mask.reshape(-1).astype(jnp.float32)
    # masked mean == plain mean when mask is all ones (as in the reference)
    loss = jnp.sum(nll * m) / jnp.sum(m)
    return loss  # L2Wrap.forward(loss, logits) == loss


# ---------------------------------------------------------------------------
# Deterministic parameter construction (shapes from the PyTorch __init__,
# but linear weights stored pre-transposed as (in, out) for the TPU kernels)
# ---------------------------------------------------------------------------
def _uniform(key, shape, bound):
    return jax.random.uniform(key, shape, jnp.float32, minval=-bound, maxval=bound)


def init_lora(key, in_f, out_f):
    k1, k2 = jax.random.split(key)
    bound = 1.0 / math.sqrt(in_f)
    return {'weight': _uniform(k1, (in_f, out_f), bound),      # W^T layout
            'lora_A': _uniform(k2, (in_f, LORA_R), bound),     # A^T layout
            'lora_B': jnp.zeros((LORA_R, out_f), jnp.float32)}  # B^T layout


def init_tmix(key, layer_id, cfg):
    n_embd, dim_att = cfg['n_embd'], cfg['dim_att']
    n_layer, head_size = cfg['n_layer'], cfg['head_size']
    n_head = dim_att // head_size
    keys = jax.random.split(key, 9)
    r0 = layer_id / max(n_layer - 1, 1)
    r1 = 1.0 - layer_id / n_layer
    ddd = jnp.arange(n_embd, dtype=jnp.float32) / n_embd
    pow1 = jnp.power(ddd, r1)
    pow_h = jnp.power(ddd, 0.5 * r1)
    n = jnp.arange(dim_att, dtype=jnp.float32)
    return {
        'time_maa_x': (1.0 - pow1).reshape(1, 1, n_embd),
        'time_maa_w': (1.0 - pow1).reshape(1, 1, n_embd),
        'time_maa_k': (1.0 - pow1).reshape(1, 1, n_embd),
        'time_maa_v': (1.0 - (pow1 + 0.3 * r0)).reshape(1, 1, n_embd),
        'time_maa_r': (1.0 - pow_h).reshape(1, 1, n_embd),
        'time_maa_g': (1.0 - pow_h).reshape(1, 1, n_embd),
        # stored as (5, n_embd, 32) so the fused two-stage kernel needs no transpose
        'time_maa_w1': _uniform(keys[0], (5, n_embd, TIME_MIX_EXTRA_DIM), 1e-4),
        'time_maa_w2': _uniform(keys[1], (5, TIME_MIX_EXTRA_DIM, n_embd), 1e-4),
        'time_decay': (-6.0 + 5.0 * jnp.power(n / (dim_att - 1), 0.7 + 1.3 * r0)
                       ).reshape(1, 1, dim_att),
        'time_decay_w1': _uniform(keys[2], (n_embd, TIME_DECAY_EXTRA_DIM), 1e-4),
        'time_decay_w2': _uniform(keys[3], (TIME_DECAY_EXTRA_DIM, dim_att), 1e-4),
        'time_faaaa': (r0 * (1.0 - n / (dim_att - 1))
                       + (jnp.mod(n + 1, 3) - 1) * 0.1).reshape(n_head, head_size),
        'receptance': init_lora(keys[4], n_embd, dim_att),
        'key': init_lora(keys[5], n_embd, dim_att),
        'value': init_lora(keys[6], n_embd, dim_att),
        'output': init_lora(keys[7], dim_att, n_embd),
        'gate': init_lora(keys[8], n_embd, dim_att),
        'ln_x_w': jnp.ones((dim_att,), jnp.float32),
        'ln_x_b': jnp.zeros((dim_att,), jnp.float32),
    }


def init_cmix(key, layer_id, cfg):
    n_embd, dim_ffn, n_layer = cfg['n_embd'], cfg['dim_ffn'], cfg['n_layer']
    keys = jax.random.split(key, 3)
    r1 = 1.0 - layer_id / n_layer
    ddd = jnp.arange(n_embd, dtype=jnp.float32) / n_embd
    return {
        'time_maa_k': (1.0 - jnp.power(ddd, r1)).reshape(1, 1, n_embd),
        'time_maa_r': (1.0 - jnp.power(ddd, r1)).reshape(1, 1, n_embd),
        'key': init_lora(keys[0], n_embd, dim_ffn),
        'receptance': init_lora(keys[1], n_embd, n_embd),
        'value': init_lora(keys[2], dim_ffn, n_embd),
    }


def init_params(key, cfg):
    n_embd, vocab = cfg['n_embd'], cfg['vocab_size']
    keys = jax.random.split(key, cfg['n_layer'] + 2)
    blocks = []
    for l in range(cfg['n_layer']):
        k_att, k_ffn = jax.random.split(keys[l])
        bp = {
            'ln1_w': jnp.ones((n_embd,), jnp.float32),
            'ln1_b': jnp.zeros((n_embd,), jnp.float32),
            'ln2_w': jnp.ones((n_embd,), jnp.float32),
            'ln2_b': jnp.zeros((n_embd,), jnp.float32),
            'att': init_tmix(k_att, l, cfg),
            'ffn': init_cmix(k_ffn, l, cfg),
        }
        if l == 0:
            bp['ln0_w'] = jnp.ones((n_embd,), jnp.float32)
            bp['ln0_b'] = jnp.zeros((n_embd,), jnp.float32)
        blocks.append(bp)
    return {
        'emb': jax.random.normal(keys[-2], (vocab, n_embd), jnp.float32),
        'blocks': blocks,
        'ln_out_w': jnp.ones((n_embd,), jnp.float32),
        'ln_out_b': jnp.zeros((n_embd,), jnp.float32),
        # stored pre-transposed (n_embd, vocab)
        'head_w': _uniform(keys[-1], (n_embd, vocab), 1.0 / math.sqrt(n_embd)),
    }


# ---------------------------------------------------------------------------
if __name__ == "__main__":
    cfg = dict(n_layer=2, n_embd=64, dim_att=64, dim_ffn=256,
               head_size=64, head_size_divisor=8, vocab_size=128, ctx_len=16)

    params = init_params(jax.random.PRNGKey(0), cfg)

    B, T = 2, 8  # T <= ctx_len
    k_idx, k_tgt = jax.random.split(jax.random.PRNGKey(1))
    idx = jax.random.randint(k_idx, (B, T), 0, cfg['vocab_size'], dtype=jnp.int32)
    targets = jax.random.randint(k_tgt, (B, T), 0, cfg['vocab_size'], dtype=jnp.int32)
    mask = jnp.ones((B, T), jnp.bfloat16)   # all-ones mask as in the reference

    fwd = jax.jit(functools.partial(rwkv_forward, cfg=cfg))
    loss = fwd(params, idx, targets, mask)
    jax.block_until_ready(loss)
    assert loss.shape == () and jnp.isfinite(loss)
    print("KERNEL_OK")
</pallas_src>

<mosaic_0001>
module attributes {stable_mosaic.version = 11 : i64} {
  func.func @_ln_kernel(%arg0: i32, %arg1: memref<16x64xf32, #tpu.memory_space<vmem>>, %arg2: memref<1x64xf32, #tpu.memory_space<vmem>>, %arg3: memref<1x64xf32, #tpu.memory_space<vmem>>, %arg4: memref<16x64xf32, #tpu.memory_space<vmem>>) attributes {dimension_semantics = [#tpu.dimension_semantics<parallel>], iteration_bounds = array<i64: 1>, scalar_prefetch = 0 : i64, scratch_operands = 0 : i64, tpu.core_type = #tpu.core_type<tc>, window_params = [{transform_indices = @transform_0, window_bounds = array<i64: 16, 64>}, {pipeline_mode = #tpu.pipeline_mode<synchronous>, transform_indices = @transform_1, window_bounds = array<i64: 1, 64>}, {pipeline_mode = #tpu.pipeline_mode<synchronous>, transform_indices = @transform_2, window_bounds = array<i64: 1, 64>}, {transform_indices = @transform_3, window_bounds = array<i64: 16, 64>}]} {
    %c0 = arith.constant 0 : index
    %c0_0 = arith.constant 0 : index
    %0 = vector.load %arg1[%c0, %c0_0] : memref<16x64xf32, #tpu.memory_space<vmem>>, vector<16x64xf32>
    %cst = arith.constant dense<0.000000e+00> : vector<16xf32>
    %1 = vector.multi_reduction <add>, %0, %cst [1] : vector<16x64xf32> to vector<16xf32>
    %2 = vector.shape_cast %1 : vector<16xf32> to vector<16x1xf32>
    %cst_1 = arith.constant 6.400000e+01 : f32
    %3 = vector.broadcast %cst_1 : f32 to vector<16x1xf32>
    %4 = arith.divf %2, %3 : vector<16x1xf32>
    %5 = vector.broadcast %4 : vector<16x1xf32> to vector<16x64xf32>
    %6 = arith.subf %0, %5 : vector<16x64xf32>
    %7 = arith.mulf %6, %6 : vector<16x64xf32>
    %cst_2 = arith.constant dense<0.000000e+00> : vector<16xf32>
    %8 = vector.multi_reduction <add>, %7, %cst_2 [1] : vector<16x64xf32> to vector<16xf32>
    %9 = vector.shape_cast %8 : vector<16xf32> to vector<16x1xf32>
    %cst_3 = arith.constant 6.400000e+01 : f32
    %10 = vector.broadcast %cst_3 : f32 to vector<16x1xf32>
    %11 = arith.divf %9, %10 : vector<16x1xf32>
    %cst_4 = arith.constant 9.99999974E-6 : f32
    %12 = vector.broadcast %cst_4 : f32 to vector<16x1xf32>
    %13 = arith.addf %11, %12 : vector<16x1xf32>
    %14 = math.rsqrt %13 : vector<16x1xf32>
    %15 = vector.broadcast %14 : vector<16x1xf32> to vector<16x64xf32>
    %16 = arith.mulf %6, %15 : vector<16x64xf32>
    %c0_5 = arith.constant 0 : index
    %c0_6 = arith.constant 0 : index
    %17 = vector.load %arg2[%c0_5, %c0_6] : memref<1x64xf32, #tpu.memory_space<vmem>>, vector<1x64xf32>
    %18 = vector.broadcast %17 : vector<1x64xf32> to vector<16x64xf32>
    %19 = arith.mulf %16, %18 : vector<16x64xf32>
    %c0_7 = arith.constant 0 : index
    %c0_8 = arith.constant 0 : index
    %20 = vector.load %arg3[%c0_7, %c0_8] : memref<1x64xf32, #tpu.memory_space<vmem>>, vector<1x64xf32>
    %21 = vector.broadcast %20 : vector<1x64xf32> to vector<16x64xf32>
    %22 = arith.addf %19, %21 : vector<16x64xf32>
    %c0_9 = arith.constant 0 : index
    %c0_10 = arith.constant 0 : index
    %23 = vector.load %arg4[%c0_9, %c0_10] : memref<16x64xf32, #tpu.memory_space<vmem>>, vector<16x64xf32>
    tpu.vector_store %arg4[%c0_9, %c0_10], %22 {strides = array<i32>} : memref<16x64xf32, #tpu.memory_space<vmem>>, vector<16x64xf32>,
    return
  }
  func.func @transform_0(%arg0: i32) -> (i32, i32) {
    %c0_i32 = arith.constant 0 : i32
    %c0_i32_0 = arith.constant 0 : i32
    return %arg0, %c0_i32 : i32, i32
  }
  func.func @transform_1(%arg0: i32) -> (i32, i32) {
    %c0_i32 = arith.constant 0 : i32
    %c0_i32_0 = arith.constant 0 : i32
    %c0_i32_1 = arith.constant 0 : i32
    return %c0_i32, %c0_i32_0 : i32, i32
  }
  func.func @transform_2(%arg0: i32) -> (i32, i32) {
    %c0_i32 = arith.constant 0 : i32
    %c0_i32_0 = arith.constant 0 : i32
    %c0_i32_1 = arith.constant 0 : i32
    return %c0_i32, %c0_i32_0 : i32, i32
  }
  func.func @transform_3(%arg0: i32) -> (i32, i32) {
    %c0_i32 = arith.constant 0 : i32
    %c0_i32_0 = arith.constant 0 : i32
    return %arg0, %c0_i32 : i32, i32
  }
}

module attributes {stable_mosaic.version = 11 : i64} {
  func.func @_two_stage_kernel(%arg0: i32, %arg1: i32, %arg2: i32, %arg3: memref<16x64xbf16, #tpu.memory_space<vmem>>, %arg4: memref<1x64x32xbf16, #tpu.memory_space<vmem>>, %arg5: memref<1x32x64xbf16, #tpu.memory_space<vmem>>, %arg6: memref<1x16x64xf32, #tpu.memory_space<vmem>>) attributes {dimension_semantics = [#tpu.dimension_semantics<parallel>, #tpu.dimension_semantics<parallel>, #tpu.dimension_semantics<parallel>], iteration_bounds = array<i64: 5, 1, 1>, scalar_prefetch = 0 : i64, scratch_operands = 0 : i64, tpu.core_type = #tpu.core_type<tc>, window_params = [{transform_indices = @transform_0, window_bounds = array<i64: 16, 64>}, {transform_indices = @transform_1, window_bounds = array<i64: 1, 64, 32>}, {transform_indices = @transform_2, window_bounds = array<i64: 1, 32, 64>}, {transform_indices = @transform_3, window_bounds = array<i64: 1, 16, 64>}]} {
    %c0 = arith.constant 0 : index
    %c0_0 = arith.constant 0 : index
    %0 = vector.load %arg3[%c0, %c0_0] : memref<16x64xbf16, #tpu.memory_space<vmem>>, vector<16x64xbf16>
    %c0_1 = arith.constant 0 : index
    %c0_2 = arith.constant 0 : index
    %c0_3 = arith.constant 0 : index
    %1 = vector.load %arg4[%c0_1, %c0_2, %c0_3] : memref<1x64x32xbf16, #tpu.memory_space<vmem>>, vector<1x64x32xbf16>
    %2 = vector.shape_cast %1 : vector<1x64x32xbf16> to vector<64x32xbf16>
    %cst = arith.constant dense<0.000000e+00> : vector<16x32xf32>
    %3 = tpu.matmul %0, %2, %cst {dimension_numbers = #tpu.dot_dimension_numbers<[1], [0], [0], [1], [0, 0, 1, 1], [], []>} : vector<16x64xbf16>, vector<64x32xbf16>, vector<16x32xf32> -> vector<16x32xf32>
    %4 = math.tanh %3 : vector<16x32xf32>
    %5 = arith.truncf %4 : vector<16x32xf32> to vector<16x32xbf16>
    %c0_4 = arith.constant 0 : index
    %c0_5 = arith.constant 0 : index
    %c0_6 = arith.constant 0 : index
    %6 = vector.load %arg5[%c0_4, %c0_5, %c0_6] : memref<1x32x64xbf16, #tpu.memory_space<vmem>>, vector<1x32x64xbf16>
    %7 = vector.shape_cast %6 : vector<1x32x64xbf16> to vector<32x64xbf16>
    %cst_7 = arith.constant dense<0.000000e+00> : vector<16x64xf32>
    %8 = tpu.matmul %5, %7, %cst_7 {dimension_numbers = #tpu.dot_dimension_numbers<[1], [0], [0], [1], [0, 0, 1, 1], [], []>} : vector<16x32xbf16>, vector<32x64xbf16>, vector<16x64xf32> -> vector<16x64xf32>
    %c0_8 = arith.constant 0 : index
    %c0_9 = arith.constant 0 : index
    %c0_10 = arith.constant 0 : index
    %9 = vector.load %arg6[%c0_8, %c0_9, %c0_10] : memref<1x16x64xf32, #tpu.memory_space<vmem>>, vector<1x16x64xf32>
    %10 = vector.shape_cast %9 : vector<1x16x64xf32> to vector<16x64xf32>
    %11 = vector.shape_cast %8 : vector<16x64xf32> to vector<1x16x64xf32>
    tpu.vector_store %arg6[%c0_8, %c0_9, %c0_10], %11 {strides = array<i32>} : memref<1x16x64xf32, #tpu.memory_space<vmem>>, vector<1x16x64xf32>,
    return
  }
  func.func @transform_0(%arg0: i32, %arg1: i32, %arg2: i32) -> (i32, i32) {
    %c0_i32 = arith.constant 0 : i32
    %c0_i32_0 = arith.constant 0 : i32
    return %arg1, %c0_i32 : i32, i32
  }
  func.func @transform_1(%arg0: i32, %arg1: i32, %arg2: i32) -> (i32, i32, i32) {
    %c0_i32 = arith.constant 0 : i32
    %c0_i32_0 = arith.constant 0 : i32
    %c0_i32_1 = arith.constant 0 : i32
    return %arg0, %c0_i32, %c0_i32_0 : i32, i32, i32
  }
  func.func @transform_2(%arg0: i32, %arg1: i32, %arg2: i32) -> (i32, i32, i32) {
    %c0_i32 = arith.constant 0 : i32
    %c0_i32_0 = arith.constant 0 : i32
    return %arg0, %c0_i32, %arg2 : i32, i32, i32
  }
  func.func @transform_3(%arg0: i32, %arg1: i32, %arg2: i32) -> (i32, i32, i32) {
    %c0_i32 = arith.constant 0 : i32
    return %arg0, %arg1, %arg2 : i32, i32, i32
  }
}

module attributes {stable_mosaic.version = 11 : i64} {
  func.func @_lora_kernel(%arg0: i32, %arg1: i32, %arg2: i32, %arg3: memref<16x64xbf16, #tpu.memory_space<vmem>>, %arg4: memref<64x64xbf16, #tpu.memory_space<vmem>>, %arg5: memref<64x64xbf16, #tpu.memory_space<vmem>>, %arg6: memref<64x64xbf16, #tpu.memory_space<vmem>>, %arg7: memref<16x64xf32, #tpu.memory_space<vmem>>, %arg8: memref<16x64xf32, #tpu.memory_space<vmem>>, %arg9: memref<16x64xf32, #tpu.memory_space<vmem>>) attributes {dimension_semantics = [#tpu.dimension_semantics<parallel>, #tpu.dimension_semantics<parallel>, #tpu.dimension_semantics<arbitrary>], iteration_bounds = array<i64: 1, 1, 1>, scalar_prefetch = 0 : i64, scratch_operands = 2 : i64, tpu.core_type = #tpu.core_type<tc>, window_params = [{transform_indices = @transform_0, window_bounds = array<i64: 16, 64>}, {transform_indices = @transform_1, window_bounds = array<i64: 64, 64>}, {transform_indices = @transform_2, window_bounds = array<i64: 64, 64>}, {transform_indices = @transform_3, window_bounds = array<i64: 64, 64>}, {transform_indices = @transform_4, window_bounds = array<i64: 16, 64>}]} {
    %c0_i32 = arith.constant 0 : i32
    %0 = arith.cmpi eq, %arg2, %c0_i32 : i32
    %1 = arith.extui %0 : i1 to i32
    %c0_i32_0 = arith.constant 0 : i32
    %2 = arith.cmpi ne, %1, %c0_i32_0 : i32
    scf.if %2 {
      %cst_17 = arith.constant 0.000000e+00 : f32
      %17 = vector.broadcast %cst_17 : f32 to vector<16x64xf32>
      %c0_18 = arith.constant 0 : index
      %c0_19 = arith.constant 0 : index
      %18 = vector.load %arg8[%c0_18, %c0_19] : memref<16x64xf32, #tpu.memory_space<vmem>>, vector<16x64xf32>
      tpu.vector_store %arg8[%c0_18, %c0_19], %17 {strides = array<i32>} : memref<16x64xf32, #tpu.memory_space<vmem>>, vector<16x64xf32>,
      %cst_20 = arith.constant 0.000000e+00 : f32
      %19 = vector.broadcast %cst_20 : f32 to vector<16x64xf32>
      %c0_21 = arith.constant 0 : index
      %c0_22 = arith.constant 0 : index
      %20 = vector.load %arg9[%c0_21, %c0_22] : memref<16x64xf32, #tpu.memory_space<vmem>>, vector<16x64xf32>
      tpu.vector_store %arg9[%c0_21, %c0_22], %19 {strides = array<i32>} : memref<16x64xf32, #tpu.memory_space<vmem>>, vector<16x64xf32>,
    } else {
    }
    %c0 = arith.constant 0 : index
    %c0_1 = arith.constant 0 : index
    %3 = vector.load %arg3[%c0, %c0_1] : memref<16x64xbf16, #tpu.memory_space<vmem>>, vector<16x64xbf16>
    %c0_2 = arith.constant 0 : index
    %c0_3 = arith.constant 0 : index
    %4 = vector.load %arg8[%c0_2, %c0_3] : memref<16x64xf32, #tpu.memory_space<vmem>>, vector<16x64xf32>
    %c0_4 = arith.constant 0 : index
    %c0_5 = arith.constant 0 : index
    %5 = vector.load %arg4[%c0_4, %c0_5] : memref<64x64xbf16, #tpu.memory_space<vmem>>, vector<64x64xbf16>
    %cst = arith.constant dense<0.000000e+00> : vector<16x64xf32>
    %6 = tpu.matmul %3, %5, %cst {dimension_numbers = #tpu.dot_dimension_numbers<[1], [0], [0], [1], [0, 0, 1, 1], [], []>} : vector<16x64xbf16>, vector<64x64xbf16>, vector<16x64xf32> -> vector<16x64xf32>
    %7 = arith.addf %4, %6 : vector<16x64xf32>
    %c0_6 = arith.constant 0 : index
    %c0_7 = arith.constant 0 : index
    %8 = vector.load %arg8[%c0_6, %c0_7] : memref<16x64xf32, #tpu.memory_space<vmem>>, vector<16x64xf32>
    tpu.vector_store %arg8[%c0_6, %c0_7], %7 {strides = array<i32>} : memref<16x64xf32, #tpu.memory_space<vmem>>, vector<16x64xf32>,
    %c0_8 = arith.constant 0 : index
    %c0_9 = arith.constant 0 : index
    %9 = vector.load %arg9[%c0_8, %c0_9] : memref<16x64xf32, #tpu.memory_space<vmem>>, vector<16x64xf32>
    %c0_10 = arith.constant 0 : index
    %c0_11 = arith.constant 0 : index
    %10 = vector.load %arg5[%c0_10, %c0_11] : memref<64x64xbf16, #tpu.memory_space<vmem>>, vector<64x64xbf16>
    %cst_12 = arith.constant dense<0.000000e+00> : vector<16x64xf32>
    %11 = tpu.matmul %3, %10, %cst_12 {dimension_numbers = #tpu.dot_dimension_numbers<[1], [0], [0], [1], [0, 0, 1, 1], [], []>} : vector<16x64xbf16>, vector<64x64xbf16>, vector<16x64xf32> -> vector<16x64xf32>
    %12 = arith.addf %9, %11 : vector<16x64xf32>
    %c0_13 = arith.constant 0 : index
    %c0_14 = arith.constant 0 : index
    %13 = vector.load %arg9[%c0_13, %c0_14] : memref<16x64xf32, #tpu.memory_space<vmem>>, vector<16x64xf32>
    tpu.vector_store %arg9[%c0_13, %c0_14], %12 {strides = array<i32>} : memref<16x64xf32, #tpu.memory_space<vmem>>, vector<16x64xf32>,
    %c0_i32_15 = arith.constant 0 : i32
    %14 = arith.cmpi eq, %arg2, %c0_i32_15 : i32
    %15 = arith.extui %14 : i1 to i32
    %c0_i32_16 = arith.constant 0 : i32
    %16 = arith.cmpi ne, %15, %c0_i32_16 : i32
    scf.if %16 {
      %c0_17 = arith.constant 0 : index
      %c0_18 = arith.constant 0 : index
      %17 = vector.load %arg9[%c0_17, %c0_18] : memref<16x64xf32, #tpu.memory_space<vmem>>, vector<16x64xf32>
      %18 = arith.truncf %17 : vector<16x64xf32> to vector<16x64xbf16>
      %c0_19 = arith.constant 0 : index
      %c0_20 = arith.constant 0 : index
      %19 = vector.load %arg6[%c0_19, %c0_20] : memref<64x64xbf16, #tpu.memory_space<vmem>>, vector<64x64xbf16>
      %cst_21 = arith.constant dense<0.000000e+00> : vector<16x64xf32>
      %20 = tpu.matmul %18, %19, %cst_21 {dimension_numbers = #tpu.dot_dimension_numbers<[1], [0], [0], [1], [0, 0, 1, 1], [], []>} : vector<16x64xbf16>, vector<64x64xbf16>, vector<16x64xf32> -> vector<16x64xf32>
      %c0_22 = arith.constant 0 : index
      %c0_23 = arith.constant 0 : index
      %21 = vector.load %arg8[%c0_22, %c0_23] : memref<16x64xf32, #tpu.memory_space<vmem>>, vector<16x64xf32>
      %cst_24 = arith.constant 2.000000e+00 : f32
      %22 = vector.broadcast %cst_24 : f32 to vector<16x64xf32>
      %23 = arith.mulf %22, %20 : vector<16x64xf32>
      %24 = arith.addf %21, %23 : vector<16x64xf32>
      %c0_25 = arith.constant 0 : index
      %c0_26 = arith.constant 0 : index
      %25 = vector.load %arg7[%c0_25, %c0_26] : memref<16x64xf32, #tpu.memory_space<vmem>>, vector<16x64xf32>
      tpu.vector_store %arg7[%c0_25, %c0_26], %24 {strides = array<i32>} : memref<16x64xf32, #tpu.memory_space<vmem>>, vector<16x64xf32>,
    } else {
    }
    return
  }
  func.func @transform_0(%arg0: i32, %arg1: i32, %arg2: i32) -> (i32, i32) {
    %c0_i32 = arith.constant 0 : i32
    return %arg0, %arg2 : i32, i32
  }
  func.func @transform_1(%arg0: i32, %arg1: i32, %arg2: i32) -> (i32, i32) {
    %c0_i32 = arith.constant 0 : i32
    return %arg2, %arg1 : i32, i32
  }
  func.func @transform_2(%arg0: i32, %arg1: i32, %arg2: i32) -> (i32, i32) {
    %c0_i32 = arith.constant 0 : i32
    %c0_i32_0 = arith.constant 0 : i32
    return %arg2, %c0_i32 : i32, i32
  }
  func.func @transform_3(%arg0: i32, %arg1: i32, %arg2: i32) -> (i32, i32) {
    %c0_i32 = arith.constant 0 : i32
    %c0_i32_0 = arith.constant 0 : i32
    return %c0_i32, %arg1 : i32, i32
  }
  func.func @transform_4(%arg0: i32, %arg1: i32, %arg2: i32) -> (i32, i32) {
    %c0_i32 = arith.constant 0 : i32
    return %arg0, %arg1 : i32, i32
  }
}

module attributes {stable_mosaic.version = 11 : i64} {
  func.func @_two_stage_kernel(%arg0: i32, %arg1: i32, %arg2: i32, %arg3: memref<16x64xbf16, #tpu.memory_space<vmem>>, %arg4: memref<1x64x64xbf16, #tpu.memory_space<vmem>>, %arg5: memref<1x64x64xbf16, #tpu.memory_space<vmem>>, %arg6: memref<1x16x64xf32, #tpu.memory_space<vmem>>) attributes {dimension_semantics = [#tpu.dimension_semantics<parallel>, #tpu.dimension_semantics<parallel>, #tpu.dimension_semantics<parallel>], iteration_bounds = array<i64: 1, 1, 1>, scalar_prefetch = 0 : i64, scratch_operands = 0 : i64, tpu.core_type = #tpu.core_type<tc>, window_params = [{transform_indices = @transform_0, window_bounds = array<i64: 16, 64>}, {transform_indices = @transform_1, window_bounds = array<i64: 1, 64, 64>}, {transform_indices = @transform_2, window_bounds = array<i64: 1, 64, 64>}, {transform_indices = @transform_3, window_bounds = array<i64: 1, 16, 64>}]} {
    %c0 = arith.constant 0 : index
    %c0_0 = arith.constant 0 : index
    %0 = vector.load %arg3[%c0, %c0_0] : memref<16x64xbf16, #tpu.memory_space<vmem>>, vector<16x64xbf16>
    %c0_1 = arith.constant 0 : index
    %c0_2 = arith.constant 0 : index
    %c0_3 = arith.constant 0 : index
    %1 = vector.load %arg4[%c0_1, %c0_2, %c0_3] : memref<1x64x64xbf16, #tpu.memory_space<vmem>>, vector<1x64x64xbf16>
    %2 = vector.shape_cast %1 : vector<1x64x64xbf16> to vector<64x64xbf16>
    %cst = arith.constant dense<0.000000e+00> : vector<16x64xf32>
    %3 = tpu.matmul %0, %2, %cst {dimension_numbers = #tpu.dot_dimension_numbers<[1], [0], [0], [1], [0, 0, 1, 1], [], []>} : vector<16x64xbf16>, vector<64x64xbf16>, vector<16x64xf32> -> vector<16x64xf32>
    %4 = math.tanh %3 : vector<16x64xf32>
    %5 = arith.truncf %4 : vector<16x64xf32> to vector<16x64xbf16>
    %c0_4 = arith.constant 0 : index
    %c0_5 = arith.constant 0 : index
    %c0_6 = arith.constant 0 : index
    %6 = vector.load %arg5[%c0_4, %c0_5, %c0_6] : memref<1x64x64xbf16, #tpu.memory_space<vmem>>, vector<1x64x64xbf16>
    %7 = vector.shape_cast %6 : vector<1x64x64xbf16> to vector<64x64xbf16>
    %cst_7 = arith.constant dense<0.000000e+00> : vector<16x64xf32>
    %8 = tpu.matmul %5, %7, %cst_7 {dimension_numbers = #tpu.dot_dimension_numbers<[1], [0], [0], [1], [0, 0, 1, 1], [], []>} : vector<16x64xbf16>, vector<64x64xbf16>, vector<16x64xf32> -> vector<16x64xf32>
    %c0_8 = arith.constant 0 : index
    %c0_9 = arith.constant 0 : index
    %c0_10 = arith.constant 0 : index
    %9 = vector.load %arg6[%c0_8, %c0_9, %c0_10] : memref<1x16x64xf32, #tpu.memory_space<vmem>>, vector<1x16x64xf32>
    %10 = vector.shape_cast %9 : vector<1x16x64xf32> to vector<16x64xf32>
    %11 = vector.shape_cast %8 : vector<16x64xf32> to vector<1x16x64xf32>
    tpu.vector_store %arg6[%c0_8, %c0_9, %c0_10], %11 {strides = array<i32>} : memref<1x16x64xf32, #tpu.memory_space<vmem>>, vector<1x16x64xf32>,
    return
  }
  func.func @transform_0(%arg0: i32, %arg1: i32, %arg2: i32) -> (i32, i32) {
    %c0_i32 = arith.constant 0 : i32
    %c0_i32_0 = arith.constant 0 : i32
    return %arg1, %c0_i32 : i32, i32
  }
  func.func @transform_1(%arg0: i32, %arg1: i32, %arg2: i32) -> (i32, i32, i32) {
    %c0_i32 = arith.constant 0 : i32
    %c0_i32_0 = arith.constant 0 : i32
    %c0_i32_1 = arith.constant 0 : i32
    return %arg0, %c0_i32, %c0_i32_0 : i32, i32, i32
  }
  func.func @transform_2(%arg0: i32, %arg1: i32, %arg2: i32) -> (i32, i32, i32) {
    %c0_i32 = arith.constant 0 : i32
    %c0_i32_0 = arith.constant 0 : i32
    return %arg0, %c0_i32, %arg2 : i32, i32, i32
  }
  func.func @transform_3(%arg0: i32, %arg1: i32, %arg2: i32) -> (i32, i32, i32) {
    %c0_i32 = arith.constant 0 : i32
    return %arg0, %arg1, %arg2 : i32, i32, i32
  }
}

module attributes {stable_mosaic.version = 11 : i64} {
  func.func @_gn_kernel(%arg0: i32, %arg1: memref<16x64xf32, #tpu.memory_space<vmem>>, %arg2: memref<1x64xf32, #tpu.memory_space<vmem>>, %arg3: memref<1x64xf32, #tpu.memory_space<vmem>>, %arg4: memref<16x64xf32, #tpu.memory_space<vmem>>) attributes {dimension_semantics = [#tpu.dimension_semantics<parallel>], iteration_bounds = array<i64: 1>, scalar_prefetch = 0 : i64, scratch_operands = 0 : i64, tpu.core_type = #tpu.core_type<tc>, window_params = [{transform_indices = @transform_0, window_bounds = array<i64: 16, 64>}, {pipeline_mode = #tpu.pipeline_mode<synchronous>, transform_indices = @transform_1, window_bounds = array<i64: 1, 64>}, {pipeline_mode = #tpu.pipeline_mode<synchronous>, transform_indices = @transform_2, window_bounds = array<i64: 1, 64>}, {transform_indices = @transform_3, window_bounds = array<i64: 16, 64>}]} {
    %c0 = arith.constant 0 : index
    %c0_0 = arith.constant 0 : index
    %0 = vector.load %arg1[%c0, %c0_0] : memref<16x64xf32, #tpu.memory_space<vmem>>, vector<16x64xf32>
    %1 = vector.shape_cast %0 : vector<16x64xf32> to vector<16x1x64xf32>
    %cst = arith.constant dense<0.000000e+00> : vector<16x1xf32>
    %2 = vector.multi_reduction <add>, %1, %cst [2] : vector<16x1x64xf32> to vector<16x1xf32>
    %3 = vector.shape_cast %2 : vector<16x1xf32> to vector<16x1x1xf32>
    %cst_1 = arith.constant 6.400000e+01 : f32
    %4 = vector.broadcast %cst_1 : f32 to vector<16x1x1xf32>
    %5 = arith.divf %3, %4 : vector<16x1x1xf32>
    %6 = vector.broadcast %5 : vector<16x1x1xf32> to vector<16x1x64xf32>
    %7 = arith.subf %1, %6 : vector<16x1x64xf32>
    %8 = arith.mulf %7, %7 : vector<16x1x64xf32>
    %cst_2 = arith.constant dense<0.000000e+00> : vector<16x1xf32>
    %9 = vector.multi_reduction <add>, %8, %cst_2 [2] : vector<16x1x64xf32> to vector<16x1xf32>
    %10 = vector.shape_cast %9 : vector<16x1xf32> to vector<16x1x1xf32>
    %cst_3 = arith.constant 6.400000e+01 : f32
    %11 = vector.broadcast %cst_3 : f32 to vector<16x1x1xf32>
    %12 = arith.divf %10, %11 : vector<16x1x1xf32>
    %cst_4 = arith.constant 6.400000e-04 : f32
    %13 = vector.broadcast %cst_4 : f32 to vector<16x1x1xf32>
    %14 = arith.addf %12, %13 : vector<16x1x1xf32>
    %15 = math.rsqrt %14 : vector<16x1x1xf32>
    %16 = vector.broadcast %15 : vector<16x1x1xf32> to vector<16x1x64xf32>
    %17 = arith.mulf %7, %16 : vector<16x1x64xf32>
    %18 = vector.shape_cast %17 : vector<16x1x64xf32> to vector<16x64xf32>
    %c0_5 = arith.constant 0 : index
    %c0_6 = arith.constant 0 : index
    %19 = vector.load %arg2[%c0_5, %c0_6] : memref<1x64xf32, #tpu.memory_space<vmem>>, vector<1x64xf32>
    %20 = vector.broadcast %19 : vector<1x64xf32> to vector<16x64xf32>
    %21 = arith.mulf %18, %20 : vector<16x64xf32>
    %c0_7 = arith.constant 0 : index
    %c0_8 = arith.constant 0 : index
    %22 = vector.load %arg3[%c0_7, %c0_8] : memref<1x64xf32, #tpu.memory_space<vmem>>, vector<1x64xf32>
    %23 = vector.broadcast %22 : vector<1x64xf32> to vector<16x64xf32>
    %24 = arith.addf %21, %23 : vector<16x64xf32>
    %c0_9 = arith.constant 0 : index
    %c0_10 = arith.constant 0 : index
    %25 = vector.load %arg4[%c0_9, %c0_10] : memref<16x64xf32, #tpu.memory_space<vmem>>, vector<16x64xf32>
    tpu.vector_store %arg4[%c0_9, %c0_10], %24 {strides = array<i32>} : memref<16x64xf32, #tpu.memory_space<vmem>>, vector<16x64xf32>,
    return
  }
  func.func @transform_0(%arg0: i32) -> (i32, i32) {
    %c0_i32 = arith.constant 0 : i32
    %c0_i32_0 = arith.constant 0 : i32
    return %arg0, %c0_i32 : i32, i32
  }
  func.func @transform_1(%arg0: i32) -> (i32, i32) {
    %c0_i32 = arith.constant 0 : i32
    %c0_i32_0 = arith.constant 0 : i32
    %c0_i32_1 = arith.constant 0 : i32
    return %c0_i32, %c0_i32_0 : i32, i32
  }
  func.func @transform_2(%arg0: i32) -> (i32, i32) {
    %c0_i32 = arith.constant 0 : i32
    %c0_i32_0 = arith.constant 0 : i32
    %c0_i32_1 = arith.constant 0 : i32
    return %c0_i32, %c0_i32_0 : i32, i32
  }
  func.func @transform_3(%arg0: i32) -> (i32, i32) {
    %c0_i32 = arith.constant 0 : i32
    %c0_i32_0 = arith.constant 0 : i32
    return %arg0, %c0_i32 : i32, i32
  }
}

module attributes {stable_mosaic.version = 11 : i64} {
  func.func @_wkv6_kernel(%arg0: i32, %arg1: i32, %arg2: i32, %arg3: memref<1x1x8x64xbf16, #tpu.memory_space<vmem>>, %arg4: memref<1x1x8x64xbf16, #tpu.memory_space<vmem>>, %arg5: memref<1x1x8x64xbf16, #tpu.memory_space<vmem>>, %arg6: memref<1x1x8x64xbf16, #tpu.memory_space<vmem>>, %arg7: memref<1x64xbf16, #tpu.memory_space<vmem>>, %arg8: memref<1x1x8x64xf32, #tpu.memory_space<vmem>>, %arg9: memref<64x64xf32, #tpu.memory_space<vmem>>) attributes {dimension_semantics = [#tpu.dimension_semantics<parallel>, #tpu.dimension_semantics<parallel>, #tpu.dimension_semantics<arbitrary>], iteration_bounds = array<i64: 2, 1, 1>, scalar_prefetch = 0 : i64, scratch_operands = 1 : i64, tpu.core_type = #tpu.core_type<tc>, window_params = [{transform_indices = @transform_0, window_bounds = array<i64: 1, 1, 8, 64>}, {transform_indices = @transform_1, window_bounds = array<i64: 1, 1, 8, 64>}, {transform_indices = @transform_2, window_bounds = array<i64: 1, 1, 8, 64>}, {transform_indices = @transform_3, window_bounds = array<i64: 1, 1, 8, 64>}, {transform_indices = @transform_4, window_bounds = array<i64: 1, 64>}, {transform_indices = @transform_5, window_bounds = array<i64: 1, 1, 8, 64>}]} {
    %c0_i32 = arith.constant 0 : i32
    %0 = arith.cmpi eq, %arg2, %c0_i32 : i32
    %1 = arith.extui %0 : i1 to i32
    %c0_i32_0 = arith.constant 0 : i32
    %2 = arith.cmpi ne, %1, %c0_i32_0 : i32
    scf.if %2 {
      %cst_37 = arith.constant 0.000000e+00 : f32
      %74 = vector.broadcast %cst_37 : f32 to vector<64x64xf32>
      %c0_38 = arith.constant 0 : index
      %c0_39 = arith.constant 0 : index
      %75 = vector.load %arg9[%c0_38, %c0_39] : memref<64x64xf32, #tpu.memory_space<vmem>>, vector<64x64xf32>
      tpu.vector_store %arg9[%c0_38, %c0_39], %74 {strides = array<i32>} : memref<64x64xf32, #tpu.memory_space<vmem>>, vector<64x64xf32>,
    } else {
    }
    %c0 = arith.constant 0 : index
    %c0_1 = arith.constant 0 : index
    %c0_2 = arith.constant 0 : index
    %c0_3 = arith.constant 0 : index
    %3 = vector.load %arg3[%c0, %c0_1, %c0_2, %c0_3] : memref<1x1x8x64xbf16, #tpu.memory_space<vmem>>, vector<1x1x8x64xbf16>
    %4 = vector.shape_cast %3 : vector<1x1x8x64xbf16> to vector<8x64xbf16>
    %5 = arith.extf %4 : vector<8x64xbf16> to vector<8x64xf32>
    %c0_4 = arith.constant 0 : index
    %c0_5 = arith.constant 0 : index
    %c0_6 = arith.constant 0 : index
    %c0_7 = arith.constant 0 : index
    %6 = vector.load %arg4[%c0_4, %c0_5, %c0_6, %c0_7] : memref<1x1x8x64xbf16, #tpu.memory_space<vmem>>, vector<1x1x8x64xbf16>
    %7 = vector.shape_cast %6 : vector<1x1x8x64xbf16> to vector<8x64xbf16>
    %8 = arith.extf %7 : vector<8x64xbf16> to vector<8x64xf32>
    %c0_8 = arith.constant 0 : index
    %c0_9 = arith.constant 0 : index
    %c0_10 = arith.constant 0 : index
    %c0_11 = arith.constant 0 : index
    %9 = vector.load %arg5[%c0_8, %c0_9, %c0_10, %c0_11] : memref<1x1x8x64xbf16, #tpu.memory_space<vmem>>, vector<1x1x8x64xbf16>
    %10 = vector.shape_cast %9 : vector<1x1x8x64xbf16> to vector<8x64xbf16>
    %11 = arith.extf %10 : vector<8x64xbf16> to vector<8x64xf32>
    %c0_12 = arith.constant 0 : index
    %c0_13 = arith.constant 0 : index
    %c0_14 = arith.constant 0 : index
    %c0_15 = arith.constant 0 : index
    %12 = vector.load %arg6[%c0_12, %c0_13, %c0_14, %c0_15] : memref<1x1x8x64xbf16, #tpu.memory_space<vmem>>, vector<1x1x8x64xbf16>
    %13 = vector.shape_cast %12 : vector<1x1x8x64xbf16> to vector<8x64xbf16>
    %14 = arith.extf %13 : vector<8x64xbf16> to vector<8x64xf32>
    %c0_16 = arith.constant 0 : index
    %c0_17 = arith.constant 0 : index
    %15 = vector.load %arg7[%c0_16, %c0_17] : memref<1x64xbf16, #tpu.memory_space<vmem>>, vector<1x64xbf16>
    %16 = arith.extf %15 : vector<1x64xbf16> to vector<1x64xf32>
    %17 = math.exp %14 : vector<8x64xf32>
    %cst = arith.constant 0.000000e+00 : f32
    %18 = vector.broadcast %cst : f32 to vector<8x64xf32>
    %19 = arith.subf %18, %17 : vector<8x64xf32>
    %20 = tpu.iota {dimensions = array<i32: 0>} : vector<8x8xi32>
    %21 = tpu.iota {dimensions = array<i32: 1>} : vector<8x8xi32>
    %22 = arith.cmpi sge, %20, %21 : vector<8x8xi32>
    %23 = arith.extui %22 : vector<8x8xi1> to vector<8x8xi32>
    %24 = arith.sitofp %23 : vector<8x8xi32> to vector<8x8xf32>
    %cst_18 = arith.constant dense<0.000000e+00> : vector<8x64xf32>
    %25 = tpu.matmul %24, %19, %cst_18 {dimension_numbers = #tpu.dot_dimension_numbers<[1], [0], [0], [1], [0, 0, 1, 1], [], []>} : vector<8x8xf32>, vector<8x64xf32>, vector<8x64xf32> -> vector<8x64xf32>
    %26 = arith.subf %25, %19 : vector<8x64xf32>
    %27 = vector.extract_strided_slice %25 {offsets = [7, 0], sizes = [1, 64], strides = [1, 1]} : vector<8x64xf32> to vector<1x64xf32>
    %28 = math.exp %26 : vector<8x64xf32>
    %29 = arith.mulf %5, %28 : vector<8x64xf32>
    %c0_19 = arith.constant 0 : index
    %c0_20 = arith.constant 0 : index
    %30 = vector.load %arg9[%c0_19, %c0_20] : memref<64x64xf32, #tpu.memory_space<vmem>>, vector<64x64xf32>
    %cst_21 = arith.constant dense<0.000000e+00> : vector<8x64xf32>
    %31 = tpu.matmul %29, %30, %cst_21 {dimension_numbers = #tpu.dot_dimension_numbers<[1], [1], [0], [0], [0, 0, 1, 0], [], []>} : vector<8x64xf32>, vector<64x64xf32>, vector<8x64xf32> -> vector<8x64xf32>
    %32 = vector.extract_strided_slice %26 {offsets = [4, 0], sizes = [1, 64], strides = [1, 1]} : vector<8x64xf32> to vector<1x64xf32>
    %33 = vector.broadcast %32 : vector<1x64xf32> to vector<8x64xf32>
    %34 = arith.subf %26, %33 : vector<8x64xf32>
    %cst_22 = arith.constant 8.000000e+01 : f32
    %35 = vector.broadcast %cst_22 : f32 to vector<8x64xf32>
    %36 = arith.minimumf %34, %35 : vector<8x64xf32>
    %37 = math.exp %36 : vector<8x64xf32>
    %38 = arith.mulf %5, %37 : vector<8x64xf32>
    %39 = vector.broadcast %32 : vector<1x64xf32> to vector<8x64xf32>
    %40 = arith.subf %39, %25 : vector<8x64xf32>
    %cst_23 = arith.constant 8.000000e+01 : f32
    %41 = vector.broadcast %cst_23 : f32 to vector<8x64xf32>
    %42 = arith.minimumf %40, %41 : vector<8x64xf32>
    %43 = math.exp %42 : vector<8x64xf32>
    %44 = arith.mulf %8, %43 : vector<8x64xf32>
    %cst_24 = arith.constant dense<0.000000e+00> : vector<8x8xf32>
    %45 = tpu.matmul %38, %44, %cst_24 {dimension_numbers = #tpu.dot_dimension_numbers<[1], [1], [0], [0], [0, 0, 1, 0], [], []>} : vector<8x64xf32>, vector<8x64xf32>, vector<8x8xf32> -> vector<8x8xf32>
    %46 = vector.broadcast %16 : vector<1x64xf32> to vector<8x64xf32>
    %47 = arith.mulf %5, %46 : vector<8x64xf32>
    %48 = arith.mulf %47, %8 : vector<8x64xf32>
    %cst_25 = arith.constant dense<0.000000e+00> : vector<8xf32>
    %49 = vector.multi_reduction <add>, %48, %cst_25 [1] : vector<8x64xf32> to vector<8xf32>
    %50 = vector.shape_cast %49 : vector<8xf32> to vector<8x1xf32>
    %51 = arith.cmpi sgt, %20, %21 : vector<8x8xi32>
    %cst_26 = arith.constant 0.000000e+00 : f32
    %52 = vector.broadcast %cst_26 : f32 to vector<8x8xf32>
    %53 = arith.select %51, %45, %52 : vector<8x8xi1>, vector<8x8xf32>
    %54 = arith.cmpi eq, %20, %21 : vector<8x8xi32>
    %55 = vector.shape_cast %50 : vector<8x1xf32> to vector<8x1xf32>
    %56 = vector.broadcast %55 : vector<8x1xf32> to vector<8x8xf32>
    %57 = arith.select %54, %56, %53 : vector<8x8xi1>, vector<8x8xf32>
    %cst_27 = arith.constant dense<0.000000e+00> : vector<8x64xf32>
    %58 = tpu.matmul %57, %11, %cst_27 {dimension_numbers = #tpu.dot_dimension_numbers<[1], [0], [0], [1], [0, 0, 1, 1], [], []>} : vector<8x8xf32>, vector<8x64xf32>, vector<8x64xf32> -> vector<8x64xf32>
    %59 = arith.addf %31, %58 : vector<8x64xf32>
    %c0_28 = arith.constant 0 : index
    %c0_29 = arith.constant 0 : index
    %c0_30 = arith.constant 0 : index
    %c0_31 = arith.constant 0 : index
    %60 = vector.load %arg8[%c0_28, %c0_29, %c0_30, %c0_31] : memref<1x1x8x64xf32, #tpu.memory_space<vmem>>, vector<1x1x8x64xf32>
    %61 = vector.shape_cast %60 : vector<1x1x8x64xf32> to vector<8x64xf32>
    %62 = vector.shape_cast %59 : vector<8x64xf32> to vector<1x1x8x64xf32>
    tpu.vector_store %arg8[%c0_28, %c0_29, %c0_30, %c0_31], %62 {strides = array<i32>} : memref<1x1x8x64xf32, #tpu.memory_space<vmem>>, vector<1x1x8x64xf32>,
    %63 = vector.broadcast %27 : vector<1x64xf32> to vector<8x64xf32>
    %64 = arith.subf %63, %25 : vector<8x64xf32>
    %65 = math.exp %64 : vector<8x64xf32>
    %66 = arith.mulf %8, %65 : vector<8x64xf32>
    %67 = math.exp %27 : vector<1x64xf32>
    %c0_32 = arith.constant 0 : index
    %c0_33 = arith.constant 0 : index
    %68 = vector.load %arg9[%c0_32, %c0_33] : memref<64x64xf32, #tpu.memory_space<vmem>>, vector<64x64xf32>
    %69 = vector.broadcast %67 : vector<1x64xf32> to vector<64x64xf32>
    %70 = arith.mulf %69, %68 : vector<64x64xf32>
    %cst_34 = arith.constant dense<0.000000e+00> : vector<64x64xf32>
    %71 = tpu.matmul %11, %66, %cst_34 {dimension_numbers = #tpu.dot_dimension_numbers<[0], [0], [1], [1], [0, 1, 1, 1], [], []>} : vector<8x64xf32>, vector<8x64xf32>, vector<64x64xf32> -> vector<64x64xf32>
    %72 = arith.addf %70, %71 : vector<64x64xf32>
    %c0_35 = arith.constant 0 : index
    %c0_36 = arith.constant 0 : index
    %73 = vector.load %arg9[%c0_35, %c0_36] : memref<64x64xf32, #tpu.memory_space<vmem>>, vector<64x64xf32>
    tpu.vector_store %arg9[%c0_35, %c0_36], %72 {strides = array<i32>} : memref<64x64xf32, #tpu.memory_space<vmem>>, vector<64x64xf32>,
    return
  }
  func.func @transform_0(%arg0: i32, %arg1: i32, %arg2: i32) -> (i32, i32, i32, i32) {
    %c0_i32 = arith.constant 0 : i32
    %c0_i32_0 = arith.constant 0 : i32
    return %arg0, %arg1, %arg2, %c0_i32 : i32, i32, i32, i32
  }
  func.func @transform_1(%arg0: i32, %arg1: i32, %arg2: i32) -> (i32, i32, i32, i32) {
    %c0_i32 = arith.constant 0 : i32
    %c0_i32_0 = arith.constant 0 : i32
    return %arg0, %arg1, %arg2, %c0_i32 : i32, i32, i32, i32
  }
  func.func @transform_2(%arg0: i32, %arg1: i32, %arg2: i32) -> (i32, i32, i32, i32) {
    %c0_i32 = arith.constant 0 : i32
    %c0_i32_0 = arith.constant 0 : i32
    return %arg0, %arg1, %arg2, %c0_i32 : i32, i32, i32, i32
  }
  func.func @transform_3(%arg0: i32, %arg1: i32, %arg2: i32) -> (i32, i32, i32, i32) {
    %c0_i32 = arith.constant 0 : i32
    %c0_i32_0 = arith.constant 0 : i32
    return %arg0, %arg1, %arg2, %c0_i32 : i32, i32, i32, i32
  }
  func.func @transform_4(%arg0: i32, %arg1: i32, %arg2: i32) -> (i32, i32) {
    %c0_i32 = arith.constant 0 : i32
    %c0_i32_0 = arith.constant 0 : i32
    return %arg1, %c0_i32 : i32, i32
  }
  func.func @transform_5(%arg0: i32, %arg1: i32, %arg2: i32) -> (i32, i32, i32, i32) {
    %c0_i32 = arith.constant 0 : i32
    %c0_i32_0 = arith.constant 0 : i32
    return %arg0, %arg1, %arg2, %c0_i32 : i32, i32, i32, i32
  }
}

module attributes {stable_mosaic.version = 11 : i64} {
  func.func @_lora_kernel(%arg0: i32, %arg1: i32, %arg2: i32, %arg3: memref<16x64xbf16, #tpu.memory_space<vmem>>, %arg4: memref<64x256xbf16, #tpu.memory_space<vmem>>, %arg5: memref<64x64xbf16, #tpu.memory_space<vmem>>, %arg6: memref<64x256xbf16, #tpu.memory_space<vmem>>, %arg7: memref<16x256xf32, #tpu.memory_space<vmem>>, %arg8: memref<16x256xf32, #tpu.memory_space<vmem>>, %arg9: memref<16x64xf32, #tpu.memory_space<vmem>>) attributes {dimension_semantics = [#tpu.dimension_semantics<parallel>, #tpu.dimension_semantics<parallel>, #tpu.dimension_semantics<arbitrary>], iteration_bounds = array<i64: 1, 1, 1>, scalar_prefetch = 0 : i64, scratch_operands = 2 : i64, tpu.core_type = #tpu.core_type<tc>, window_params = [{transform_indices = @transform_0, window_bounds = array<i64: 16, 64>}, {transform_indices = @transform_1, window_bounds = array<i64: 64, 256>}, {transform_indices = @transform_2, window_bounds = array<i64: 64, 64>}, {transform_indices = @transform_3, window_bounds = array<i64: 64, 256>}, {transform_indices = @transform_4, window_bounds = array<i64: 16, 256>}]} {
    %c0_i32 = arith.constant 0 : i32
    %0 = arith.cmpi eq, %arg2, %c0_i32 : i32
    %1 = arith.extui %0 : i1 to i32
    %c0_i32_0 = arith.constant 0 : i32
    %2 = arith.cmpi ne, %1, %c0_i32_0 : i32
    scf.if %2 {
      %cst_17 = arith.constant 0.000000e+00 : f32
      %17 = vector.broadcast %cst_17 : f32 to vector<16x256xf32>
      %c0_18 = arith.constant 0 : index
      %c0_19 = arith.constant 0 : index
      %18 = vector.load %arg8[%c0_18, %c0_19] : memref<16x256xf32, #tpu.memory_space<vmem>>, vector<16x256xf32>
      tpu.vector_store %arg8[%c0_18, %c0_19], %17 {strides = array<i32>} : memref<16x256xf32, #tpu.memory_space<vmem>>, vector<16x256xf32>,
      %cst_20 = arith.constant 0.000000e+00 : f32
      %19 = vector.broadcast %cst_20 : f32 to vector<16x64xf32>
      %c0_21 = arith.constant 0 : index
      %c0_22 = arith.constant 0 : index
      %20 = vector.load %arg9[%c0_21, %c0_22] : memref<16x64xf32, #tpu.memory_space<vmem>>, vector<16x64xf32>
      tpu.vector_store %arg9[%c0_21, %c0_22], %19 {strides = array<i32>} : memref<16x64xf32, #tpu.memory_space<vmem>>, vector<16x64xf32>,
    } else {
    }
    %c0 = arith.constant 0 : index
    %c0_1 = arith.constant 0 : index
    %3 = vector.load %arg3[%c0, %c0_1] : memref<16x64xbf16, #tpu.memory_space<vmem>>, vector<16x64xbf16>
    %c0_2 = arith.constant 0 : index
    %c0_3 = arith.constant 0 : index
    %4 = vector.load %arg8[%c0_2, %c0_3] : memref<16x256xf32, #tpu.memory_space<vmem>>, vector<16x256xf32>
    %c0_4 = arith.constant 0 : index
    %c0_5 = arith.constant 0 : index
    %5 = vector.load %arg4[%c0_4, %c0_5] : memref<64x256xbf16, #tpu.memory_space<vmem>>, vector<64x256xbf16>
    %cst = arith.constant dense<0.000000e+00> : vector<16x256xf32>
    %6 = tpu.matmul %3, %5, %cst {dimension_numbers = #tpu.dot_dimension_numbers<[1], [0], [0], [1], [0, 0, 1, 1], [], []>} : vector<16x64xbf16>, vector<64x256xbf16>, vector<16x256xf32> -> vector<16x256xf32>
    %7 = arith.addf %4, %6 : vector<16x256xf32>
    %c0_6 = arith.constant 0 : index
    %c0_7 = arith.constant 0 : index
    %8 = vector.load %arg8[%c0_6, %c0_7] : memref<16x256xf32, #tpu.memory_space<vmem>>, vector<16x256xf32>
    tpu.vector_store %arg8[%c0_6, %c0_7], %7 {strides = array<i32>} : memref<16x256xf32, #tpu.memory_space<vmem>>, vector<16x256xf32>,
    %c0_8 = arith.constant 0 : index
    %c0_9 = arith.constant 0 : index
    %9 = vector.load %arg9[%c0_8, %c0_9] : memref<16x64xf32, #tpu.memory_space<vmem>>, vector<16x64xf32>
    %c0_10 = arith.constant 0 : index
    %c0_11 = arith.constant 0 : index
    %10 = vector.load %arg5[%c0_10, %c0_11] : memref<64x64xbf16, #tpu.memory_space<vmem>>, vector<64x64xbf16>
    %cst_12 = arith.constant dense<0.000000e+00> : vector<16x64xf32>
    %11 = tpu.matmul %3, %10, %cst_12 {dimension_numbers = #tpu.dot_dimension_numbers<[1], [0], [0], [1], [0, 0, 1, 1], [], []>} : vector<16x64xbf16>, vector<64x64xbf16>, vector<16x64xf32> -> vector<16x64xf32>
    %12 = arith.addf %9, %11 : vector<16x64xf32>
    %c0_13 = arith.constant 0 : index
    %c0_14 = arith.constant 0 : index
    %13 = vector.load %arg9[%c0_13, %c0_14] : memref<16x64xf32, #tpu.memory_space<vmem>>, vector<16x64xf32>
    tpu.vector_store %arg9[%c0_13, %c0_14], %12 {strides = array<i32>} : memref<16x64xf32, #tpu.memory_space<vmem>>, vector<16x64xf32>,
    %c0_i32_15 = arith.constant 0 : i32
    %14 = arith.cmpi eq, %arg2, %c0_i32_15 : i32
    %15 = arith.extui %14 : i1 to i32
    %c0_i32_16 = arith.constant 0 : i32
    %16 = arith.cmpi ne, %15, %c0_i32_16 : i32
    scf.if %16 {
      %c0_17 = arith.constant 0 : index
      %c0_18 = arith.constant 0 : index
      %17 = vector.load %arg9[%c0_17, %c0_18] : memref<16x64xf32, #tpu.memory_space<vmem>>, vector<16x64xf32>
      %18 = arith.truncf %17 : vector<16x64xf32> to vector<16x64xbf16>
      %c0_19 = arith.constant 0 : index
      %c0_20 = arith.constant 0 : index
      %19 = vector.load %arg6[%c0_19, %c0_20] : memref<64x256xbf16, #tpu.memory_space<vmem>>, vector<64x256xbf16>
      %cst_21 = arith.constant dense<0.000000e+00> : vector<16x256xf32>
      %20 = tpu.matmul %18, %19, %cst_21 {dimension_numbers = #tpu.dot_dimension_numbers<[1], [0], [0], [1], [0, 0, 1, 1], [], []>} : vector<16x64xbf16>, vector<64x256xbf16>, vector<16x256xf32> -> vector<16x256xf32>
      %c0_22 = arith.constant 0 : index
      %c0_23 = arith.constant 0 : index
      %21 = vector.load %arg8[%c0_22, %c0_23] : memref<16x256xf32, #tpu.memory_space<vmem>>, vector<16x256xf32>
      %cst_24 = arith.constant 2.000000e+00 : f32
      %22 = vector.broadcast %cst_24 : f32 to vector<16x256xf32>
      %23 = arith.mulf %22, %20 : vector<16x256xf32>
      %24 = arith.addf %21, %23 : vector<16x256xf32>
      %c0_25 = arith.constant 0 : index
      %c0_26 = arith.constant 0 : index
      %25 = vector.load %arg7[%c0_25, %c0_26] : memref<16x256xf32, #tpu.memory_space<vmem>>, vector<16x256xf32>
      tpu.vector_store %arg7[%c0_25, %c0_26], %24 {strides = array<i32>} : memref<16x256xf32, #tpu.memory_space<vmem>>, vector<16x256xf32>,
    } else {
    }
    return
  }
  func.func @transform_0(%arg0: i32, %arg1: i32, %arg2: i32) -> (i32, i32) {
    %c0_i32 = arith.constant 0 : i32
    return %arg0, %arg2 : i32, i32
  }
  func.func @transform_1(%arg0: i32, %arg1: i32, %arg2: i32) -> (i32, i32) {
    %c0_i32 = arith.constant 0 : i32
    return %arg2, %arg1 : i32, i32
  }
  func.func @transform_2(%arg0: i32, %arg1: i32, %arg2: i32) -> (i32, i32) {
    %c0_i32 = arith.constant 0 : i32
    %c0_i32_0 = arith.constant 0 : i32
    return %arg2, %c0_i32 : i32, i32
  }
  func.func @transform_3(%arg0: i32, %arg1: i32, %arg2: i32) -> (i32, i32) {
    %c0_i32 = arith.constant 0 : i32
    %c0_i32_0 = arith.constant 0 : i32
    return %c0_i32, %arg1 : i32, i32
  }
  func.func @transform_4(%arg0: i32, %arg1: i32, %arg2: i32) -> (i32, i32) {
    %c0_i32 = arith.constant 0 : i32
    return %arg0, %arg1 : i32, i32
  }
}

module attributes {stable_mosaic.version = 11 : i64} {
  func.func @_lora_kernel(%arg0: i32, %arg1: i32, %arg2: i32, %arg3: memref<16x256xbf16, #tpu.memory_space<vmem>>, %arg4: memref<256x64xbf16, #tpu.memory_space<vmem>>, %arg5: memref<256x64xbf16, #tpu.memory_space<vmem>>, %arg6: memref<64x64xbf16, #tpu.memory_space<vmem>>, %arg7: memref<16x64xf32, #tpu.memory_space<vmem>>, %arg8: memref<16x64xf32, #tpu.memory_space<vmem>>, %arg9: memref<16x64xf32, #tpu.memory_space<vmem>>) attributes {dimension_semantics = [#tpu.dimension_semantics<parallel>, #tpu.dimension_semantics<parallel>, #tpu.dimension_semantics<arbitrary>], iteration_bounds = array<i64: 1, 1, 1>, scalar_prefetch = 0 : i64, scratch_operands = 2 : i64, tpu.core_type = #tpu.core_type<tc>, window_params = [{transform_indices = @transform_0, window_bounds = array<i64: 16, 256>}, {transform_indices = @transform_1, window_bounds = array<i64: 256, 64>}, {transform_indices = @transform_2, window_bounds = array<i64: 256, 64>}, {transform_indices = @transform_3, window_bounds = array<i64: 64, 64>}, {transform_indices = @transform_4, window_bounds = array<i64: 16, 64>}]} {
    %c0_i32 = arith.constant 0 : i32
    %0 = arith.cmpi eq, %arg2, %c0_i32 : i32
    %1 = arith.extui %0 : i1 to i32
    %c0_i32_0 = arith.constant 0 : i32
    %2 = arith.cmpi ne, %1, %c0_i32_0 : i32
    scf.if %2 {
      %cst_17 = arith.constant 0.000000e+00 : f32
      %17 = vector.broadcast %cst_17 : f32 to vector<16x64xf32>
      %c0_18 = arith.constant 0 : index
      %c0_19 = arith.constant 0 : index
      %18 = vector.load %arg8[%c0_18, %c0_19] : memref<16x64xf32, #tpu.memory_space<vmem>>, vector<16x64xf32>
      tpu.vector_store %arg8[%c0_18, %c0_19], %17 {strides = array<i32>} : memref<16x64xf32, #tpu.memory_space<vmem>>, vector<16x64xf32>,
      %cst_20 = arith.constant 0.000000e+00 : f32
      %19 = vector.broadcast %cst_20 : f32 to vector<16x64xf32>
      %c0_21 = arith.constant 0 : index
      %c0_22 = arith.constant 0 : index
      %20 = vector.load %arg9[%c0_21, %c0_22] : memref<16x64xf32, #tpu.memory_space<vmem>>, vector<16x64xf32>
      tpu.vector_store %arg9[%c0_21, %c0_22], %19 {strides = array<i32>} : memref<16x64xf32, #tpu.memory_space<vmem>>, vector<16x64xf32>,
    } else {
    }
    %c0 = arith.constant 0 : index
    %c0_1 = arith.constant 0 : index
    %3 = vector.load %arg3[%c0, %c0_1] : memref<16x256xbf16, #tpu.memory_space<vmem>>, vector<16x256xbf16>
    %c0_2 = arith.constant 0 : index
    %c0_3 = arith.constant 0 : index
    %4 = vector.load %arg8[%c0_2, %c0_3] : memref<16x64xf32, #tpu.memory_space<vmem>>, vector<16x64xf32>
    %c0_4 = arith.constant 0 : index
    %c0_5 = arith.constant 0 : index
    %5 = vector.load %arg4[%c0_4, %c0_5] : memref<256x64xbf16, #tpu.memory_space<vmem>>, vector<256x64xbf16>
    %cst = arith.constant dense<0.000000e+00> : vector<16x64xf32>
    %6 = tpu.matmul %3, %5, %cst {dimension_numbers = #tpu.dot_dimension_numbers<[1], [0], [0], [1], [0, 0, 1, 1], [], []>} : vector<16x256xbf16>, vector<256x64xbf16>, vector<16x64xf32> -> vector<16x64xf32>
    %7 = arith.addf %4, %6 : vector<16x64xf32>
    %c0_6 = arith.constant 0 : index
    %c0_7 = arith.constant 0 : index
    %8 = vector.load %arg8[%c0_6, %c0_7] : memref<16x64xf32, #tpu.memory_space<vmem>>, vector<16x64xf32>
    tpu.vector_store %arg8[%c0_6, %c0_7], %7 {strides = array<i32>} : memref<16x64xf32, #tpu.memory_space<vmem>>, vector<16x64xf32>,
    %c0_8 = arith.constant 0 : index
    %c0_9 = arith.constant 0 : index
    %9 = vector.load %arg9[%c0_8, %c0_9] : memref<16x64xf32, #tpu.memory_space<vmem>>, vector<16x64xf32>
    %c0_10 = arith.constant 0 : index
    %c0_11 = arith.constant 0 : index
    %10 = vector.load %arg5[%c0_10, %c0_11] : memref<256x64xbf16, #tpu.memory_space<vmem>>, vector<256x64xbf16>
    %cst_12 = arith.constant dense<0.000000e+00> : vector<16x64xf32>
    %11 = tpu.matmul %3, %10, %cst_12 {dimension_numbers = #tpu.dot_dimension_numbers<[1], [0], [0], [1], [0, 0, 1, 1], [], []>} : vector<16x256xbf16>, vector<256x64xbf16>, vector<16x64xf32> -> vector<16x64xf32>
    %12 = arith.addf %9, %11 : vector<16x64xf32>
    %c0_13 = arith.constant 0 : index
    %c0_14 = arith.constant 0 : index
    %13 = vector.load %arg9[%c0_13, %c0_14] : memref<16x64xf32, #tpu.memory_space<vmem>>, vector<16x64xf32>
    tpu.vector_store %arg9[%c0_13, %c0_14], %12 {strides = array<i32>} : memref<16x64xf32, #tpu.memory_space<vmem>>, vector<16x64xf32>,
    %c0_i32_15 = arith.constant 0 : i32
    %14 = arith.cmpi eq, %arg2, %c0_i32_15 : i32
    %15 = arith.extui %14 : i1 to i32
    %c0_i32_16 = arith.constant 0 : i32
    %16 = arith.cmpi ne, %15, %c0_i32_16 : i32
    scf.if %16 {
      %c0_17 = arith.constant 0 : index
      %c0_18 = arith.constant 0 : index
      %17 = vector.load %arg9[%c0_17, %c0_18] : memref<16x64xf32, #tpu.memory_space<vmem>>, vector<16x64xf32>
      %18 = arith.truncf %17 : vector<16x64xf32> to vector<16x64xbf16>
      %c0_19 = arith.constant 0 : index
      %c0_20 = arith.constant 0 : index
      %19 = vector.load %arg6[%c0_19, %c0_20] : memref<64x64xbf16, #tpu.memory_space<vmem>>, vector<64x64xbf16>
      %cst_21 = arith.constant dense<0.000000e+00> : vector<16x64xf32>
      %20 = tpu.matmul %18, %19, %cst_21 {dimension_numbers = #tpu.dot_dimension_numbers<[1], [0], [0], [1], [0, 0, 1, 1], [], []>} : vector<16x64xbf16>, vector<64x64xbf16>, vector<16x64xf32> -> vector<16x64xf32>
      %c0_22 = arith.constant 0 : index
      %c0_23 = arith.constant 0 : index
      %21 = vector.load %arg8[%c0_22, %c0_23] : memref<16x64xf32, #tpu.memory_space<vmem>>, vector<16x64xf32>
      %cst_24 = arith.constant 2.000000e+00 : f32
      %22 = vector.broadcast %cst_24 : f32 to vector<16x64xf32>
      %23 = arith.mulf %22, %20 : vector<16x64xf32>
      %24 = arith.addf %21, %23 : vector<16x64xf32>
      %c0_25 = arith.constant 0 : index
      %c0_26 = arith.constant 0 : index
      %25 = vector.load %arg7[%c0_25, %c0_26] : memref<16x64xf32, #tpu.memory_space<vmem>>, vector<16x64xf32>
      tpu.vector_store %arg7[%c0_25, %c0_26], %24 {strides = array<i32>} : memref<16x64xf32, #tpu.memory_space<vmem>>, vector<16x64xf32>,
    } else {
    }
    return
  }
  func.func @transform_0(%arg0: i32, %arg1: i32, %arg2: i32) -> (i32, i32) {
    %c0_i32 = arith.constant 0 : i32
    return %arg0, %arg2 : i32, i32
  }
  func.func @transform_1(%arg0: i32, %arg1: i32, %arg2: i32) -> (i32, i32) {
    %c0_i32 = arith.constant 0 : i32
    return %arg2, %arg1 : i32, i32
  }
  func.func @transform_2(%arg0: i32, %arg1: i32, %arg2: i32) -> (i32, i32) {
    %c0_i32 = arith.constant 0 : i32
    %c0_i32_0 = arith.constant 0 : i32
    return %arg2, %c0_i32 : i32, i32
  }
  func.func @transform_3(%arg0: i32, %arg1: i32, %arg2: i32) -> (i32, i32) {
    %c0_i32 = arith.constant 0 : i32
    %c0_i32_0 = arith.constant 0 : i32
    return %c0_i32, %arg1 : i32, i32
  }
  func.func @transform_4(%arg0: i32, %arg1: i32, %arg2: i32) -> (i32, i32) {
    %c0_i32 = arith.constant 0 : i32
    return %arg0, %arg1 : i32, i32
  }
}

module attributes {stable_mosaic.version = 11 : i64} {
  func.func @_ce_kernel(%arg0: i32, %arg1: i32, %arg2: memref<16x64xbf16, #tpu.memory_space<vmem>>, %arg3: memref<64x128xbf16, #tpu.memory_space<vmem>>, %arg4: memref<16x1xi32, #tpu.memory_space<vmem>>, %arg5: memref<16x1xf32, #tpu.memory_space<vmem>>, %arg6: memref<16x1xf32, #tpu.memory_space<vmem>>, %arg7: memref<16x1xf32, #tpu.memory_space<vmem>>, %arg8: memref<16x1xf32, #tpu.memory_space<vmem>>) attributes {dimension_semantics = [#tpu.dimension_semantics<parallel>, #tpu.dimension_semantics<arbitrary>], iteration_bounds = array<i64: 1, 1>, scalar_prefetch = 0 : i64, scratch_operands = 3 : i64, tpu.core_type = #tpu.core_type<tc>, window_params = [{transform_indices = @transform_0, window_bounds = array<i64: 16, 64>}, {transform_indices = @transform_1, window_bounds = array<i64: 64, 128>}, {transform_indices = @transform_2, window_bounds = array<i64: 16, 1>}, {transform_indices = @transform_3, window_bounds = array<i64: 16, 1>}]} {
    %c0_i32 = arith.constant 0 : i32
    %0 = arith.cmpi eq, %arg1, %c0_i32 : i32
    %1 = arith.extui %0 : i1 to i32
    %c0_i32_0 = arith.constant 0 : i32
    %2 = arith.cmpi ne, %1, %c0_i32_0 : i32
    scf.if %2 {
      %cst_28 = arith.constant 0xFF800000 : f32
      %44 = vector.broadcast %cst_28 : f32 to vector<16x1xf32>
      %c0_29 = arith.constant 0 : index
      %c0_30 = arith.constant 0 : index
      %45 = vector.load %arg6[%c0_29, %c0_30] : memref<16x1xf32, #tpu.memory_space<vmem>>, vector<16x1xf32>
      tpu.vector_store %arg6[%c0_29, %c0_30], %44 {strides = array<i32>} : memref<16x1xf32, #tpu.memory_space<vmem>>, vector<16x1xf32>,
      %cst_31 = arith.constant 0.000000e+00 : f32
      %46 = vector.broadcast %cst_31 : f32 to vector<16x1xf32>
      %c0_32 = arith.constant 0 : index
      %c0_33 = arith.constant 0 : index
      %47 = vector.load %arg7[%c0_32, %c0_33] : memref<16x1xf32, #tpu.memory_space<vmem>>, vector<16x1xf32>
      tpu.vector_store %arg7[%c0_32, %c0_33], %46 {strides = array<i32>} : memref<16x1xf32, #tpu.memory_space<vmem>>, vector<16x1xf32>,
      %cst_34 = arith.constant 0.000000e+00 : f32
      %48 = vector.broadcast %cst_34 : f32 to vector<16x1xf32>
      %c0_35 = arith.constant 0 : index
      %c0_36 = arith.constant 0 : index
      %49 = vector.load %arg8[%c0_35, %c0_36] : memref<16x1xf32, #tpu.memory_space<vmem>>, vector<16x1xf32>
      tpu.vector_store %arg8[%c0_35, %c0_36], %48 {strides = array<i32>} : memref<16x1xf32, #tpu.memory_space<vmem>>, vector<16x1xf32>,
    } else {
    }
    %c0 = arith.constant 0 : index
    %c0_1 = arith.constant 0 : index
    %3 = vector.load %arg2[%c0, %c0_1] : memref<16x64xbf16, #tpu.memory_space<vmem>>, vector<16x64xbf16>
    %c0_2 = arith.constant 0 : index
    %c0_3 = arith.constant 0 : index
    %4 = vector.load %arg3[%c0_2, %c0_3] : memref<64x128xbf16, #tpu.memory_space<vmem>>, vector<64x128xbf16>
    %cst = arith.constant dense<0.000000e+00> : vector<16x128xf32>
    %5 = tpu.matmul %3, %4, %cst {dimension_numbers = #tpu.dot_dimension_numbers<[1], [0], [0], [1], [0, 0, 1, 1], [], []>} : vector<16x64xbf16>, vector<64x128xbf16>, vector<16x128xf32> -> vector<16x128xf32>
    %c128_i32 = arith.constant 128 : i32
    %6 = arith.muli %arg1, %c128_i32 : i32
    %7 = tpu.iota {dimensions = array<i32: 1>} : vector<16x128xi32>
    %8 = vector.broadcast %6 : i32 to vector<16x128xi32>
    %9 = arith.addi %8, %7 : vector<16x128xi32>
    %c128_i32_4 = arith.constant 128 : i32
    %10 = vector.broadcast %c128_i32_4 : i32 to vector<16x128xi32>
    %11 = arith.cmpi slt, %9, %10 : vector<16x128xi32>
    %cst_5 = arith.constant 0xFF800000 : f32
    %12 = vector.broadcast %cst_5 : f32 to vector<16x128xf32>
    %13 = arith.select %11, %5, %12 : vector<16x128xi1>, vector<16x128xf32>
    %c0_6 = arith.constant 0 : index
    %c0_7 = arith.constant 0 : index
    %14 = vector.load %arg4[%c0_6, %c0_7] : memref<16x1xi32, #tpu.memory_space<vmem>>, vector<16x1xi32>
    %c0_8 = arith.constant 0 : index
    %c0_9 = arith.constant 0 : index
    %15 = vector.load %arg8[%c0_8, %c0_9] : memref<16x1xf32, #tpu.memory_space<vmem>>, vector<16x1xf32>
    %16 = vector.broadcast %14 : vector<16x1xi32> to vector<16x128xi32>
    %17 = arith.cmpi eq, %9, %16 : vector<16x128xi32>
    %cst_10 = arith.constant 0.000000e+00 : f32
    %18 = vector.broadcast %cst_10 : f32 to vector<16x128xf32>
    %19 = arith.select %17, %13, %18 : vector<16x128xi1>, vector<16x128xf32>
    %cst_11 = arith.constant dense<0.000000e+00> : vector<16xf32>
    %20 = vector.multi_reduction <add>, %19, %cst_11 [1] : vector<16x128xf32> to vector<16xf32>
    %21 = vector.shape_cast %20 : vector<16xf32> to vector<16x1xf32>
    %22 = arith.addf %15, %21 : vector<16x1xf32>
    %c0_12 = arith.constant 0 : index
    %c0_13 = arith.constant 0 : index
    %23 = vector.load %arg8[%c0_12, %c0_13] : memref<16x1xf32, #tpu.memory_space<vmem>>, vector<16x1xf32>
    tpu.vector_store %arg8[%c0_12, %c0_13], %22 {strides = array<i32>} : memref<16x1xf32, #tpu.memory_space<vmem>>, vector<16x1xf32>,
    %c0_14 = arith.constant 0 : index
    %c0_15 = arith.constant 0 : index
    %24 = vector.load %arg6[%c0_14, %c0_15] : memref<16x1xf32, #tpu.memory_space<vmem>>, vector<16x1xf32>
    %cst_16 = arith.constant dense<0xFF800000> : vector<16xf32>
    %25 = vector.multi_reduction <maximumf>, %13, %cst_16 [1] : vector<16x128xf32> to vector<16xf32>
    %26 = vector.shape_cast %25 : vector<16xf32> to vector<16x1xf32>
    %27 = arith.maximumf %24, %26 : vector<16x1xf32>
    %c0_17 = arith.constant 0 : index
    %c0_18 = arith.constant 0 : index
    %28 = vector.load %arg7[%c0_17, %c0_18] : memref<16x1xf32, #tpu.memory_space<vmem>>, vector<16x1xf32>
    %c0_19 = arith.constant 0 : index
    %c0_20 = arith.constant 0 : index
    %29 = vector.load %arg6[%c0_19, %c0_20] : memref<16x1xf32, #tpu.memory_space<vmem>>, vector<16x1xf32>
    %30 = arith.subf %29, %27 : vector<16x1xf32>
    %31 = math.exp %30 : vector<16x1xf32>
    %32 = arith.mulf %28, %31 : vector<16x1xf32>
    %33 = vector.broadcast %27 : vector<16x1xf32> to vector<16x128xf32>
    %34 = arith.subf %13, %33 : vector<16x128xf32>
    %35 = math.exp %34 : vector<16x128xf32>
    %cst_21 = arith.constant dense<0.000000e+00> : vector<16xf32>
    %36 = vector.multi_reduction <add>, %35, %cst_21 [1] : vector<16x128xf32> to vector<16xf32>
    %37 = vector.shape_cast %36 : vector<16xf32> to vector<16x1xf32>
    %38 = arith.addf %32, %37 : vector<16x1xf32>
    %c0_22 = arith.constant 0 : index
    %c0_23 = arith.constant 0 : index
    %39 = vector.load %arg7[%c0_22, %c0_23] : memref<16x1xf32, #tpu.memory_space<vmem>>, vector<16x1xf32>
    tpu.vector_store %arg7[%c0_22, %c0_23], %38 {strides = array<i32>} : memref<16x1xf32, #tpu.memory_space<vmem>>, vector<16x1xf32>,
    %c0_24 = arith.constant 0 : index
    %c0_25 = arith.constant 0 : index
    %40 = vector.load %arg6[%c0_24, %c0_25] : memref<16x1xf32, #tpu.memory_space<vmem>>, vector<16x1xf32>
    tpu.vector_store %arg6[%c0_24, %c0_25], %27 {strides = array<i32>} : memref<16x1xf32, #tpu.memory_space<vmem>>, vector<16x1xf32>,
    %c0_i32_26 = arith.constant 0 : i32
    %41 = arith.cmpi eq, %arg1, %c0_i32_26 : i32
    %42 = arith.extui %41 : i1 to i32
    %c0_i32_27 = arith.constant 0 : i32
    %43 = arith.cmpi ne, %42, %c0_i32_27 : i32
    scf.if %43 {
      %c0_28 = arith.constant 0 : index
      %c0_29 = arith.constant 0 : index
      %44 = vector.load %arg6[%c0_28, %c0_29] : memref<16x1xf32, #tpu.memory_space<vmem>>, vector<16x1xf32>
      %c0_30 = arith.constant 0 : index
      %c0_31 = arith.constant 0 : index
      %45 = vector.load %arg7[%c0_30, %c0_31] : memref<16x1xf32, #tpu.memory_space<vmem>>, vector<16x1xf32>
      %46 = math.log %45 : vector<16x1xf32>
      %47 = arith.addf %44, %46 : vector<16x1xf32>
      %c0_32 = arith.constant 0 : index
      %c0_33 = arith.constant 0 : index
      %48 = vector.load %arg8[%c0_32, %c0_33] : memref<16x1xf32, #tpu.memory_space<vmem>>, vector<16x1xf32>
      %49 = arith.subf %47, %48 : vector<16x1xf32>
      %c0_34 = arith.constant 0 : index
      %c0_35 = arith.constant 0 : index
      %50 = vector.load %arg5[%c0_34, %c0_35] : memref<16x1xf32, #tpu.memory_space<vmem>>, vector<16x1xf32>
      tpu.vector_store %arg5[%c0_34, %c0_35], %49 {strides = array<i32>} : memref<16x1xf32, #tpu.memory_space<vmem>>, vector<16x1xf32>,
    } else {
    }
    return
  }
  func.func @transform_0(%arg0: i32, %arg1: i32) -> (i32, i32) {
    %c0_i32 = arith.constant 0 : i32
    %c0_i32_0 = arith.constant 0 : i32
    return %arg0, %c0_i32 : i32, i32
  }
  func.func @transform_1(%arg0: i32, %arg1: i32) -> (i32, i32) {
    %c0_i32 = arith.constant 0 : i32
    %c0_i32_0 = arith.constant 0 : i32
    return %c0_i32, %arg1 : i32, i32
  }
  func.func @transform_2(%arg0: i32, %arg1: i32) -> (i32, i32) {
    %c0_i32 = arith.constant 0 : i32
    %c0_i32_0 = arith.constant 0 : i32
    return %arg0, %c0_i32 : i32, i32
  }
  func.func @transform_3(%arg0: i32, %arg1: i32) -> (i32, i32) {
    %c0_i32 = arith.constant 0 : i32
    %c0_i32_0 = arith.constant 0 : i32
    return %arg0, %c0_i32 : i32, i32
  }
}

</mosaic_0001>

<llo_original>
// kernel: rwkv_forward.31
$region0: #{rwkv_forward.31}
  #allocation0 [shape = 'u32[]', space=smem, size = 0x4, offset = 0x4, fixed_abs, tag = 'smem constant byte address 0x4 - core index']
  #allocation1 [shape = 'u32[144,128]{1,0:T(1,128)}', space=vmem, size = 0x12000, scoped, tag = 'internal scratch']
  %s0 = inlined_call_operand.vmem [shape: f32[16,64], index: 0, kind: input, shape index: {}]
  %s1 = inlined_call_operand.vmem [shape: f32[1,64], index: 1, kind: input, shape index: {}]
  %s2 = inlined_call_operand.vmem [shape: f32[1,64], index: 2, kind: input, shape index: {}]
  %s3 = inlined_call_operand.vmem [shape: f32[16,64], index: 3, kind: output, shape index: {}]
  %s4 = sld [smem:[#allocation0]]
  $region22: #{rwkv_forward.31} parent=0
    _
  %s6 = ssub.s32 1, %s4
  %s7 = scalar_select 0, %s6, %s4
  // Predicated region
  $region2: #{rwkv_forward.31} parent=0 // pred_check
    _
  $region3: #{rwkv_forward.31} parent=0 // pred_check_branch
    %9 = sbr.rel (0) target = $region5
  $region4: #{rwkv_forward.31} parent=0 // pred_region
    _
  $region5: #{rwkv_forward.31} parent=0 // pred_fallthru
    _
  // Predicated region
  $region6: #{rwkv_forward.31} parent=0 // pred_check
    _
  $region7: #{rwkv_forward.31} parent=0 // pred_check_branch
    %11 = sbr.rel (0) target = $region9
  $region8: #{rwkv_forward.31} parent=0 // pred_region
    _
  $region9: #{rwkv_forward.31} parent=0 // pred_fallthru
    _
  // Predicated region
  $region10: #{rwkv_forward.31} parent=0 // pred_check
    _
  $region11: #{rwkv_forward.31} parent=0 // pred_check_branch
    %13 = sbr.rel (0) target = $region13
  $region12: #{rwkv_forward.31} parent=0 // pred_region
    _
  $region13: #{rwkv_forward.31} parent=0 // pred_fallthru
    _
  %v14 = vld [vmem:[%s0] sm:$0xff]
  %v15 = vld [vmem:[%s0 + $0x8] sm:$0xff]
  %vm16 = vcmask 523264
  %v17 = vsel %vm16, %v14, 0.0
  %18 = vadd.xlane.f32.xlu0 %v17
  %v19 = vpop.xlane.xlu0 %18
  %v20 = vsel %vm16, %v15, 0.0
  %21 = vadd.xlane.f32.xlu0 %v20
  %v22 = vpop.xlane.xlu0 %21
  %v23 = vrcp.pop 64.0
  %v24 = vmul.f32 %v19, %v23
  %v25 = vmul.f32 %v22, %v23
  %v26 = vsub.f32 %v14, %v24
  %v27 = vsub.f32 %v15, %v25
  %v28 = vmul.f32 %v26, %v26
  %v29 = vmul.f32 %v27, %v27
  %v30 = vsel %vm16, %v28, 0.0
  %31 = vadd.xlane.f32.xlu0 %v30
  %v32 = vpop.xlane.xlu0 %31
  %v33 = vsel %vm16, %v29, 0.0
  %34 = vadd.xlane.f32.xlu0 %v33
  %v35 = vpop.xlane.xlu0 %34
  %v36 = vmul.f32 %v32, %v23
  %v37 = vmul.f32 %v35, %v23
  %v38 = vadd.f32 %v36, 1e-05
  %v39 = vadd.f32 %v37, 1e-05
  %v40 = vrsqrt.pop %v38
  %v41 = vrsqrt.pop %v39
  %v42 = vmul.f32 %v26, %v40
  %v43 = vmul.f32 %v27, %v41
  %v44 = vld [vmem:[%s1] sm:$0x1]
  %v46 = vlaneseq
  %v47 = vshrl.u32 %v46, 7
  %v48 = vsub.s32 0, %v47
  %v49 = vrot.slane %v44, %v48
  %v51 = vmul.f32 %v42, %v49
  %v52 = vmul.f32 %v43, %v49
  %v53 = vld [vmem:[%s2] sm:$0x1]
  %v55 = vlaneseq
  %v56 = vshrl.u32 %v55, 7
  %v57 = vsub.s32 0, %v56
  %v58 = vrot.slane %v53, %v57
  %v60 = vadd.f32 %v51, %v58
  %v61 = vadd.f32 %v52, %v58
  %62 = vst.msk [vmem:[%s3] sm:$0xff] %vm16, %v60
  %63 = vst.msk [vmem:[%s3 + $0x8] sm:$0xff] %vm16, %v61
  // Predicated region
  $region14: #{rwkv_forward.31} parent=0 // pred_check
    _
  $region15: #{rwkv_forward.31} parent=0 // pred_check_branch
    %65 = sbr.rel (0) target = $region17
  $region16: #{rwkv_forward.31} parent=0 // pred_region
    _
  $region17: #{rwkv_forward.31} parent=0 // pred_fallthru
    _
  // Predicated region
  $region18: #{rwkv_forward.31} parent=0 // pred_check
    _
  $region19: #{rwkv_forward.31} parent=0 // pred_check_branch
    %67 = sbr.rel (0) target = $region21
  $region20: #{rwkv_forward.31} parent=0 // pred_region
    _
  $region21: #{rwkv_forward.31} parent=0 // pred_fallthru
    _

// kernel: rwkv_forward.33
$region0: #{rwkv_forward.33}
  #allocation0 [shape = 'u32[]', space=smem, size = 0x4, offset = 0x4, fixed_abs, tag = 'smem constant byte address 0x4 - core index']
  #allocation1 [shape = 'u32[144,128]{1,0:T(1,128)}', space=vmem, size = 0x12000, scoped, tag = 'internal scratch']
  %s0 = inlined_call_operand.vmem [shape: bf16[16,64], index: 0, kind: input, shape index: {}]
  %s1 = inlined_call_operand.vmem [shape: bf16[5,64,32], index: 1, kind: input, shape index: {}]
  %s2 = inlined_call_operand.vmem [shape: bf16[5,32,64], index: 2, kind: input, shape index: {}]
  %s3 = inlined_call_operand.vmem [shape: f32[5,16,64], index: 3, kind: output, shape index: {}]
  %s4 = sld [smem:[#allocation0]]
  $region45: #{rwkv_forward.33} parent=0
    _
  %s6 = ssub.s32 1, %s4
  %s7 = scalar_select 0, %s6, %s4
  loop: start=0, step=1, limit=7
  $region2: #{rwkv_forward.33} parent=0 // loop_pre_header
    _
  $region3: #{rwkv_forward.33} parent=0 // loop_header
    %s9 = sphi 0, %s13
    %p10 = scmp.ge.s32.totalorder %s9, 7
    %s16 = sphi 0, %s35
    %s17 = sphi 0, %s31
    %s18 = sphi 0, %s27
    %s19 = sphi 0, %s16
    %s20 = sphi 0, %s17
    %s21 = sphi 0, %s18
    %s22 = sphi 0, %s19
    %s23 = sphi 0, %s20
    %s24 = sphi 0, %s21
    %s38 = sphi 0, %s40
    %s41 = sphi 0, %s38
    %s42 = sphi 0, %s41
    %s58 = sphi 0, %s42
    %s64 = sphi 0, %s66
    %s67 = sphi 0, %s64
    %s68 = sphi 0, %s67
    %s84 = sphi 0, %s68
    %s92 = sphi 0, %s94
    %s95 = sphi 0, %s92
    %s96 = sphi 0, %s95
    %s112 = sphi 0, %s96
    %s122 = sphi 0, %s124
    %s125 = sphi 0, %s122
    %s126 = sphi 0, %s125
    %s142 = sphi 0, %s126
  $region4: #{rwkv_forward.33} parent=0 // loop_header_branch
    %12 = sbr.rel (%p10) target = $region8
  $region5: #{rwkv_forward.33} parent=0 // loop_body
    %s14 = ssub.s32 %s9, 1
    %s15 = ssub.s32 %s9, 2
    %s25 = sadd.s32 1, %s18
    %p26 = scmp.ge.s32.totalorder %s25, 1
    %s27 = scalar_select %p26, 0, %s25
    %s28 = sadd.s32 1, %s17
    %s29 = scalar_select %p26, %s28, %s17
    %p30 = scmp.ge.s32.totalorder %s29, 1
    %s31 = scalar_select %p30, 0, %s29
    %s32 = sadd.s32 1, %s16
    %s33 = scalar_select %p30, %s32, %s16
    %p34 = scmp.ge.s32.totalorder %s33, 5
    %s35 = scalar_select %p34, 0, %s33
    %s36 = ssub.s32 %s17, %s31
    %p37 = scmp.eq.s32.totalorder %s36, 0
    %s39 = sadd.s32 %s38, 1
    %s40 = scalar_select %p37, %s38, %s39
    %p43 = pneg %p37
    %p44 = scmp.eq.s32.totalorder %s9, 4
    %p45 = por %p43, %p44
    %p46 = scmp.ne.s32.totalorder %s38, %s41
    %p47 = scmp.eq.s32.totalorder %s9, 0
    %p48 = por %p46, %p47
    %p49 = scmp.ne.s32.totalorder %s38, %s41
    %p50 = scmp.eq.s32.totalorder %s14, 4
    %p51 = por %p49, %p50
    %p52 = scmp.ne.s32.totalorder %s41, %s42
    %p53 = scmp.eq.s32.totalorder %s14, 0
    %p54 = por %p52, %p53
    %p55 = scmp.ne.s32.totalorder %s41, %s42
    %p56 = scmp.eq.s32.totalorder %s15, 4
    %p57 = por %p55, %p56
    %p59 = scmp.ne.s32.totalorder %s42, %s58
    %p60 = scmp.eq.s32.totalorder %s15, 0
    %p61 = por %p59, %p60
    %s62 = ssub.s32 %s16, %s35
    %p63 = scmp.eq.s32.totalorder %s62, 0
    %s65 = sadd.s32 %s64, 1
    %s66 = scalar_select %p63, %s64, %s65
    %p69 = pneg %p63
    %p70 = scmp.eq.s32.totalorder %s9, 4
    %p71 = por %p69, %p70
    %p72 = scmp.ne.s32.totalorder %s64, %s67
    %p73 = scmp.eq.s32.totalorder %s9, 0
    %p74 = por %p72, %p73
    %p75 = scmp.ne.s32.totalorder %s64, %s67
    %p76 = scmp.eq.s32.totalorder %s14, 4
    %p77 = por %p75, %p76
    %p78 = scmp.ne.s32.totalorder %s67, %s68
    %p79 = scmp.eq.s32.totalorder %s14, 0
    %p80 = por %p78, %p79
    %p81 = scmp.ne.s32.totalorder %s67, %s68
    %p82 = scmp.eq.s32.totalorder %s15, 4
    %p83 = por %p81, %p82
    %p85 = scmp.ne.s32.totalorder %s68, %s84
    %p86 = scmp.eq.s32.totalorder %s15, 0
    %p87 = por %p85, %p86
    %s88 = ssub.s32 %s16, %s35
    %s89 = ssub.s32 %s18, %s27
    %s90 = sor.u32 %s88, %s89
    %p91 = scmp.eq.s32.totalorder %s90, 0
    %s93 = sadd.s32 %s92, 1
    %s94 = scalar_select %p91, %s92, %s93
    %p97 = pneg %p91
    %p98 = scmp.eq.s32.totalorder %s9, 4
    %p99 = por %p97, %p98
    %p100 = scmp.ne.s32.totalorder %s92, %s95
    %p101 = scmp.eq.s32.totalorder %s9, 0
    %p102 = por %p100, %p101
    %p103 = scmp.ne.s32.totalorder %s92, %s95
    %p104 = scmp.eq.s32.totalorder %s14, 4
    %p105 = por %p103, %p104
    %p106 = scmp.ne.s32.totalorder %s95, %s96
    %p107 = scmp.eq.s32.totalorder %s14, 0
    %p108 = por %p106, %p107
    %p109 = scmp.ne.s32.totalorder %s95, %s96
    %p110 = scmp.eq.s32.totalorder %s15, 4
    %p111 = por %p109, %p110
    %p113 = scmp.ne.s32.totalorder %s96, %s112
    %p114 = scmp.eq.s32.totalorder %s15, 0
    %p115 = por %p113, %p114
    %s116 = ssub.s32 %s16, %s35
    %s117 = ssub.s32 %s17, %s31
    %s118 = sor.u32 %s116, %s117
    %s119 = ssub.s32 %s18, %s27
    %s120 = sor.u32 %s118, %s119
    %p121 = scmp.eq.s32.totalorder %s120, 0
    %s123 = sadd.s32 %s122, 1
    %s124 = scalar_select %p121, %s122, %s123
    %p127 = pneg %p121
    %p128 = scmp.eq.s32.totalorder %s9, 4
    %p129 = por %p127, %p128
    %p130 = scmp.ne.s32.totalorder %s122, %s125
    %p131 = scmp.eq.s32.totalorder %s9, 0
    %p132 = por %p130, %p131
    %p133 = scmp.ne.s32.totalorder %s122, %s125
    %p134 = scmp.eq.s32.totalorder %s14, 4
    %p135 = por %p133, %p134
    %p136 = scmp.ne.s32.totalorder %s125, %s126
    %p137 = scmp.eq.s32.totalorder %s14, 0
    %p138 = por %p136, %p137
    %p139 = scmp.ne.s32.totalorder %s125, %s126
    %p140 = scmp.eq.s32.totalorder %s15, 4
    %p141 = por %p139, %p140
    %p143 = scmp.ne.s32.totalorder %s126, %s142
    %p144 = scmp.eq.s32.totalorder %s15, 0
    %p145 = por %p143, %p144
    %p146 = scmp.le.s32.totalorder 1, %s9
    %p147 = scmp.lt.s32.totalorder %s9, 6
    %p148 = pnand %p146, %p147
    %p149 = pneg %p148
    // Predicated region
    $region9: #{rwkv_forward.33} parent=5 // pred_check
      _
    $region10: #{rwkv_forward.33} parent=5 // pred_check_branch
      %151 = sbr.rel (%p148) target = $region12
    $region11: #{rwkv_forward.33} parent=5 // pred_region
      %s152 = ssub.s32 %s9, 1
      // Predicated region
      $region13: #{rwkv_forward.33} parent=11 // pred_check
        %p153 = pneg %p54
      $region14: #{rwkv_forward.33} parent=11 // pred_check_branch
        %155 = sbr.rel (%p153) target = $region16
      $region15: #{rwkv_forward.33} parent=11 // pred_region
        %s156 = smul.u32 2, %s20
        %p157 = scmp.lt.s32.totalorder %s156, 1
        %s158 = scalar_select %p157, %s156, 1
        %s159 = smul.addr %s158, 4
        %s160 = scalar_lea.vmem %s0, %s159
        %s161 = smul.u32 2, %s20
      $region16: #{rwkv_forward.33} parent=11 // pred_fallthru
        _
    $region12: #{rwkv_forward.33} parent=5 // pred_fallthru
      _
    %p162 = scmp.lt.s32.totalorder %s9, 5
    // Predicated region
    $region17: #{rwkv_forward.33} parent=5 // pred_check
      %p163 = pneg %p162
    $region18: #{rwkv_forward.33} parent=5 // pred_check_branch
      %165 = sbr.rel (%p163) target = $region20
    $region19: #{rwkv_forward.33} parent=5 // pred_region
      // Predicated region
      $region21: #{rwkv_forward.33} parent=19 // pred_check
        %p166 = pneg %p74
      $region22: #{rwkv_forward.33} parent=19 // pred_check_branch
        %168 = sbr.rel (%p166) target = $region24
      $region23: #{rwkv_forward.33} parent=19 // pred_region
        %p169 = scmp.lt.s32.totalorder %s16, 4
        %s170 = scalar_select %p169, %s16, 4
        %s171 = smul.addr %s170, 8
        %s172 = smul.addr %s171, 4
        %s173 = scalar_lea.vmem %s1, %s172
      $region24: #{rwkv_forward.33} parent=19 // pred_fallthru
        _
      // Predicated region
      $region25: #{rwkv_forward.33} parent=19 // pred_check
        %p174 = pneg %p102
      $region26: #{rwkv_forward.33} parent=19 // pred_check_branch
        %176 = sbr.rel (%p174) target = $region28
      $region27: #{rwkv_forward.33} parent=19 // pred_region
        %p177 = scmp.lt.s32.totalorder %s16, 4
        %s178 = scalar_select %p177, %s16, 4
        %p179 = scmp.lt.s32.totalorder %s18, 0
        %s180 = scalar_select %p179, %s18, 0
        %s181 = smul.addr %s178, 4
        %s182 = sadd.s32 %s180, %s181
        %s183 = smul.addr %s182, 4
        %s184 = scalar_lea.vmem %s2, %s183
      $region28: #{rwkv_forward.33} parent=19 // pred_fallthru
        _
    $region20: #{rwkv_forward.33} parent=5 // pred_fallthru
      _
    %p185 = scmp.le.s32.totalorder 1, %s9
    %p186 = scmp.lt.s32.totalorder %s9, 6
    %p187 = pnand %p185, %p186
    %p188 = pneg %p187
    // Predicated region
    $region29: #{rwkv_forward.33} parent=5 // pred_check
      _
    $region30: #{rwkv_forward.33} parent=5 // pred_check_branch
      %190 = sbr.rel (%p187) target = $region32
    $region31: #{rwkv_forward.33} parent=5 // pred_region
      %s191 = ssub.s32 %s9, 1
      %s192 = smul.u32 2, %s20
      %p193 = scmp.lt.s32.totalorder %s192, 1
      %s194 = scalar_select %p193, %s192, 1
      %s195 = smul.addr %s194, 4
      %s196 = scalar_lea.vmem %s0, %s195
      %p197 = pneg %p54
      %p198 = pneg %p51
      %p199 = scmp.lt.s32.totalorder %s19, 4
      %s200 = scalar_select %p199, %s19, 4
      %s201 = smul.addr %s200, 8
      %s202 = smul.addr %s201, 4
      %s203 = scalar_lea.vmem %s1, %s202
      %p204 = pneg %p80
      %p205 = pneg %p77
      %p206 = scmp.lt.s32.totalorder %s19, 4
      %s207 = scalar_select %p206, %s19, 4
      %p208 = scmp.lt.s32.totalorder %s21, 0
      %s209 = scalar_select %p208, %s21, 0
      %s210 = smul.addr %s207, 4
      %s211 = sadd.s32 %s209, %s210
      %s212 = smul.addr %s211, 4
      %s213 = scalar_lea.vmem %s2, %s212
      %p214 = pneg %p108
      %p215 = pneg %p105
      %p216 = pneg %p138
      %p217 = pneg %p135
      %s218 = smul.u32 2, %s20
      %p219 = scmp.lt.s32.totalorder %s19, 4
      %s220 = scalar_select %p219, %s19, 4
      %p221 = scmp.lt.s32.totalorder %s218, 1
      %s222 = scalar_select %p221, %s218, 1
      %p223 = scmp.lt.s32.totalorder %s21, 0
      %s224 = scalar_select %p223, %s21, 0
      %s225 = sadd.s32 %s224, %s222
      %s226 = smul.addr %s220, 2
      %s227 = sadd.s32 %s225, %s226
      %s228 = smul.addr %s227, 8
      %s229 = scalar_lea.vmem %s3, %s228
      %s230 = smul.u32 2, %s20
      %p231 = scmp.lt.s32.totalorder %s230, 1
      %s232 = scalar_select %p231, %s230, 1
      %s233 = smul.addr %s232, 4
      %s234 = scalar_lea.vmem %s0, %s233
      %s235 = smul.u32 2, %s20
      %p236 = scmp.lt.s32.totalorder %s19, 4
      %s237 = scalar_select %p236, %s19, 4
      %s238 = smul.addr %s237, 8
      %s239 = smul.addr %s238, 4
      %s240 = scalar_lea.vmem %s1, %s239
      %p241 = scmp.lt.s32.totalorder %s19, 4
      %s242 = scalar_select %p241, %s19, 4
      %p243 = scmp.lt.s32.totalorder %s21, 0
      %s244 = scalar_select %p243, %s21, 0
      %s245 = smul.addr %s242, 4
      %s246 = sadd.s32 %s244, %s245
      %s247 = smul.addr %s246, 4
      %s248 = scalar_lea.vmem %s2, %s247
      %s249 = smul.u32 2, %s20
      %p250 = scmp.lt.s32.totalorder %s19, 4
      %s251 = scalar_select %p250, %s19, 4
      %p252 = scmp.lt.s32.totalorder %s249, 1
      %s253 = scalar_select %p252, %s249, 1
      %p254 = scmp.lt.s32.totalorder %s21, 0
      %s255 = scalar_select %p254, %s21, 0
      %s256 = sadd.s32 %s255, %s253
      %s257 = smul.addr %s251, 2
      %s258 = sadd.s32 %s256, %s257
      %s259 = smul.addr %s258, 8
      %s260 = scalar_lea.vmem %s3, %s259
      %s261 = smul.u32 2, %s20
      %v263 = vld [vmem:[%s234] sm:$0xf]
      %v264 = vld [vmem:[%s234 + $0x4] sm:$0xf]
      %v265 = vld [vmem:[%s240] sm:$0xf]
      %v266 = vld [vmem:[%s240 + $0x4] sm:$0xf]
      %v267 = vld [vmem:[%s240 + $0x8] sm:$0xf]
      %v268 = vld [vmem:[%s240 + $0xc] sm:$0xf]
      %v269 = vld [vmem:[%s240 + $0x10] sm:$0xf]
      %v270 = vld [vmem:[%s240 + $0x14] sm:$0xf]
      %v271 = vld [vmem:[%s240 + $0x18] sm:$0xf]
      %v272 = vld [vmem:[%s240 + $0x1c] sm:$0xf]
      %v275 = vunpack.c.l.b16 %v263
      %v276 = vunpack.c.l.b16 %v264
      %v277 = vpack.c.b16 %v276, %v275
      %v286 = vunpack.c.l.b16 %v265
      %v287 = vunpack.c.l.b16 %v266
      %v288 = vunpack.c.l.b16 %v267
      %v289 = vunpack.c.l.b16 %v268
      %v290 = vunpack.c.l.b16 %v269
      %v291 = vunpack.c.l.b16 %v270
      %v292 = vunpack.c.l.b16 %v271
      %v293 = vunpack.c.l.b16 %v272
      %v294 = vpack.c.b16 %v287, %v286
      %v295 = vpack.c.b16 %v289, %v288
      %v296 = vpack.c.b16 %v291, %v290
      %v297 = vpack.c.b16 %v293, %v292
      %vm302 = vcmask 523264
      %v304 = vsel %vm302, %v277, 0
      %306 = vmatprep.subr.bf16.mxu0 0
      %307 = vmatpush1.bf16.msra.mxu0 %v294
      %308 = vmatprep.subr.bf16.mxu0 0
      %309 = vmatpush1.bf16.msra.mxu0 %v295
      %310 = vmatprep.subr.bf16.mxu0 0
      %311 = vmatpush1.bf16.msra.mxu0 %v296
      %312 = vmatprep.subr.bf16.mxu0 0
      %313 = vmatpush1.bf16.msra.mxu0 %v297
      %314 = vmatprep.subr.bf16.mxu0 0
      %315 = vmatpush1.bf16.msra.mxu0 0
      %316 = vmatprep.subr.bf16.mxu0 0
      %317 = vmatpush1.bf16.msra.mxu0 0
      %318 = vmatprep.subr.bf16.mxu0 0
      %319 = vmatpush1.bf16.msra.mxu0 0
      %320 = vmatprep.subr.bf16.mxu0 0
      %321 = vmatpush1.bf16.msra.mxu0 0
      %322 = vmatprep.subr.bf16.mxu0 0
      %323 = vmatpush1.bf16.msra.mxu0 0
      %324 = vmatprep.subr.bf16.mxu0 0
      %325 = vmatpush1.bf16.msra.mxu0 0
      %326 = vmatprep.subr.bf16.mxu0 0
      %327 = vmatpush1.bf16.msra.mxu0 0
      %328 = vmatprep.subr.bf16.mxu0 0
      %329 = vmatpush1.bf16.msra.mxu0 0
      %330 = vmatprep.subr.bf16.mxu0 0
      %331 = vmatpush1.bf16.msra.mxu0 0
      %332 = vmatprep.subr.bf16.mxu0 0
      %333 = vmatpush1.bf16.msra.mxu0 0
      %334 = vmatprep.subr.bf16.mxu0 0
      %335 = vmatpush1.bf16.msra.mxu0 0
      %336 = vmatprep.subr.bf16.mxu0 0
      %337 = vmatpush1.bf16.msra.mxu0 0
      %338 = vmatprep.mubr.bf16.mxu0 0
      %339 = vmatmul.mubr.bf16.gmra.mrb[0].mxu0 %v304
      %v340 = vpop.f32.mrb[0].mxu0
      %v341 = vadd.f32 0.0, %v340
      %v342 = vpop.f32.mrb[0].mxu0
      %v343 = vpop.f32.mrb[0].mxu0
      %v344 = vadd.f32 0.0, %v343
      %v345 = vpop.f32.mrb[0].mxu0
      %346 = vdwg.mxu0
      %v347 = vtanh.pop %v341
      %v348 = vtanh.pop %v344
      %v349 = vpack.c.bf16 %v348, %v347
      %v350 = vld [vmem:[%s248] sm:$0xf]
      %v351 = vld [vmem:[%s248 + $0x4] sm:$0xf]
      %v352 = vld [vmem:[%s248 + $0x8] sm:$0xf]
      %v353 = vld [vmem:[%s248 + $0xc] sm:$0xf]
      %v358 = vunpack.c.l.b16 %v350
      %v359 = vunpack.c.l.b16 %v351
      %v360 = vunpack.c.l.b16 %v352
      %v361 = vunpack.c.l.b16 %v353
      %v362 = vpack.c.b16 %v359, %v358
      %v363 = vpack.c.b16 %v361, %v360
      %vm366 = vcmask 261120
      %v368 = vsel %vm366, %v349, 0
      %370 = vmatprep.subr.bf16.mxu0 0
      %371 = vmatpush1.bf16.msra.mxu0 %v362
      %372 = vmatprep.subr.bf16.mxu0 0
      %373 = vmatpush1.bf16.msra.mxu0 %v363
      %374 = vmatprep.subr.bf16.mxu0 0
      %375 = vmatpush1.bf16.msra.mxu0 0
      %376 = vmatprep.subr.bf16.mxu0 0
      %377 = vmatpush1.bf16.msra.mxu0 0
      %378 = vmatprep.subr.bf16.mxu0 0
      %379 = vmatpush1.bf16.msra.mxu0 0
      %380 = vmatprep.subr.bf16.mxu0 0
      %381 = vmatpush1.bf16.msra.mxu0 0
      %382 = vmatprep.subr.bf16.mxu0 0
      %383 = vmatpush1.bf16.msra.mxu0 0
      %384 = vmatprep.subr.bf16.mxu0 0
      %385 = vmatpush1.bf16.msra.mxu0 0
      %386 = vmatprep.subr.bf16.mxu0 0
      %387 = vmatpush1.bf16.msra.mxu0 0
      %388 = vmatprep.subr.bf16.mxu0 0
      %389 = vmatpush1.bf16.msra.mxu0 0
      %390 = vmatprep.subr.bf16.mxu0 0
      %391 = vmatpush1.bf16.msra.mxu0 0
      %392 = vmatprep.subr.bf16.mxu0 0
      %393 = vmatpush1.bf16.msra.mxu0 0
      %394 = vmatprep.subr.bf16.mxu0 0
      %395 = vmatpush1.bf16.msra.mxu0 0
      %396 = vmatprep.subr.bf16.mxu0 0
      %397 = vmatpush1.bf16.msra.mxu0 0
      %398 = vmatprep.subr.bf16.mxu0 0
      %399 = vmatpush1.bf16.msra.mxu0 0
      %400 = vmatprep.subr.bf16.mxu0 0
      %401 = vmatpush1.bf16.msra.mxu0 0
      %402 = vmatprep.mubr.bf16.mxu0 0
      %403 = vmatmul.mubr.bf16.gmra.mrb[0].mxu0 %v368
      %v404 = vpop.f32.mrb[0].mxu0
      %v405 = vadd.f32 0.0, %v404
      %v406 = vpop.f32.mrb[0].mxu0
      %v407 = vpop.f32.mrb[0].mxu0
      %v408 = vadd.f32 0.0, %v407
      %v409 = vpop.f32.mrb[0].mxu0
      %410 = vdwg.mxu0
      %411 = vst.msk [vmem:[%s260] sm:$0xff] %vm302, %v405
      %412 = vst.msk [vmem:[%s260 + $0x8] sm:$0xff] %vm302, %v408
      %s413 = smul.u32 2, %s20
      %p414 = scmp.lt.s32.totalorder %s19, 4
      %s415 = scalar_select %p414, %s19, 4
      %p416 = scmp.lt.s32.totalorder %s413, 1
      %s417 = scalar_select %p416, %s413, 1
      %p418 = scmp.lt.s32.totalorder %s21, 0
      %s419 = scalar_select %p418, %s21, 0
      %s420 = sadd.s32 %s419, %s417
      %s421 = smul.addr %s415, 2
      %s422 = sadd.s32 %s420, %s421
      %s423 = smul.addr %s422, 8
      %s424 = scalar_lea.vmem %s3, %s423
      // Predicated region
      $region33: #{rwkv_forward.33} parent=31 // pred_check
        %p425 = pneg %p135
      $region34: #{rwkv_forward.33} parent=31 // pred_check_branch
        %427 = sbr.rel (%p425) target = $region36
      $region35: #{rwkv_forward.33} parent=31 // pred_region
        %s428 = smul.u32 2, %s20
      $region36: #{rwkv_forward.33} parent=31 // pred_fallthru
        _
    $region32: #{rwkv_forward.33} parent=5 // pred_fallthru
      _
    %p429 = scmp.le.s32.totalorder 2, %s9
    // Predicated region
    $region37: #{rwkv_forward.33} parent=5 // pred_check
      %p430 = pneg %p429
    $region38: #{rwkv_forward.33} parent=5 // pred_check_branch
      %432 = sbr.rel (%p430) target = $region40
    $region39: #{rwkv_forward.33} parent=5 // pred_region
      %s433 = ssub.s32 %s9, 2
      // Predicated region
      $region41: #{rwkv_forward.33} parent=39 // pred_check
        %p434 = pneg %p141
      $region42: #{rwkv_forward.33} parent=39 // pred_check_branch
        %436 = sbr.rel (%p434) target = $region44
      $region43: #{rwkv_forward.33} parent=39 // pred_region
        %s437 = smul.u32 2, %s23
        %p438 = scmp.lt.s32.totalorder %s22, 4
        %s439 = scalar_select %p438, %s22, 4
        %p440 = scmp.lt.s32.totalorder %s437, 1
        %s441 = scalar_select %p440, %s437, 1
        %p442 = scmp.lt.s32.totalorder %s24, 0
        %s443 = scalar_select %p442, %s24, 0
        %s444 = sadd.s32 %s443, %s441
        %s445 = smul.addr %s439, 2
        %s446 = sadd.s32 %s444, %s445
        %s447 = smul.addr %s446, 8
        %s448 = scalar_lea.vmem %s3, %s447
      $region44: #{rwkv_forward.33} parent=39 // pred_fallthru
        _
    $region40: #{rwkv_forward.33} parent=5 // pred_fallthru
      _
  $region6: #{rwkv_forward.33} parent=0 // loop_footer
    %s13 = sadd.s32 1, %s9
  $region7: #{rwkv_forward.33} parent=0 // loop_footer_branch
    %8 = sbr.rel target = $region3
  $region8: #{rwkv_forward.33} parent=0 // loop_exit
    _

// kernel: rwkv_forward.38
$region0: #{rwkv_forward.38}
  #allocation0 [shape = 'u32[]', space=smem, size = 0x4, offset = 0x4, fixed_abs, tag = 'smem constant byte address 0x4 - core index']
  #allocation1 [shape = 'u32[144,128]{1,0:T(1,128)}', space=vmem, size = 0x12000, scoped, tag = 'internal scratch']
  %s0 = inlined_call_operand.vmem [shape: bf16[16,64], index: 0, kind: input, shape index: {}]
  %s1 = inlined_call_operand.vmem [shape: bf16[1,64,64], index: 1, kind: input, shape index: {}]
  %s2 = inlined_call_operand.vmem [shape: bf16[1,64,64], index: 2, kind: input, shape index: {}]
  %s3 = inlined_call_operand.vmem [shape: f32[1,16,64], index: 3, kind: output, shape index: {}]
  %s4 = sld [smem:[#allocation0]]
  $region22: #{rwkv_forward.38} parent=0
    _
  %s6 = ssub.s32 1, %s4
  %s7 = scalar_select 0, %s6, %s4
  // Predicated region
  $region2: #{rwkv_forward.38} parent=0 // pred_check
    _
  $region3: #{rwkv_forward.38} parent=0 // pred_check_branch
    %9 = sbr.rel (0) target = $region5
  $region4: #{rwkv_forward.38} parent=0 // pred_region
    _
  $region5: #{rwkv_forward.38} parent=0 // pred_fallthru
    _
  // Predicated region
  $region6: #{rwkv_forward.38} parent=0 // pred_check
    _
  $region7: #{rwkv_forward.38} parent=0 // pred_check_branch
    %11 = sbr.rel (0) target = $region9
  $region8: #{rwkv_forward.38} parent=0 // pred_region
    _
  $region9: #{rwkv_forward.38} parent=0 // pred_fallthru
    _
  // Predicated region
  $region10: #{rwkv_forward.38} parent=0 // pred_check
    _
  $region11: #{rwkv_forward.38} parent=0 // pred_check_branch
    %13 = sbr.rel (0) target = $region13
  $region12: #{rwkv_forward.38} parent=0 // pred_region
    _
  $region13: #{rwkv_forward.38} parent=0 // pred_fallthru
    _
  %v15 = vld [vmem:[%s0] sm:$0xf]
  %v16 = vld [vmem:[%s0 + $0x4] sm:$0xf]
  %v17 = vld [vmem:[%s1] sm:$0xf]
  %v18 = vld [vmem:[%s1 + $0x4] sm:$0xf]
  %v19 = vld [vmem:[%s1 + $0x8] sm:$0xf]
  %v20 = vld [vmem:[%s1 + $0xc] sm:$0xf]
  %v21 = vld [vmem:[%s1 + $0x10] sm:$0xf]
  %v22 = vld [vmem:[%s1 + $0x14] sm:$0xf]
  %v23 = vld [vmem:[%s1 + $0x18] sm:$0xf]
  %v24 = vld [vmem:[%s1 + $0x1c] sm:$0xf]
  %v27 = vunpack.c.l.b16 %v15
  %v28 = vunpack.c.l.b16 %v16
  %v29 = vpack.c.b16 %v28, %v27
  %v38 = vunpack.c.l.b16 %v17
  %v39 = vunpack.c.l.b16 %v18
  %v40 = vunpack.c.l.b16 %v19
  %v41 = vunpack.c.l.b16 %v20
  %v42 = vunpack.c.l.b16 %v21
  %v43 = vunpack.c.l.b16 %v22
  %v44 = vunpack.c.l.b16 %v23
  %v45 = vunpack.c.l.b16 %v24
  %v46 = vpack.c.b16 %v39, %v38
  %v47 = vpack.c.b16 %v41, %v40
  %v48 = vpack.c.b16 %v43, %v42
  %v49 = vpack.c.b16 %v45, %v44
  %vm54 = vcmask 523264
  %v56 = vsel %vm54, %v29, 0
  %58 = vmatprep.subr.bf16.mxu0 0
  %59 = vmatpush1.bf16.msra.mxu0 %v46
  %60 = vmatprep.subr.bf16.mxu0 0
  %61 = vmatpush1.bf16.msra.mxu0 %v47
  %62 = vmatprep.subr.bf16.mxu0 0
  %63 = vmatpush1.bf16.msra.mxu0 %v48
  %64 = vmatprep.subr.bf16.mxu0 0
  %65 = vmatpush1.bf16.msra.mxu0 %v49
  %66 = vmatprep.subr.bf16.mxu0 0
  %67 = vmatpush1.bf16.msra.mxu0 0
  %68 = vmatprep.subr.bf16.mxu0 0
  %69 = vmatpush1.bf16.msra.mxu0 0
  %70 = vmatprep.subr.bf16.mxu0 0
  %71 = vmatpush1.bf16.msra.mxu0 0
  %72 = vmatprep.subr.bf16.mxu0 0
  %73 = vmatpush1.bf16.msra.mxu0 0
  %74 = vmatprep.subr.bf16.mxu0 0
  %75 = vmatpush1.bf16.msra.mxu0 0
  %76 = vmatprep.subr.bf16.mxu0 0
  %77 = vmatpush1.bf16.msra.mxu0 0
  %78 = vmatprep.subr.bf16.mxu0 0
  %79 = vmatpush1.bf16.msra.mxu0 0
  %80 = vmatprep.subr.bf16.mxu0 0
  %81 = vmatpush1.bf16.msra.mxu0 0
  %82 = vmatprep.subr.bf16.mxu0 0
  %83 = vmatpush1.bf16.msra.mxu0 0
  %84 = vmatprep.subr.bf16.mxu0 0
  %85 = vmatpush1.bf16.msra.mxu0 0
  %86 = vmatprep.subr.bf16.mxu0 0
  %87 = vmatpush1.bf16.msra.mxu0 0
  %88 = vmatprep.subr.bf16.mxu0 0
  %89 = vmatpush1.bf16.msra.mxu0 0
  %90 = vmatprep.mubr.bf16.mxu0 0
  %91 = vmatmul.mubr.bf16.gmra.mrb[0].mxu0 %v56
  %v92 = vpop.f32.mrb[0].mxu0
  %v93 = vadd.f32 0.0, %v92
  %v94 = vpop.f32.mrb[0].mxu0
  %v95 = vpop.f32.mrb[0].mxu0
  %v96 = vadd.f32 0.0, %v95
  %v97 = vpop.f32.mrb[0].mxu0
  %98 = vdwg.mxu0
  %v99 = vtanh.pop %v93
  %v100 = vtanh.pop %v96
  %v101 = vpack.c.bf16 %v100, %v99
  %v102 = vld [vmem:[%s2] sm:$0xf]
  %v103 = vld [vmem:[%s2 + $0x4] sm:$0xf]
  %v104 = vld [vmem:[%s2 + $0x8] sm:$0xf]
  %v105 = vld [vmem:[%s2 + $0xc] sm:$0xf]
  %v106 = vld [vmem:[%s2 + $0x10] sm:$0xf]
  %v107 = vld [vmem:[%s2 + $0x14] sm:$0xf]
  %v108 = vld [vmem:[%s2 + $0x18] sm:$0xf]
  %v109 = vld [vmem:[%s2 + $0x1c] sm:$0xf]
  %v118 = vunpack.c.l.b16 %v102
  %v119 = vunpack.c.l.b16 %v103
  %v120 = vunpack.c.l.b16 %v104
  %v121 = vunpack.c.l.b16 %v105
  %v122 = vunpack.c.l.b16 %v106
  %v123 = vunpack.c.l.b16 %v107
  %v124 = vunpack.c.l.b16 %v108
  %v125 = vunpack.c.l.b16 %v109
  %v126 = vpack.c.b16 %v119, %v118
  %v127 = vpack.c.b16 %v121, %v120
  %v128 = vpack.c.b16 %v123, %v122
  %v129 = vpack.c.b16 %v125, %v124
  %v135 = vsel %vm54, %v101, 0
  %137 = vmatprep.subr.bf16.mxu0 0
  %138 = vmatpush1.bf16.msra.mxu0 %v126
  %139 = vmatprep.subr.bf16.mxu0 0
  %140 = vmatpush1.bf16.msra.mxu0 %v127
  %141 = vmatprep.subr.bf16.mxu0 0
  %142 = vmatpush1.bf16.msra.mxu0 %v128
  %143 = vmatprep.subr.bf16.mxu0 0
  %144 = vmatpush1.bf16.msra.mxu0 %v129
  %145 = vmatprep.subr.bf16.mxu0 0
  %146 = vmatpush1.bf16.msra.mxu0 0
  %147 = vmatprep.subr.bf16.mxu0 0
  %148 = vmatpush1.bf16.msra.mxu0 0
  %149 = vmatprep.subr.bf16.mxu0 0
  %150 = vmatpush1.bf16.msra.mxu0 0
  %151 = vmatprep.subr.bf16.mxu0 0
  %152 = vmatpush1.bf16.msra.mxu0 0
  %153 = vmatprep.subr.bf16.mxu0 0
  %154 = vmatpush1.bf16.msra.mxu0 0
  %155 = vmatprep.subr.bf16.mxu0 0
  %156 = vmatpush1.bf16.msra.mxu0 0
  %157 = vmatprep.subr.bf16.mxu0 0
  %158 = vmatpush1.bf16.msra.mxu0 0
  %159 = vmatprep.subr.bf16.mxu0 0
  %160 = vmatpush1.bf16.msra.mxu0 0
  %161 = vmatprep.subr.bf16.mxu0 0
  %162 = vmatpush1.bf16.msra.mxu0 0
  %163 = vmatprep.subr.bf16.mxu0 0
  %164 = vmatpush1.bf16.msra.mxu0 0
  %165 = vmatprep.subr.bf16.mxu0 0
  %166 = vmatpush1.bf16.msra.mxu0 0
  %167 = vmatprep.subr.bf16.mxu0 0
  %168 = vmatpush1.bf16.msra.mxu0 0
  %169 = vmatprep.mubr.bf16.mxu0 0
  %170 = vmatmul.mubr.bf16.gmra.mrb[0].mxu0 %v135
  %v171 = vpop.f32.mrb[0].mxu0
  %v172 = vadd.f32 0.0, %v171
  %v173 = vpop.f32.mrb[0].mxu0
  %v174 = vpop.f32.mrb[0].mxu0
  %v175 = vadd.f32 0.0, %v174
  %v176 = vpop.f32.mrb[0].mxu0
  %177 = vdwg.mxu0
  %178 = vst.msk [vmem:[%s3] sm:$0xff] %vm54, %v172
  %179 = vst.msk [vmem:[%s3 + $0x8] sm:$0xff] %vm54, %v175
  // Predicated region
  $region14: #{rwkv_forward.38} parent=0 // pred_check
    _
  $region15: #{rwkv_forward.38} parent=0 // pred_check_branch
    %181 = sbr.rel (0) target = $region17
  $region16: #{rwkv_forward.38} parent=0 // pred_region
    _
  $region17: #{rwkv_forward.38} parent=0 // pred_fallthru
    _
  // Predicated region
  $region18: #{rwkv_forward.38} parent=0 // pred_check
    _
  $region19: #{rwkv_forward.38} parent=0 // pred_check_branch
    %183 = sbr.rel (0) target = $region21
  $region20: #{rwkv_forward.38} parent=0 // pred_region
    _
  $region21: #{rwkv_forward.38} parent=0 // pred_fallthru
    _

// kernel: rwkv_forward.34
$region0: #{rwkv_forward.34}
  #allocation0 [shape = 'u32[]', space=smem, size = 0x4, offset = 0x4, fixed_abs, tag = 'smem constant byte address 0x4 - core index']
  #allocation1 [shape = 'u32[144,128]{1,0:T(1,128)}', space=vmem, size = 0x12000, scoped, tag = 'internal scratch']
  #allocation2 [shape = 'f32[16,64]{1,0:T(8,128)}', space=vmem, size = 0x2000, scoped, tag = 'scratch operand']
  #allocation3 [shape = 'f32[16,64]{1,0:T(8,128)}', space=vmem, size = 0x2000, scoped, tag = 'scratch operand']
  %s0 = inlined_call_operand.vmem [shape: bf16[16,64], index: 0, kind: input, shape index: {}]
  %s1 = inlined_call_operand.vmem [shape: bf16[64,64], index: 1, kind: input, shape index: {}]
  %s2 = inlined_call_operand.vmem [shape: bf16[64,64], index: 2, kind: input, shape index: {}]
  %s3 = inlined_call_operand.vmem [shape: bf16[64,64], index: 3, kind: input, shape index: {}]
  %s4 = inlined_call_operand.vmem [shape: f32[16,64], index: 4, kind: output, shape index: {}]
  %s5 = sld [smem:[#allocation0]]
  $region34: #{rwkv_forward.34} parent=0
    _
  %s7 = ssub.s32 1, %s5
  %s8 = scalar_select 0, %s7, %s5
  // Predicated region
  $region2: #{rwkv_forward.34} parent=0 // pred_check
    _
  $region3: #{rwkv_forward.34} parent=0 // pred_check_branch
    %10 = sbr.rel (0) target = $region5
  $region4: #{rwkv_forward.34} parent=0 // pred_region
    _
  $region5: #{rwkv_forward.34} parent=0 // pred_fallthru
    _
  // Predicated region
  $region6: #{rwkv_forward.34} parent=0 // pred_check
    _
  $region7: #{rwkv_forward.34} parent=0 // pred_check_branch
    %12 = sbr.rel (0) target = $region9
  $region8: #{rwkv_forward.34} parent=0 // pred_region
    _
  $region9: #{rwkv_forward.34} parent=0 // pred_fallthru
    _
  // Predicated region
  $region10: #{rwkv_forward.34} parent=0 // pred_check
    _
  $region11: #{rwkv_forward.34} parent=0 // pred_check_branch
    %14 = sbr.rel (0) target = $region13
  $region12: #{rwkv_forward.34} parent=0 // pred_region
    _
  $region13: #{rwkv_forward.34} parent=0 // pred_fallthru
    _
  // Predicated region
  $region14: #{rwkv_forward.34} parent=0 // pred_check
    _
  $region15: #{rwkv_forward.34} parent=0 // pred_check_branch
    %16 = sbr.rel (0) target = $region17
  $region16: #{rwkv_forward.34} parent=0 // pred_region
    _
  $region17: #{rwkv_forward.34} parent=0 // pred_fallthru
    _
  %p18 = scmp.eq.s32.totalorder 0, 0
  // Predicated region
  $region18: #{rwkv_forward.34} parent=0 // pred_check
    %p19 = pneg %p18
  $region19: #{rwkv_forward.34} parent=0 // pred_check_branch
    %21 = sbr.rel (%p19) target = $region21
  $region20: #{rwkv_forward.34} parent=0 // pred_region
    %vm22 = vcmask 523264
    %23 = vst.msk [vmem:[#allocation2] sm:$0xff] %vm22, 0.0
    %24 = vst.msk [vmem:[#allocation2 + $0x8] sm:$0xff] %vm22, 0.0
    %25 = vst.msk [vmem:[#allocation3] sm:$0xff] %vm22, 0.0
    %26 = vst.msk [vmem:[#allocation3 + $0x8] sm:$0xff] %vm22, 0.0
  $region21: #{rwkv_forward.34} parent=0 // pred_fallthru
    _
  %v27 = vld [vmem:[%s0] sm:$0xf]
  %v28 = vld [vmem:[%s0 + $0x4] sm:$0xf]
  %v29 = vld [vmem:[#allocation2] sm:$0xff]
  %v30 = vld [vmem:[#allocation2 + $0x8] sm:$0xff]
  %v31 = vld [vmem:[%s1] sm:$0xf]
  %v32 = vld [vmem:[%s1 + $0x4] sm:$0xf]
  %v33 = vld [vmem:[%s1 + $0x8] sm:$0xf]
  %v34 = vld [vmem:[%s1 + $0xc] sm:$0xf]
  %v35 = vld [vmem:[%s1 + $0x10] sm:$0xf]
  %v36 = vld [vmem:[%s1 + $0x14] sm:$0xf]
  %v37 = vld [vmem:[%s1 + $0x18] sm:$0xf]
  %v38 = vld [vmem:[%s1 + $0x1c] sm:$0xf]
  %v41 = vunpack.c.l.b16 %v27
  %v42 = vunpack.c.l.b16 %v28
  %v43 = vpack.c.b16 %v42, %v41
  %v52 = vunpack.c.l.b16 %v31
  %v53 = vunpack.c.l.b16 %v32
  %v54 = vunpack.c.l.b16 %v33
  %v55 = vunpack.c.l.b16 %v34
  %v56 = vunpack.c.l.b16 %v35
  %v57 = vunpack.c.l.b16 %v36
  %v58 = vunpack.c.l.b16 %v37
  %v59 = vunpack.c.l.b16 %v38
  %v60 = vpack.c.b16 %v53, %v52
  %v61 = vpack.c.b16 %v55, %v54
  %v62 = vpack.c.b16 %v57, %v56
  %v63 = vpack.c.b16 %v59, %v58
  %vm68 = vcmask 523264
  %v70 = vsel %vm68, %v43, 0
  %72 = vmatprep.subr.bf16.mxu0 0
  %73 = vmatpush1.bf16.msra.mxu0 %v60
  %74 = vmatprep.subr.bf16.mxu0 0
  %75 = vmatpush1.bf16.msra.mxu0 %v61
  %76 = vmatprep.subr.bf16.mxu0 0
  %77 = vmatpush1.bf16.msra.mxu0 %v62
  %78 = vmatprep.subr.bf16.mxu0 0
  %79 = vmatpush1.bf16.msra.mxu0 %v63
  %80 = vmatprep.subr.bf16.mxu0 0
  %81 = vmatpush1.bf16.msra.mxu0 0
  %82 = vmatprep.subr.bf16.mxu0 0
  %83 = vmatpush1.bf16.msra.mxu0 0
  %84 = vmatprep.subr.bf16.mxu0 0
  %85 = vmatpush1.bf16.msra.mxu0 0
  %86 = vmatprep.subr.bf16.mxu0 0
  %87 = vmatpush1.bf16.msra.mxu0 0
  %88 = vmatprep.subr.bf16.mxu0 0
  %89 = vmatpush1.bf16.msra.mxu0 0
  %90 = vmatprep.subr.bf16.mxu0 0
  %91 = vmatpush1.bf16.msra.mxu0 0
  %92 = vmatprep.subr.bf16.mxu0 0
  %93 = vmatpush1.bf16.msra.mxu0 0
  %94 = vmatprep.subr.bf16.mxu0 0
  %95 = vmatpush1.bf16.msra.mxu0 0
  %96 = vmatprep.subr.bf16.mxu0 0
  %97 = vmatpush1.bf16.msra.mxu0 0
  %98 = vmatprep.subr.bf16.mxu0 0
  %99 = vmatpush1.bf16.msra.mxu0 0
  %100 = vmatprep.subr.bf16.mxu0 0
  %101 = vmatpush1.bf16.msra.mxu0 0
  %102 = vmatprep.subr.bf16.mxu0 0
  %103 = vmatpush1.bf16.msra.mxu0 0
  %104 = vmatprep.mubr.bf16.mxu0 0
  %105 = vmatmul.mubr.bf16.gmra.mrb[0].mxu0 %v70
  %v106 = vpop.f32.mrb[0].mxu0
  %v107 = vadd.f32 0.0, %v106
  %v108 = vpop.f32.mrb[0].mxu0
  %v109 = vpop.f32.mrb[0].mxu0
  %v110 = vadd.f32 0.0, %v109
  %v111 = vpop.f32.mrb[0].mxu0
  %112 = vdwg.mxu0
  %v113 = vadd.f32 %v29, %v107
  %v114 = vadd.f32 %v30, %v110
  %115 = vst.msk [vmem:[#allocation2] sm:$0xff] %vm68, %v113
  %116 = vst.msk [vmem:[#allocation2 + $0x8] sm:$0xff] %vm68, %v114
  %v117 = vld [vmem:[#allocation3] sm:$0xff]
  %v118 = vld [vmem:[#allocation3 + $0x8] sm:$0xff]
  %v119 = vld [vmem:[%s2] sm:$0xf]
  %v120 = vld [vmem:[%s2 + $0x4] sm:$0xf]
  %v121 = vld [vmem:[%s2 + $0x8] sm:$0xf]
  %v122 = vld [vmem:[%s2 + $0xc] sm:$0xf]
  %v123 = vld [vmem:[%s2 + $0x10] sm:$0xf]
  %v124 = vld [vmem:[%s2 + $0x14] sm:$0xf]
  %v125 = vld [vmem:[%s2 + $0x18] sm:$0xf]
  %v126 = vld [vmem:[%s2 + $0x1c] sm:$0xf]
  %v135 = vunpack.c.l.b16 %v119
  %v136 = vunpack.c.l.b16 %v120
  %v137 = vunpack.c.l.b16 %v121
  %v138 = vunpack.c.l.b16 %v122
  %v139 = vunpack.c.l.b16 %v123
  %v140 = vunpack.c.l.b16 %v124
  %v141 = vunpack.c.l.b16 %v125
  %v142 = vunpack.c.l.b16 %v126
  %v143 = vpack.c.b16 %v136, %v135
  %v144 = vpack.c.b16 %v138, %v137
  %v145 = vpack.c.b16 %v140, %v139
  %v146 = vpack.c.b16 %v142, %v141
  %151 = vmatprep.subr.bf16.mxu0 0
  %152 = vmatpush1.bf16.msra.mxu0 %v143
  %153 = vmatprep.subr.bf16.mxu0 0
  %154 = vmatpush1.bf16.msra.mxu0 %v144
  %155 = vmatprep.subr.bf16.mxu0 0
  %156 = vmatpush1.bf16.msra.mxu0 %v145
  %157 = vmatprep.subr.bf16.mxu0 0
  %158 = vmatpush1.bf16.msra.mxu0 %v146
  %159 = vmatprep.subr.bf16.mxu0 0
  %160 = vmatpush1.bf16.msra.mxu0 0
  %161 = vmatprep.subr.bf16.mxu0 0
  %162 = vmatpush1.bf16.msra.mxu0 0
  %163 = vmatprep.subr.bf16.mxu0 0
  %164 = vmatpush1.bf16.msra.mxu0 0
  %165 = vmatprep.subr.bf16.mxu0 0
  %166 = vmatpush1.bf16.msra.mxu0 0
  %167 = vmatprep.subr.bf16.mxu0 0
  %168 = vmatpush1.bf16.msra.mxu0 0
  %169 = vmatprep.subr.bf16.mxu0 0
  %170 = vmatpush1.bf16.msra.mxu0 0
  %171 = vmatprep.subr.bf16.mxu0 0
  %172 = vmatpush1.bf16.msra.mxu0 0
  %173 = vmatprep.subr.bf16.mxu0 0
  %174 = vmatpush1.bf16.msra.mxu0 0
  %175 = vmatprep.subr.bf16.mxu0 0
  %176 = vmatpush1.bf16.msra.mxu0 0
  %177 = vmatprep.subr.bf16.mxu0 0
  %178 = vmatpush1.bf16.msra.mxu0 0
  %179 = vmatprep.subr.bf16.mxu0 0
  %180 = vmatpush1.bf16.msra.mxu0 0
  %181 = vmatprep.subr.bf16.mxu0 0
  %182 = vmatpush1.bf16.msra.mxu0 0
  %183 = vmatprep.mubr.bf16.mxu0 0
  %184 = vmatmul.mubr.bf16.gmra.mrb[0].mxu0 %v70
  %v185 = vpop.f32.mrb[0].mxu0
  %v186 = vadd.f32 0.0, %v185
  %v187 = vpop.f32.mrb[0].mxu0
  %v188 = vpop.f32.mrb[0].mxu0
  %v189 = vadd.f32 0.0, %v188
  %v190 = vpop.f32.mrb[0].mxu0
  %191 = vdwg.mxu0
  %v192 = vadd.f32 %v117, %v186
  %v193 = vadd.f32 %v118, %v189
  %194 = vst.msk [vmem:[#allocation3] sm:$0xff] %vm68, %v192
  %195 = vst.msk [vmem:[#allocation3 + $0x8] sm:$0xff] %vm68, %v193
  // Predicated region
  $region22: #{rwkv_forward.34} parent=0 // pred_check
    %p196 = pneg %p18
  $region23: #{rwkv_forward.34} parent=0 // pred_check_branch
    %198 = sbr.rel (%p196) target = $region25
  $region24: #{rwkv_forward.34} parent=0 // pred_region
    %v199 = vld [vmem:[#allocation3] sm:$0xff]
    %v200 = vld [vmem:[#allocation3 + $0x8] sm:$0xff]
    %v201 = vpack.c.bf16 %v200, %v199
    %v202 = vld [vmem:[%s3] sm:$0xf]
    %v203 = vld [vmem:[%s3 + $0x4] sm:$0xf]
    %v204 = vld [vmem:[%s3 + $0x8] sm:$0xf]
    %v205 = vld [vmem:[%s3 + $0xc] sm:$0xf]
    %v206 = vld [vmem:[%s3 + $0x10] sm:$0xf]
    %v207 = vld [vmem:[%s3 + $0x14] sm:$0xf]
    %v208 = vld [vmem:[%s3 + $0x18] sm:$0xf]
    %v209 = vld [vmem:[%s3 + $0x1c] sm:$0xf]
    %v218 = vunpack.c.l.b16 %v202
    %v219 = vunpack.c.l.b16 %v203
    %v220 = vunpack.c.l.b16 %v204
    %v221 = vunpack.c.l.b16 %v205
    %v222 = vunpack.c.l.b16 %v206
    %v223 = vunpack.c.l.b16 %v207
    %v224 = vunpack.c.l.b16 %v208
    %v225 = vunpack.c.l.b16 %v209
    %v226 = vpack.c.b16 %v219, %v218
    %v227 = vpack.c.b16 %v221, %v220
    %v228 = vpack.c.b16 %v223, %v222
    %v229 = vpack.c.b16 %v225, %v224
    %v235 = vsel %vm68, %v201, 0
    %237 = vmatprep.subr.bf16.mxu0 0
    %238 = vmatpush1.bf16.msra.mxu0 %v226
    %239 = vmatprep.subr.bf16.mxu0 0
    %240 = vmatpush1.bf16.msra.mxu0 %v227
    %241 = vmatprep.subr.bf16.mxu0 0
    %242 = vmatpush1.bf16.msra.mxu0 %v228
    %243 = vmatprep.subr.bf16.mxu0 0
    %244 = vmatpush1.bf16.msra.mxu0 %v229
    %245 = vmatprep.subr.bf16.mxu0 0
    %246 = vmatpush1.bf16.msra.mxu0 0
    %247 = vmatprep.subr.bf16.mxu0 0
    %248 = vmatpush1.bf16.msra.mxu0 0
    %249 = vmatprep.subr.bf16.mxu0 0
    %250 = vmatpush1.bf16.msra.mxu0 0
    %251 = vmatprep.subr.bf16.mxu0 0
    %252 = vmatpush1.bf16.msra.mxu0 0
    %253 = vmatprep.subr.bf16.mxu0 0
    %254 = vmatpush1.bf16.msra.mxu0 0
    %255 = vmatprep.subr.bf16.mxu0 0
    %256 = vmatpush1.bf16.msra.mxu0 0
    %257 = vmatprep.subr.bf16.mxu0 0
    %258 = vmatpush1.bf16.msra.mxu0 0
    %259 = vmatprep.subr.bf16.mxu0 0
    %260 = vmatpush1.bf16.msra.mxu0 0
    %261 = vmatprep.subr.bf16.mxu0 0
    %262 = vmatpush1.bf16.msra.mxu0 0
    %263 = vmatprep.subr.bf16.mxu0 0
    %264 = vmatpush1.bf16.msra.mxu0 0
    %265 = vmatprep.subr.bf16.mxu0 0
    %266 = vmatpush1.bf16.msra.mxu0 0
    %267 = vmatprep.subr.bf16.mxu0 0
    %268 = vmatpush1.bf16.msra.mxu0 0
    %269 = vmatprep.mubr.bf16.mxu0 0
    %270 = vmatmul.mubr.bf16.gmra.mrb[0].mxu0 %v235
    %v271 = vpop.f32.mrb[0].mxu0
    %v272 = vadd.f32 0.0, %v271
    %v273 = vpop.f32.mrb[0].mxu0
    %v274 = vpop.f32.mrb[0].mxu0
    %v275 = vadd.f32 0.0, %v274
    %v276 = vpop.f32.mrb[0].mxu0
    %277 = vdwg.mxu0
    %v278 = vld [vmem:[#allocation2] sm:$0xff]
    %v279 = vld [vmem:[#allocation2 + $0x8] sm:$0xff]
    %v280 = vmul.f32 %v272, 2.0
    %v281 = vmul.f32 %v275, 2.0
    %v282 = vadd.f32 %v278, %v280
    %v283 = vadd.f32 %v279, %v281
    %284 = vst.msk [vmem:[%s4] sm:$0xff] %vm68, %v282
    %285 = vst.msk [vmem:[%s4 + $0x8] sm:$0xff] %vm68, %v283
  $region25: #{rwkv_forward.34} parent=0 // pred_fallthru
    _
  // Predicated region
  $region26: #{rwkv_forward.34} parent=0 // pred_check
    _
  $region27: #{rwkv_forward.34} parent=0 // pred_check_branch
    %287 = sbr.rel (0) target = $region29
  $region28: #{rwkv_forward.34} parent=0 // pred_region
    _
  $region29: #{rwkv_forward.34} parent=0 // pred_fallthru
    _
  // Predicated region
  $region30: #{rwkv_forward.34} parent=0 // pred_check
    _
  $region31: #{rwkv_forward.34} parent=0 // pred_check_branch
    %289 = sbr.rel (0) target = $region33
  $region32: #{rwkv_forward.34} parent=0 // pred_region
    _
  $region33: #{rwkv_forward.34} parent=0 // pred_fallthru
    _

// kernel: rwkv_forward.40
$region0: #{rwkv_forward.40}
  #allocation0 [shape = 'u32[]', space=smem, size = 0x4, offset = 0x4, fixed_abs, tag = 'smem constant byte address 0x4 - core index']
  #allocation1 [shape = 'u32[144,128]{1,0:T(1,128)}', space=vmem, size = 0x12000, scoped, tag = 'internal scratch']
  %s0 = inlined_call_operand.vmem [shape: f32[16,64], index: 0, kind: input, shape index: {}]
  %s1 = inlined_call_operand.vmem [shape: f32[1,64], index: 1, kind: input, shape index: {}]
  %s2 = inlined_call_operand.vmem [shape: f32[1,64], index: 2, kind: input, shape index: {}]
  %s3 = inlined_call_operand.vmem [shape: f32[16,64], index: 3, kind: output, shape index: {}]
  %s4 = sld [smem:[#allocation0]]
  $region22: #{rwkv_forward.40} parent=0
    _
  %s6 = ssub.s32 1, %s4
  %s7 = scalar_select 0, %s6, %s4
  // Predicated region
  $region2: #{rwkv_forward.40} parent=0 // pred_check
    _
  $region3: #{rwkv_forward.40} parent=0 // pred_check_branch
    %9 = sbr.rel (0) target = $region5
  $region4: #{rwkv_forward.40} parent=0 // pred_region
    _
  $region5: #{rwkv_forward.40} parent=0 // pred_fallthru
    _
  // Predicated region
  $region6: #{rwkv_forward.40} parent=0 // pred_check
    _
  $region7: #{rwkv_forward.40} parent=0 // pred_check_branch
    %11 = sbr.rel (0) target = $region9
  $region8: #{rwkv_forward.40} parent=0 // pred_region
    _
  $region9: #{rwkv_forward.40} parent=0 // pred_fallthru
    _
  // Predicated region
  $region10: #{rwkv_forward.40} parent=0 // pred_check
    _
  $region11: #{rwkv_forward.40} parent=0 // pred_check_branch
    %13 = sbr.rel (0) target = $region13
  $region12: #{rwkv_forward.40} parent=0 // pred_region
    _
  $region13: #{rwkv_forward.40} parent=0 // pred_fallthru
    _
  %v14 = vld [vmem:[%s0] sm:$0xff]
  %v15 = vld [vmem:[%s0 + $0x8] sm:$0xff]
  %v18 = vcombine.high %v14, %v14
  %v20 = vunpack.c.l.s4 1966171168
  %v21 = vunpack.c.0.s8 %v20
  %v22 = vlaneseq
  %v23 = vshrl.u32 %v22, 7
  %v24 = vsub.s32 %v21, %v23
  %v25 = vrot.slane %v14, %v24
  %v27 = vunpack.c.l.s4 1966171168
  %v28 = vunpack.c.0.s8 %v27
  %v29 = vlaneseq
  %v30 = vshrl.u32 %v29, 7
  %v31 = vsub.s32 %v28, %v30
  %v32 = vrot.slane %v18, %v31
  %v33 = vcombine.high %v25, %v25
  %v34 = vcombine.high %v32, %v32
  %v36 = vunpack.c.l.s4 1966171168
  %v37 = vunpack.c.0.s8 %v36
  %v38 = vlaneseq
  %v39 = vshrl.u32 %v38, 7
  %v40 = vsub.s32 %v37, %v39
  %v41 = vrot.slane %v25, %v40
  %v43 = vunpack.c.l.s4 1966171168
  %v44 = vunpack.c.0.s8 %v43
  %v45 = vlaneseq
  %v46 = vshrl.u32 %v45, 7
  %v47 = vsub.s32 %v44, %v46
  %v48 = vrot.slane %v32, %v47
  %v50 = vunpack.c.l.s4 1966171168
  %v51 = vunpack.c.0.s8 %v50
  %v52 = vlaneseq
  %v53 = vshrl.u32 %v52, 7
  %v54 = vsub.s32 %v51, %v53
  %v55 = vrot.slane %v33, %v54
  %v57 = vunpack.c.l.s4 1966171168
  %v58 = vunpack.c.0.s8 %v57
  %v59 = vlaneseq
  %v60 = vshrl.u32 %v59, 7
  %v61 = vsub.s32 %v58, %v60
  %v62 = vrot.slane %v34, %v61
  %v63 = vcombine.high %v41, %v41
  %v64 = vcombine.high %v48, %v48
  %v65 = vcombine.high %v55, %v55
  %v66 = vcombine.high %v62, %v62
  %v67 = vcombine.high %v15, %v15
  %v69 = vunpack.c.l.s4 1966171168
  %v70 = vunpack.c.0.s8 %v69
  %v71 = vlaneseq
  %v72 = vshrl.u32 %v71, 7
  %v73 = vsub.s32 %v70, %v72
  %v74 = vrot.slane %v15, %v73
  %v76 = vunpack.c.l.s4 1966171168
  %v77 = vunpack.c.0.s8 %v76
  %v78 = vlaneseq
  %v79 = vshrl.u32 %v78, 7
  %v80 = vsub.s32 %v77, %v79
  %v81 = vrot.slane %v67, %v80
  %v82 = vcombine.high %v74, %v74
  %v83 = vcombine.high %v81, %v81
  %v85 = vunpack.c.l.s4 1966171168
  %v86 = vunpack.c.0.s8 %v85
  %v87 = vlaneseq
  %v88 = vshrl.u32 %v87, 7
  %v89 = vsub.s32 %v86, %v88
  %v90 = vrot.slane %v74, %v89
  %v92 = vunpack.c.l.s4 1966171168
  %v93 = vunpack.c.0.s8 %v92
  %v94 = vlaneseq
  %v95 = vshrl.u32 %v94, 7
  %v96 = vsub.s32 %v93, %v95
  %v97 = vrot.slane %v81, %v96
  %v99 = vunpack.c.l.s4 1966171168
  %v100 = vunpack.c.0.s8 %v99
  %v101 = vlaneseq
  %v102 = vshrl.u32 %v101, 7
  %v103 = vsub.s32 %v100, %v102
  %v104 = vrot.slane %v82, %v103
  %v106 = vunpack.c.l.s4 1966171168
  %v107 = vunpack.c.0.s8 %v106
  %v108 = vlaneseq
  %v109 = vshrl.u32 %v108, 7
  %v110 = vsub.s32 %v107, %v109
  %v111 = vrot.slane %v83, %v110
  %v112 = vcombine.high %v90, %v90
  %v113 = vcombine.high %v97, %v97
  %v114 = vcombine.high %v104, %v104
  %v115 = vcombine.high %v111, %v111
  %vm132 = vcmask 516096
  %v133 = vsel %vm132, %v41, 0.0
  %134 = vadd.xlane.f32.xlu0 %v133
  %v135 = vpop.xlane.xlu0 %134
  %v136 = vsel %vm132, %v55, 0.0
  %137 = vadd.xlane.f32.xlu0 %v136
  %v138 = vpop.xlane.xlu0 %137
  %v139 = vsel %vm132, %v63, 0.0
  %140 = vadd.xlane.f32.xlu0 %v139
  %v141 = vpop.xlane.xlu0 %140
  %v142 = vsel %vm132, %v65, 0.0
  %143 = vadd.xlane.f32.xlu0 %v142
  %v144 = vpop.xlane.xlu0 %143
  %v145 = vsel %vm132, %v48, 0.0
  %146 = vadd.xlane.f32.xlu0 %v145
  %v147 = vpop.xlane.xlu0 %146
  %v148 = vsel %vm132, %v62, 0.0
  %149 = vadd.xlane.f32.xlu0 %v148
  %v150 = vpop.xlane.xlu0 %149
  %v151 = vsel %vm132, %v64, 0.0
  %152 = vadd.xlane.f32.xlu0 %v151
  %v153 = vpop.xlane.xlu0 %152
  %v154 = vsel %vm132, %v66, 0.0
  %155 = vadd.xlane.f32.xlu0 %v154
  %v156 = vpop.xlane.xlu0 %155
  %v157 = vsel %vm132, %v90, 0.0
  %158 = vadd.xlane.f32.xlu0 %v157
  %v159 = vpop.xlane.xlu0 %158
  %v160 = vsel %vm132, %v104, 0.0
  %161 = vadd.xlane.f32.xlu0 %v160
  %v162 = vpop.xlane.xlu0 %161
  %v163 = vsel %vm132, %v112, 0.0
  %164 = vadd.xlane.f32.xlu0 %v163
  %v165 = vpop.xlane.xlu0 %164
  %v166 = vsel %vm132, %v114, 0.0
  %167 = vadd.xlane.f32.xlu0 %v166
  %v168 = vpop.xlane.xlu0 %167
  %v169 = vsel %vm132, %v97, 0.0
  %170 = vadd.xlane.f32.xlu0 %v169
  %v171 = vpop.xlane.xlu0 %170
  %v172 = vsel %vm132, %v111, 0.0
  %173 = vadd.xlane.f32.xlu0 %v172
  %v174 = vpop.xlane.xlu0 %173
  %v175 = vsel %vm132, %v113, 0.0
  %176 = vadd.xlane.f32.xlu0 %v175
  %v177 = vpop.xlane.xlu0 %176
  %v178 = vsel %vm132, %v115, 0.0
  %179 = vadd.xlane.f32.xlu0 %v178
  %v180 = vpop.xlane.xlu0 %179
  %v181 = vrcp.pop 64.0
  %v182 = vmul.f32 %v135, %v181
  %v183 = vmul.f32 %v138, %v181
  %v184 = vmul.f32 %v141, %v181
  %v185 = vmul.f32 %v144, %v181
  %v186 = vmul.f32 %v147, %v181
  %v187 = vmul.f32 %v150, %v181
  %v188 = vmul.f32 %v153, %v181
  %v189 = vmul.f32 %v156, %v181
  %v190 = vmul.f32 %v159, %v181
  %v191 = vmul.f32 %v162, %v181
  %v192 = vmul.f32 %v165, %v181
  %v193 = vmul.f32 %v168, %v181
  %v194 = vmul.f32 %v171, %v181
  %v195 = vmul.f32 %v174, %v181
  %v196 = vmul.f32 %v177, %v181
  %v197 = vmul.f32 %v180, %v181
  %v198 = vsub.f32 %v41, %v182
  %v199 = vsub.f32 %v55, %v183
  %v200 = vsub.f32 %v63, %v184
  %v201 = vsub.f32 %v65, %v185
  %v202 = vsub.f32 %v48, %v186
  %v203 = vsub.f32 %v62, %v187
  %v204 = vsub.f32 %v64, %v188
  %v205 = vsub.f32 %v66, %v189
  %v206 = vsub.f32 %v90, %v190
  %v207 = vsub.f32 %v104, %v191
  %v208 = vsub.f32 %v112, %v192
  %v209 = vsub.f32 %v114, %v193
  %v210 = vsub.f32 %v97, %v194
  %v211 = vsub.f32 %v111, %v195
  %v212 = vsub.f32 %v113, %v196
  %v213 = vsub.f32 %v115, %v197
  %v214 = vmul.f32 %v198, %v198
  %v215 = vmul.f32 %v199, %v199
  %v216 = vmul.f32 %v200, %v200
  %v217 = vmul.f32 %v201, %v201
  %v218 = vmul.f32 %v202, %v202
  %v219 = vmul.f32 %v203, %v203
  %v220 = vmul.f32 %v204, %v204
  %v221 = vmul.f32 %v205, %v205
  %v222 = vmul.f32 %v206, %v206
  %v223 = vmul.f32 %v207, %v207
  %v224 = vmul.f32 %v208, %v208
  %v225 = vmul.f32 %v209, %v209
  %v226 = vmul.f32 %v210, %v210
  %v227 = vmul.f32 %v211, %v211
  %v228 = vmul.f32 %v212, %v212
  %v229 = vmul.f32 %v213, %v213
  %v230 = vsel %vm132, %v214, 0.0
  %231 = vadd.xlane.f32.xlu0 %v230
  %v232 = vpop.xlane.xlu0 %231
  %v233 = vsel %vm132, %v215, 0.0
  %234 = vadd.xlane.f32.xlu0 %v233
  %v235 = vpop.xlane.xlu0 %234
  %v236 = vsel %vm132, %v216, 0.0
  %237 = vadd.xlane.f32.xlu0 %v236
  %v238 = vpop.xlane.xlu0 %237
  %v239 = vsel %vm132, %v217, 0.0
  %240 = vadd.xlane.f32.xlu0 %v239
  %v241 = vpop.xlane.xlu0 %240
  %v242 = vsel %vm132, %v218, 0.0
  %243 = vadd.xlane.f32.xlu0 %v242
  %v244 = vpop.xlane.xlu0 %243
  %v245 = vsel %vm132, %v219, 0.0
  %246 = vadd.xlane.f32.xlu0 %v245
  %v247 = vpop.xlane.xlu0 %246
  %v248 = vsel %vm132, %v220, 0.0
  %249 = vadd.xlane.f32.xlu0 %v248
  %v250 = vpop.xlane.xlu0 %249
  %v251 = vsel %vm132, %v221, 0.0
  %252 = vadd.xlane.f32.xlu0 %v251
  %v253 = vpop.xlane.xlu0 %252
  %v254 = vsel %vm132, %v222, 0.0
  %255 = vadd.xlane.f32.xlu0 %v254
  %v256 = vpop.xlane.xlu0 %255
  %v257 = vsel %vm132, %v223, 0.0
  %258 = vadd.xlane.f32.xlu0 %v257
  %v259 = vpop.xlane.xlu0 %258
  %v260 = vsel %vm132, %v224, 0.0
  %261 = vadd.xlane.f32.xlu0 %v260
  %v262 = vpop.xlane.xlu0 %261
  %v263 = vsel %vm132, %v225, 0.0
  %264 = vadd.xlane.f32.xlu0 %v263
  %v265 = vpop.xlane.xlu0 %264
  %v266 = vsel %vm132, %v226, 0.0
  %267 = vadd.xlane.f32.xlu0 %v266
  %v268 = vpop.xlane.xlu0 %267
  %v269 = vsel %vm132, %v227, 0.0
  %270 = vadd.xlane.f32.xlu0 %v269
  %v271 = vpop.xlane.xlu0 %270
  %v272 = vsel %vm132, %v228, 0.0
  %273 = vadd.xlane.f32.xlu0 %v272
  %v274 = vpop.xlane.xlu0 %273
  %v275 = vsel %vm132, %v229, 0.0
  %276 = vadd.xlane.f32.xlu0 %v275
  %v277 = vpop.xlane.xlu0 %276
  %v278 = vmul.f32 %v232, %v181
  %v279 = vmul.f32 %v235, %v181
  %v280 = vmul.f32 %v238, %v181
  %v281 = vmul.f32 %v241, %v181
  %v282 = vmul.f32 %v244, %v181
  %v283 = vmul.f32 %v247, %v181
  %v284 = vmul.f32 %v250, %v181
  %v285 = vmul.f32 %v253, %v181
  %v286 = vmul.f32 %v256, %v181
  %v287 = vmul.f32 %v259, %v181
  %v288 = vmul.f32 %v262, %v181
  %v289 = vmul.f32 %v265, %v181
  %v290 = vmul.f32 %v268, %v181
  %v291 = vmul.f32 %v271, %v181
  %v292 = vmul.f32 %v274, %v181
  %v293 = vmul.f32 %v277, %v181
  %v294 = vadd.f32 %v278, 0.00064
  %v295 = vadd.f32 %v279, 0.00064
  %v296 = vadd.f32 %v280, 0.00064
  %v297 = vadd.f32 %v281, 0.00064
  %v298 = vadd.f32 %v282, 0.00064
  %v299 = vadd.f32 %v283, 0.00064
  %v300 = vadd.f32 %v284, 0.00064
  %v301 = vadd.f32 %v285, 0.00064
  %v302 = vadd.f32 %v286, 0.00064
  %v303 = vadd.f32 %v287, 0.00064
  %v304 = vadd.f32 %v288, 0.00064
  %v305 = vadd.f32 %v289, 0.00064
  %v306 = vadd.f32 %v290, 0.00064
  %v307 = vadd.f32 %v291, 0.00064
  %v308 = vadd.f32 %v292, 0.00064
  %v309 = vadd.f32 %v293, 0.00064
  %v310 = vrsqrt.pop %v294
  %v311 = vrsqrt.pop %v295
  %v312 = vrsqrt.pop %v296
  %v313 = vrsqrt.pop %v297
  %v314 = vrsqrt.pop %v298
  %v315 = vrsqrt.pop %v299
  %v316 = vrsqrt.pop %v300
  %v317 = vrsqrt.pop %v301
  %v318 = vrsqrt.pop %v302
  %v319 = vrsqrt.pop %v303
  %v320 = vrsqrt.pop %v304
  %v321 = vrsqrt.pop %v305
  %v322 = vrsqrt.pop %v306
  %v323 = vrsqrt.pop %v307
  %v324 = vrsqrt.pop %v308
  %v325 = vrsqrt.pop %v309
  %v326 = vmul.f32 %v198, %v310
  %v327 = vmul.f32 %v199, %v311
  %v328 = vmul.f32 %v200, %v312
  %v329 = vmul.f32 %v201, %v313
  %v330 = vmul.f32 %v202, %v314
  %v331 = vmul.f32 %v203, %v315
  %v332 = vmul.f32 %v204, %v316
  %v333 = vmul.f32 %v205, %v317
  %v334 = vmul.f32 %v206, %v318
  %v335 = vmul.f32 %v207, %v319
  %v336 = vmul.f32 %v208, %v320
  %v337 = vmul.f32 %v209, %v321
  %v338 = vmul.f32 %v210, %v322
  %v339 = vmul.f32 %v211, %v323
  %v340 = vmul.f32 %v212, %v324
  %v341 = vmul.f32 %v213, %v325
  %v342 = vld [vmem:[%s1] sm:$0x1]
  %v344 = vlaneseq
  %v345 = vshrl.u32 %v344, 7
  %v346 = vsub.s32 0, %v345
  %v347 = vrot.slane %v342, %v346
  %v348 = vcombine.high %v347, %v347
  %v350 = vunpack.c.l.s4 1966171168
  %v351 = vunpack.c.0.s8 %v350
  %v352 = vlaneseq
  %v353 = vshrl.u32 %v352, 7
  %v354 = vsub.s32 %v351, %v353
  %v355 = vrot.slane %v347, %v354
  %v357 = vunpack.c.l.s4 1966171168
  %v358 = vunpack.c.0.s8 %v357
  %v359 = vlaneseq
  %v360 = vshrl.u32 %v359, 7
  %v361 = vsub.s32 %v358, %v360
  %v362 = vrot.slane %v348, %v361
  %v363 = vcombine.high %v355, %v355
  %v364 = vcombine.high %v362, %v362
  %v366 = vunpack.c.l.s4 1966171168
  %v367 = vunpack.c.0.s8 %v366
  %v368 = vlaneseq
  %v369 = vshrl.u32 %v368, 7
  %v370 = vsub.s32 %v367, %v369
  %v371 = vrot.slane %v355, %v370
  %v373 = vunpack.c.l.s4 1966171168
  %v374 = vunpack.c.0.s8 %v373
  %v375 = vlaneseq
  %v376 = vshrl.u32 %v375, 7
  %v377 = vsub.s32 %v374, %v376
  %v378 = vrot.slane %v362, %v377
  %v380 = vunpack.c.l.s4 1966171168
  %v381 = vunpack.c.0.s8 %v380
  %v382 = vlaneseq
  %v383 = vshrl.u32 %v382, 7
  %v384 = vsub.s32 %v381, %v383
  %v385 = vrot.slane %v363, %v384
  %v387 = vunpack.c.l.s4 1966171168
  %v388 = vunpack.c.0.s8 %v387
  %v389 = vlaneseq
  %v390 = vshrl.u32 %v389, 7
  %v391 = vsub.s32 %v388, %v390
  %v392 = vrot.slane %v364, %v391
  %v393 = vcombine.high %v371, %v371
  %v394 = vcombine.high %v378, %v378
  %v395 = vcombine.high %v385, %v385
  %v396 = vcombine.high %v392, %v392
  %v405 = vmul.f32 %v326, %v371
  %v406 = vmul.f32 %v327, %v385
  %v407 = vmul.f32 %v328, %v393
  %v408 = vmul.f32 %v329, %v395
  %v409 = vmul.f32 %v330, %v378
  %v410 = vmul.f32 %v331, %v392
  %v411 = vmul.f32 %v332, %v394
  %v412 = vmul.f32 %v333, %v396
  %v413 = vmul.f32 %v334, %v371
  %v414 = vmul.f32 %v335, %v385
  %v415 = vmul.f32 %v336, %v393
  %v416 = vmul.f32 %v337, %v395
  %v417 = vmul.f32 %v338, %v378
  %v418 = vmul.f32 %v339, %v392
  %v419 = vmul.f32 %v340, %v394
  %v420 = vmul.f32 %v341, %v396
  %v421 = vld [vmem:[%s2] sm:$0x1]
  %v423 = vlaneseq
  %v424 = vshrl.u32 %v423, 7
  %v425 = vsub.s32 0, %v424
  %v426 = vrot.slane %v421, %v425
  %v427 = vcombine.high %v426, %v426
  %v429 = vunpack.c.l.s4 1966171168
  %v430 = vunpack.c.0.s8 %v429
  %v431 = vlaneseq
  %v432 = vshrl.u32 %v431, 7
  %v433 = vsub.s32 %v430, %v432
  %v434 = vrot.slane %v426, %v433
  %v436 = vunpack.c.l.s4 1966171168
  %v437 = vunpack.c.0.s8 %v436
  %v438 = vlaneseq
  %v439 = vshrl.u32 %v438, 7
  %v440 = vsub.s32 %v437, %v439
  %v441 = vrot.slane %v427, %v440
  %v442 = vcombine.high %v434, %v434
  %v443 = vcombine.high %v441, %v441
  %v445 = vunpack.c.l.s4 1966171168
  %v446 = vunpack.c.0.s8 %v445
  %v447 = vlaneseq
  %v448 = vshrl.u32 %v447, 7
  %v449 = vsub.s32 %v446, %v448
  %v450 = vrot.slane %v434, %v449
  %v452 = vunpack.c.l.s4 1966171168
  %v453 = vunpack.c.0.s8 %v452
  %v454 = vlaneseq
  %v455 = vshrl.u32 %v454, 7
  %v456 = vsub.s32 %v453, %v455
  %v457 = vrot.slane %v441, %v456
  %v459 = vunpack.c.l.s4 1966171168
  %v460 = vunpack.c.0.s8 %v459
  %v461 = vlaneseq
  %v462 = vshrl.u32 %v461, 7
  %v463 = vsub.s32 %v460, %v462
  %v464 = vrot.slane %v442, %v463
  %v466 = vunpack.c.l.s4 1966171168
  %v467 = vunpack.c.0.s8 %v466
  %v468 = vlaneseq
  %v469 = vshrl.u32 %v468, 7
  %v470 = vsub.s32 %v467, %v469
  %v471 = vrot.slane %v443, %v470
  %v472 = vcombine.high %v450, %v450
  %v473 = vcombine.high %v457, %v457
  %v474 = vcombine.high %v464, %v464
  %v475 = vcombine.high %v471, %v471
  %v484 = vadd.f32 %v405, %v450
  %v485 = vadd.f32 %v406, %v464
  %v486 = vadd.f32 %v407, %v472
  %v487 = vadd.f32 %v408, %v474
  %v488 = vadd.f32 %v409, %v457
  %v489 = vadd.f32 %v410, %v471
  %v490 = vadd.f32 %v411, %v473
  %v491 = vadd.f32 %v412, %v475
  %v492 = vadd.f32 %v413, %v450
  %v493 = vadd.f32 %v414, %v464
  %v494 = vadd.f32 %v415, %v472
  %v495 = vadd.f32 %v416, %v474
  %v496 = vadd.f32 %v417, %v457
  %v497 = vadd.f32 %v418, %v471
  %v498 = vadd.f32 %v419, %v473
  %v499 = vadd.f32 %v420, %v475
  %v516 = vcombine.low %v484, %v485
  %v517 = vcombine.low %v486, %v487
  %v518 = vcombine.low %v488, %v489
  %v519 = vcombine.low %v490, %v491
  %v521 = vunpack.c.l.s4 1966171168
  %v522 = vunpack.c.0.s8 %v521
  %v523 = vlaneseq
  %v524 = vshrl.u32 %v523, 7
  %v525 = vsub.s32 %v522, %v524
  %v526 = vrot.slane %v516, %v525
  %v528 = vunpack.c.l.s4 1966171168
  %v529 = vunpack.c.0.s8 %v528
  %v530 = vlaneseq
  %v531 = vshrl.u32 %v530, 7
  %v532 = vsub.s32 %v529, %v531
  %v533 = vrot.slane %v517, %v532
  %v535 = vunpack.c.l.s4 1966171168
  %v536 = vunpack.c.0.s8 %v535
  %v537 = vlaneseq
  %v538 = vshrl.u32 %v537, 7
  %v539 = vsub.s32 %v536, %v538
  %v540 = vrot.slane %v518, %v539
  %v542 = vunpack.c.l.s4 1966171168
  %v543 = vunpack.c.0.s8 %v542
  %v544 = vlaneseq
  %v545 = vshrl.u32 %v544, 7
  %v546 = vsub.s32 %v543, %v545
  %v547 = vrot.slane %v519, %v546
  %v548 = vcombine.low %v526, %v533
  %v549 = vcombine.low %v540, %v547
  %v551 = vunpack.c.l.s4 1966171168
  %v552 = vunpack.c.0.s8 %v551
  %v553 = vlaneseq
  %v554 = vshrl.u32 %v553, 7
  %v555 = vsub.s32 %v552, %v554
  %v556 = vrot.slane %v548, %v555
  %v558 = vunpack.c.l.s4 1966171168
  %v559 = vunpack.c.0.s8 %v558
  %v560 = vlaneseq
  %v561 = vshrl.u32 %v560, 7
  %v562 = vsub.s32 %v559, %v561
  %v563 = vrot.slane %v549, %v562
  %v564 = vcombine.low %v556, %v563
  %v565 = vcombine.low %v492, %v493
  %v566 = vcombine.low %v494, %v495
  %v567 = vcombine.low %v496, %v497
  %v568 = vcombine.low %v498, %v499
  %v570 = vunpack.c.l.s4 1966171168
  %v571 = vunpack.c.0.s8 %v570
  %v572 = vlaneseq
  %v573 = vshrl.u32 %v572, 7
  %v574 = vsub.s32 %v571, %v573
  %v575 = vrot.slane %v565, %v574
  %v577 = vunpack.c.l.s4 1966171168
  %v578 = vunpack.c.0.s8 %v577
  %v579 = vlaneseq
  %v580 = vshrl.u32 %v579, 7
  %v581 = vsub.s32 %v578, %v580
  %v582 = vrot.slane %v566, %v581
  %v584 = vunpack.c.l.s4 1966171168
  %v585 = vunpack.c.0.s8 %v584
  %v586 = vlaneseq
  %v587 = vshrl.u32 %v586, 7
  %v588 = vsub.s32 %v585, %v587
  %v589 = vrot.slane %v567, %v588
  %v591 = vunpack.c.l.s4 1966171168
  %v592 = vunpack.c.0.s8 %v591
  %v593 = vlaneseq
  %v594 = vshrl.u32 %v593, 7
  %v595 = vsub.s32 %v592, %v594
  %v596 = vrot.slane %v568, %v595
  %v597 = vcombine.low %v575, %v582
  %v598 = vcombine.low %v589, %v596
  %v600 = vunpack.c.l.s4 1966171168
  %v601 = vunpack.c.0.s8 %v600
  %v602 = vlaneseq
  %v603 = vshrl.u32 %v602, 7
  %v604 = vsub.s32 %v601, %v603
  %v605 = vrot.slane %v597, %v604
  %v607 = vunpack.c.l.s4 1966171168
  %v608 = vunpack.c.0.s8 %v607
  %v609 = vlaneseq
  %v610 = vshrl.u32 %v609, 7
  %v611 = vsub.s32 %v608, %v610
  %v612 = vrot.slane %v598, %v611
  %v613 = vcombine.low %v605, %v612
  %vm616 = vcmask 523264
  %617 = vst.msk [vmem:[%s3] sm:$0xff] %vm616, %v564
  %618 = vst.msk [vmem:[%s3 + $0x8] sm:$0xff] %vm616, %v613
  // Predicated region
  $region14: #{rwkv_forward.40} parent=0 // pred_check
    _
  $region15: #{rwkv_forward.40} parent=0 // pred_check_branch
    %620 = sbr.rel (0) target = $region17
  $region16: #{rwkv_forward.40} parent=0 // pred_region
    _
  $region17: #{rwkv_forward.40} parent=0 // pred_fallthru
    _
  // Predicated region
  $region18: #{rwkv_forward.40} parent=0 // pred_check
    _
  $region19: #{rwkv_forward.40} parent=0 // pred_check_branch
    %622 = sbr.rel (0) target = $region21
  $region20: #{rwkv_forward.40} parent=0 // pred_region
    _
  $region21: #{rwkv_forward.40} parent=0 // pred_fallthru
    _

// kernel: rwkv_forward.39
$region0: #{rwkv_forward.39}
  #allocation0 [shape = 'u32[]', space=smem, size = 0x4, offset = 0x4, fixed_abs, tag = 'smem constant byte address 0x4 - core index']
  #allocation1 [shape = 'u32[144,128]{1,0:T(1,128)}', space=vmem, size = 0x12000, scoped, tag = 'internal scratch']
  #allocation2 [shape = 'f32[64,64]{1,0:T(8,128)}', space=vmem, size = 0x8000, scoped, tag = 'scratch operand']
  %s0 = inlined_call_operand.vmem [shape: bf16[2,1,8,64], index: 0, kind: input, shape index: {}]
  %s1 = inlined_call_operand.vmem [shape: bf16[2,1,8,64], index: 1, kind: input, shape index: {}]
  %s2 = inlined_call_operand.vmem [shape: bf16[2,1,8,64], index: 2, kind: input, shape index: {}]
  %s3 = inlined_call_operand.vmem [shape: bf16[2,1,8,64], index: 3, kind: input, shape index: {}]
  %s4 = inlined_call_operand.vmem [shape: bf16[1,64], index: 4, kind: input, shape index: {}]
  %s5 = inlined_call_operand.vmem [shape: f32[2,1,8,64], index: 5, kind: output, shape index: {}]
  %s6 = sld [smem:[#allocation0]]
  $region57: #{rwkv_forward.39} parent=0
    _
  %s8 = ssub.s32 1, %s6
  %s9 = scalar_select 0, %s8, %s6
  loop: start=0, step=1, limit=4
  $region2: #{rwkv_forward.39} parent=0 // loop_pre_header
    _
  $region3: #{rwkv_forward.39} parent=0 // loop_header
    %s11 = sphi 0, %s15
    %p12 = scmp.ge.s32.totalorder %s11, 4
    %s18 = sphi 0, %s37
    %s19 = sphi 0, %s33
    %s20 = sphi 0, %s29
    %s21 = sphi 0, %s18
    %s22 = sphi 0, %s19
    %s23 = sphi 0, %s20
    %s24 = sphi 0, %s21
    %s25 = sphi 0, %s22
    %s26 = sphi 0, %s23
    %s44 = sphi 0, %s46
    %s47 = sphi 0, %s44
    %s48 = sphi 0, %s47
    %s64 = sphi 0, %s48
    %s74 = sphi 0, %s76
    %s77 = sphi 0, %s74
    %s78 = sphi 0, %s77
    %s94 = sphi 0, %s78
    %s104 = sphi 0, %s106
    %s107 = sphi 0, %s104
    %s108 = sphi 0, %s107
    %s124 = sphi 0, %s108
    %s134 = sphi 0, %s136
    %s137 = sphi 0, %s134
    %s138 = sphi 0, %s137
    %s154 = sphi 0, %s138
    %s160 = sphi 0, %s162
    %s163 = sphi 0, %s160
    %s164 = sphi 0, %s163
    %s180 = sphi 0, %s164
    %s190 = sphi 0, %s192
    %s193 = sphi 0, %s190
    %s194 = sphi 0, %s193
    %s210 = sphi 0, %s194
  $region4: #{rwkv_forward.39} parent=0 // loop_header_branch
    %14 = sbr.rel (%p12) target = $region8
  $region5: #{rwkv_forward.39} parent=0 // loop_body
    %s16 = ssub.s32 %s11, 1
    %s17 = ssub.s32 %s11, 2
    %s27 = sadd.s32 1, %s20
    %p28 = scmp.ge.s32.totalorder %s27, 1
    %s29 = scalar_select %p28, 0, %s27
    %s30 = sadd.s32 1, %s19
    %s31 = scalar_select %p28, %s30, %s19
    %p32 = scmp.ge.s32.totalorder %s31, 1
    %s33 = scalar_select %p32, 0, %s31
    %s34 = sadd.s32 1, %s18
    %s35 = scalar_select %p32, %s34, %s18
    %p36 = scmp.ge.s32.totalorder %s35, 2
    %s37 = scalar_select %p36, 0, %s35
    %s38 = ssub.s32 %s18, %s37
    %s39 = ssub.s32 %s19, %s33
    %s40 = sor.u32 %s38, %s39
    %s41 = ssub.s32 %s20, %s29
    %s42 = sor.u32 %s40, %s41
    %p43 = scmp.eq.s32.totalorder %s42, 0
    %s45 = sadd.s32 %s44, 1
    %s46 = scalar_select %p43, %s44, %s45
    %p49 = pneg %p43
    %p50 = scmp.eq.s32.totalorder %s11, 1
    %p51 = por %p49, %p50
    %p52 = scmp.ne.s32.totalorder %s44, %s47
    %p53 = scmp.eq.s32.totalorder %s11, 0
    %p54 = por %p52, %p53
    %p55 = scmp.ne.s32.totalorder %s44, %s47
    %p56 = scmp.eq.s32.totalorder %s16, 1
    %p57 = por %p55, %p56
    %p58 = scmp.ne.s32.totalorder %s47, %s48
    %p59 = scmp.eq.s32.totalorder %s16, 0
    %p60 = por %p58, %p59
    %p61 = scmp.ne.s32.totalorder %s47, %s48
    %p62 = scmp.eq.s32.totalorder %s17, 1
    %p63 = por %p61, %p62
    %p65 = scmp.ne.s32.totalorder %s48, %s64
    %p66 = scmp.eq.s32.totalorder %s17, 0
    %p67 = por %p65, %p66
    %s68 = ssub.s32 %s18, %s37
    %s69 = ssub.s32 %s19, %s33
    %s70 = sor.u32 %s68, %s69
    %s71 = ssub.s32 %s20, %s29
    %s72 = sor.u32 %s70, %s71
    %p73 = scmp.eq.s32.totalorder %s72, 0
    %s75 = sadd.s32 %s74, 1
    %s76 = scalar_select %p73, %s74, %s75
    %p79 = pneg %p73
    %p80 = scmp.eq.s32.totalorder %s11, 1
    %p81 = por %p79, %p80
    %p82 = scmp.ne.s32.totalorder %s74, %s77
    %p83 = scmp.eq.s32.totalorder %s11, 0
    %p84 = por %p82, %p83
    %p85 = scmp.ne.s32.totalorder %s74, %s77
    %p86 = scmp.eq.s32.totalorder %s16, 1
    %p87 = por %p85, %p86
    %p88 = scmp.ne.s32.totalorder %s77, %s78
    %p89 = scmp.eq.s32.totalorder %s16, 0
    %p90 = por %p88, %p89
    %p91 = scmp.ne.s32.totalorder %s77, %s78
    %p92 = scmp.eq.s32.totalorder %s17, 1
    %p93 = por %p91, %p92
    %p95 = scmp.ne.s32.totalorder %s78, %s94
    %p96 = scmp.eq.s32.totalorder %s17, 0
    %p97 = por %p95, %p96
    %s98 = ssub.s32 %s18, %s37
    %s99 = ssub.s32 %s19, %s33
    %s100 = sor.u32 %s98, %s99
    %s101 = ssub.s32 %s20, %s29
    %s102 = sor.u32 %s100, %s101
    %p103 = scmp.eq.s32.totalorder %s102, 0
    %s105 = sadd.s32 %s104, 1
    %s106 = scalar_select %p103, %s104, %s105
    %p109 = pneg %p103
    %p110 = scmp.eq.s32.totalorder %s11, 1
    %p111 = por %p109, %p110
    %p112 = scmp.ne.s32.totalorder %s104, %s107
    %p113 = scmp.eq.s32.totalorder %s11, 0
    %p114 = por %p112, %p113
    %p115 = scmp.ne.s32.totalorder %s104, %s107
    %p116 = scmp.eq.s32.totalorder %s16, 1
    %p117 = por %p115, %p116
    %p118 = scmp.ne.s32.totalorder %s107, %s108
    %p119 = scmp.eq.s32.totalorder %s16, 0
    %p120 = por %p118, %p119
    %p121 = scmp.ne.s32.totalorder %s107, %s108
    %p122 = scmp.eq.s32.totalorder %s17, 1
    %p123 = por %p121, %p122
    %p125 = scmp.ne.s32.totalorder %s108, %s124
    %p126 = scmp.eq.s32.totalorder %s17, 0
    %p127 = por %p125, %p126
    %s128 = ssub.s32 %s18, %s37
    %s129 = ssub.s32 %s19, %s33
    %s130 = sor.u32 %s128, %s129
    %s131 = ssub.s32 %s20, %s29
    %s132 = sor.u32 %s130, %s131
    %p133 = scmp.eq.s32.totalorder %s132, 0
    %s135 = sadd.s32 %s134, 1
    %s136 = scalar_select %p133, %s134, %s135
    %p139 = pneg %p133
    %p140 = scmp.eq.s32.totalorder %s11, 1
    %p141 = por %p139, %p140
    %p142 = scmp.ne.s32.totalorder %s134, %s137
    %p143 = scmp.eq.s32.totalorder %s11, 0
    %p144 = por %p142, %p143
    %p145 = scmp.ne.s32.totalorder %s134, %s137
    %p146 = scmp.eq.s32.totalorder %s16, 1
    %p147 = por %p145, %p146
    %p148 = scmp.ne.s32.totalorder %s137, %s138
    %p149 = scmp.eq.s32.totalorder %s16, 0
    %p150 = por %p148, %p149
    %p151 = scmp.ne.s32.totalorder %s137, %s138
    %p152 = scmp.eq.s32.totalorder %s17, 1
    %p153 = por %p151, %p152
    %p155 = scmp.ne.s32.totalorder %s138, %s154
    %p156 = scmp.eq.s32.totalorder %s17, 0
    %p157 = por %p155, %p156
    %s158 = ssub.s32 %s19, %s33
    %p159 = scmp.eq.s32.totalorder %s158, 0
    %s161 = sadd.s32 %s160, 1
    %s162 = scalar_select %p159, %s160, %s161
    %p165 = pneg %p159
    %p166 = scmp.eq.s32.totalorder %s11, 1
    %p167 = por %p165, %p166
    %p168 = scmp.ne.s32.totalorder %s160, %s163
    %p169 = scmp.eq.s32.totalorder %s11, 0
    %p170 = por %p168, %p169
    %p171 = scmp.ne.s32.totalorder %s160, %s163
    %p172 = scmp.eq.s32.totalorder %s16, 1
    %p173 = por %p171, %p172
    %p174 = scmp.ne.s32.totalorder %s163, %s164
    %p175 = scmp.eq.s32.totalorder %s16, 0
    %p176 = por %p174, %p175
    %p177 = scmp.ne.s32.totalorder %s163, %s164
    %p178 = scmp.eq.s32.totalorder %s17, 1
    %p179 = por %p177, %p178
    %p181 = scmp.ne.s32.totalorder %s164, %s180
    %p182 = scmp.eq.s32.totalorder %s17, 0
    %p183 = por %p181, %p182
    %s184 = ssub.s32 %s18, %s37
    %s185 = ssub.s32 %s19, %s33
    %s186 = sor.u32 %s184, %s185
    %s187 = ssub.s32 %s20, %s29
    %s188 = sor.u32 %s186, %s187
    %p189 = scmp.eq.s32.totalorder %s188, 0
    %s191 = sadd.s32 %s190, 1
    %s192 = scalar_select %p189, %s190, %s191
    %p195 = pneg %p189
    %p196 = scmp.eq.s32.totalorder %s11, 1
    %p197 = por %p195, %p196
    %p198 = scmp.ne.s32.totalorder %s190, %s193
    %p199 = scmp.eq.s32.totalorder %s11, 0
    %p200 = por %p198, %p199
    %p201 = scmp.ne.s32.totalorder %s190, %s193
    %p202 = scmp.eq.s32.totalorder %s16, 1
    %p203 = por %p201, %p202
    %p204 = scmp.ne.s32.totalorder %s193, %s194
    %p205 = scmp.eq.s32.totalorder %s16, 0
    %p206 = por %p204, %p205
    %p207 = scmp.ne.s32.totalorder %s193, %s194
    %p208 = scmp.eq.s32.totalorder %s17, 1
    %p209 = por %p207, %p208
    %p211 = scmp.ne.s32.totalorder %s194, %s210
    %p212 = scmp.eq.s32.totalorder %s17, 0
    %p213 = por %p211, %p212
    %p214 = scmp.le.s32.totalorder 1, %s11
    %p215 = scmp.lt.s32.totalorder %s11, 3
    %p216 = pnand %p214, %p215
    %p217 = pneg %p216
    // Predicated region
    $region9: #{rwkv_forward.39} parent=5 // pred_check
      _
    $region10: #{rwkv_forward.39} parent=5 // pred_check_branch
      %219 = sbr.rel (%p216) target = $region12
    $region11: #{rwkv_forward.39} parent=5 // pred_region
      %s220 = ssub.s32 %s11, 1
      // Predicated region
      $region13: #{rwkv_forward.39} parent=11 // pred_check
        %p221 = pneg %p176
      $region14: #{rwkv_forward.39} parent=11 // pred_check_branch
        %223 = sbr.rel (%p221) target = $region16
      $region15: #{rwkv_forward.39} parent=11 // pred_region
        %p224 = scmp.lt.s32.totalorder %s22, 0
        %s225 = scalar_select %p224, %s22, 0
        %s226 = scalar_lea.vmem %s4, %s225
      $region16: #{rwkv_forward.39} parent=11 // pred_fallthru
        _
    $region12: #{rwkv_forward.39} parent=5 // pred_fallthru
      _
    %p227 = scmp.lt.s32.totalorder %s11, 2
    // Predicated region
    $region17: #{rwkv_forward.39} parent=5 // pred_check
      %p228 = pneg %p227
    $region18: #{rwkv_forward.39} parent=5 // pred_check_branch
      %230 = sbr.rel (%p228) target = $region20
    $region19: #{rwkv_forward.39} parent=5 // pred_region
      // Predicated region
      $region21: #{rwkv_forward.39} parent=19 // pred_check
        %p231 = pneg %p54
      $region22: #{rwkv_forward.39} parent=19 // pred_check_branch
        %233 = sbr.rel (%p231) target = $region24
      $region23: #{rwkv_forward.39} parent=19 // pred_region
        %p234 = scmp.lt.s32.totalorder %s18, 1
        %s235 = scalar_select %p234, %s18, 1
        %p236 = scmp.lt.s32.totalorder %s19, 0
        %s237 = scalar_select %p236, %s19, 0
        %p238 = scmp.lt.s32.totalorder %s20, 0
        %s239 = scalar_select %p238, %s20, 0
        %s240 = sadd.s32 %s239, %s237
        %s241 = sadd.s32 %s240, %s235
        %s242 = smul.addr %s241, 4
        %s243 = scalar_lea.vmem %s0, %s242
      $region24: #{rwkv_forward.39} parent=19 // pred_fallthru
        _
      // Predicated region
      $region25: #{rwkv_forward.39} parent=19 // pred_check
        %p244 = pneg %p84
      $region26: #{rwkv_forward.39} parent=19 // pred_check_branch
        %246 = sbr.rel (%p244) target = $region28
      $region27: #{rwkv_forward.39} parent=19 // pred_region
        %p247 = scmp.lt.s32.totalorder %s18, 1
        %s248 = scalar_select %p247, %s18, 1
        %p249 = scmp.lt.s32.totalorder %s19, 0
        %s250 = scalar_select %p249, %s19, 0
        %p251 = scmp.lt.s32.totalorder %s20, 0
        %s252 = scalar_select %p251, %s20, 0
        %s253 = sadd.s32 %s252, %s250
        %s254 = sadd.s32 %s253, %s248
        %s255 = smul.addr %s254, 4
        %s256 = scalar_lea.vmem %s1, %s255
      $region28: #{rwkv_forward.39} parent=19 // pred_fallthru
        _
      // Predicated region
      $region29: #{rwkv_forward.39} parent=19 // pred_check
        %p257 = pneg %p114
      $region30: #{rwkv_forward.39} parent=19 // pred_check_branch
        %259 = sbr.rel (%p257) target = $region32
      $region31: #{rwkv_forward.39} parent=19 // pred_region
        %p260 = scmp.lt.s32.totalorder %s18, 1
        %s261 = scalar_select %p260, %s18, 1
        %p262 = scmp.lt.s32.totalorder %s19, 0
        %s263 = scalar_select %p262, %s19, 0
        %p264 = scmp.lt.s32.totalorder %s20, 0
        %s265 = scalar_select %p264, %s20, 0
        %s266 = sadd.s32 %s265, %s263
        %s267 = sadd.s32 %s266, %s261
        %s268 = smul.addr %s267, 4
        %s269 = scalar_lea.vmem %s2, %s268
      $region32: #{rwkv_forward.39} parent=19 // pred_fallthru
        _
      // Predicated region
      $region33: #{rwkv_forward.39} parent=19 // pred_check
        %p270 = pneg %p144
      $region34: #{rwkv_forward.39} parent=19 // pred_check_branch
        %272 = sbr.rel (%p270) target = $region36
      $region35: #{rwkv_forward.39} parent=19 // pred_region
        %p273 = scmp.lt.s32.totalorder %s18, 1
        %s274 = scalar_select %p273, %s18, 1
        %p275 = scmp.lt.s32.totalorder %s19, 0
        %s276 = scalar_select %p275, %s19, 0
        %p277 = scmp.lt.s32.totalorder %s20, 0
        %s278 = scalar_select %p277, %s20, 0
        %s279 = sadd.s32 %s278, %s276
        %s280 = sadd.s32 %s279, %s274
        %s281 = smul.addr %s280, 4
        %s282 = scalar_lea.vmem %s3, %s281
      $region36: #{rwkv_forward.39} parent=19 // pred_fallthru
        _
    $region20: #{rwkv_forward.39} parent=5 // pred_fallthru
      _
    %p283 = scmp.le.s32.totalorder 1, %s11
    %p284 = scmp.lt.s32.totalorder %s11, 3
    %p285 = pnand %p283, %p284
    %p286 = pneg %p285
    // Predicated region
    $region37: #{rwkv_forward.39} parent=5 // pred_check
      _
    $region38: #{rwkv_forward.39} parent=5 // pred_check_branch
      %288 = sbr.rel (%p285) target = $region40
    $region39: #{rwkv_forward.39} parent=5 // pred_region
      %s289 = ssub.s32 %s11, 1
      %p290 = scmp.lt.s32.totalorder %s21, 1
      %s291 = scalar_select %p290, %s21, 1
      %p292 = scmp.lt.s32.totalorder %s22, 0
      %s293 = scalar_select %p292, %s22, 0
      %p294 = scmp.lt.s32.totalorder %s23, 0
      %s295 = scalar_select %p294, %s23, 0
      %s296 = sadd.s32 %s295, %s293
      %s297 = sadd.s32 %s296, %s291
      %s298 = smul.addr %s297, 4
      %s299 = scalar_lea.vmem %s0, %s298
      %p300 = pneg %p60
      %p301 = pneg %p57
      %p302 = scmp.lt.s32.totalorder %s21, 1
      %s303 = scalar_select %p302, %s21, 1
      %p304 = scmp.lt.s32.totalorder %s22, 0
      %s305 = scalar_select %p304, %s22, 0
      %p306 = scmp.lt.s32.totalorder %s23, 0
      %s307 = scalar_select %p306, %s23, 0
      %s308 = sadd.s32 %s307, %s305
      %s309 = sadd.s32 %s308, %s303
      %s310 = smul.addr %s309, 4
      %s311 = scalar_lea.vmem %s1, %s310
      %p312 = pneg %p90
      %p313 = pneg %p87
      %p314 = scmp.lt.s32.totalorder %s21, 1
      %s315 = scalar_select %p314, %s21, 1
      %p316 = scmp.lt.s32.totalorder %s22, 0
      %s317 = scalar_select %p316, %s22, 0
      %p318 = scmp.lt.s32.totalorder %s23, 0
      %s319 = scalar_select %p318, %s23, 0
      %s320 = sadd.s32 %s319, %s317
      %s321 = sadd.s32 %s320, %s315
      %s322 = smul.addr %s321, 4
      %s323 = scalar_lea.vmem %s2, %s322
      %p324 = pneg %p120
      %p325 = pneg %p117
      %p326 = scmp.lt.s32.totalorder %s21, 1
      %s327 = scalar_select %p326, %s21, 1
      %p328 = scmp.lt.s32.totalorder %s22, 0
      %s329 = scalar_select %p328, %s22, 0
      %p330 = scmp.lt.s32.totalorder %s23, 0
      %s331 = scalar_select %p330, %s23, 0
      %s332 = sadd.s32 %s331, %s329
      %s333 = sadd.s32 %s332, %s327
      %s334 = smul.addr %s333, 4
      %s335 = scalar_lea.vmem %s3, %s334
      %p336 = pneg %p150
      %p337 = pneg %p147
      %p338 = scmp.lt.s32.totalorder %s22, 0
      %s339 = scalar_select %p338, %s22, 0
      %s340 = scalar_lea.vmem %s4, %s339
      %p341 = pneg %p176
      %p342 = pneg %p173
      %p343 = pneg %p206
      %p344 = pneg %p203
      %p345 = scmp.lt.s32.totalorder %s21, 1
      %s346 = scalar_select %p345, %s21, 1
      %p347 = scmp.lt.s32.totalorder %s22, 0
      %s348 = scalar_select %p347, %s22, 0
      %p349 = scmp.lt.s32.totalorder %s23, 0
      %s350 = scalar_select %p349, %s23, 0
      %s351 = sadd.s32 %s350, %s348
      %s352 = sadd.s32 %s351, %s346
      %s353 = smul.addr %s352, 8
      %s354 = scalar_lea.vmem %s5, %s353
      %p355 = scmp.lt.s32.totalorder %s21, 1
      %s356 = scalar_select %p355, %s21, 1
      %p357 = scmp.lt.s32.totalorder %s22, 0
      %s358 = scalar_select %p357, %s22, 0
      %p359 = scmp.lt.s32.totalorder %s23, 0
      %s360 = scalar_select %p359, %s23, 0
      %s361 = sadd.s32 %s360, %s358
      %s362 = sadd.s32 %s361, %s356
      %s363 = smul.addr %s362, 4
      %s364 = scalar_lea.vmem %s0, %s363
      %p365 = scmp.lt.s32.totalorder %s21, 1
      %s366 = scalar_select %p365, %s21, 1
      %p367 = scmp.lt.s32.totalorder %s22, 0
      %s368 = scalar_select %p367, %s22, 0
      %p369 = scmp.lt.s32.totalorder %s23, 0
      %s370 = scalar_select %p369, %s23, 0
      %s371 = sadd.s32 %s370, %s368
      %s372 = sadd.s32 %s371, %s366
      %s373 = smul.addr %s372, 4
      %s374 = scalar_lea.vmem %s1, %s373
      %p375 = scmp.lt.s32.totalorder %s21, 1
      %s376 = scalar_select %p375, %s21, 1
      %p377 = scmp.lt.s32.totalorder %s22, 0
      %s378 = scalar_select %p377, %s22, 0
      %p379 = scmp.lt.s32.totalorder %s23, 0
      %s380 = scalar_select %p379, %s23, 0
      %s381 = sadd.s32 %s380, %s378
      %s382 = sadd.s32 %s381, %s376
      %s383 = smul.addr %s382, 4
      %s384 = scalar_lea.vmem %s2, %s383
      %p385 = scmp.lt.s32.totalorder %s21, 1
      %s386 = scalar_select %p385, %s21, 1
      %p387 = scmp.lt.s32.totalorder %s22, 0
      %s388 = scalar_select %p387, %s22, 0
      %p389 = scmp.lt.s32.totalorder %s23, 0
      %s390 = scalar_select %p389, %s23, 0
      %s391 = sadd.s32 %s390, %s388
      %s392 = sadd.s32 %s391, %s386
      %s393 = smul.addr %s392, 4
      %s394 = scalar_lea.vmem %s3, %s393
      %p395 = scmp.lt.s32.totalorder %s22, 0
      %s396 = scalar_select %p395, %s22, 0
      %s397 = scalar_lea.vmem %s4, %s396
      %p398 = scmp.lt.s32.totalorder %s21, 1
      %s399 = scalar_select %p398, %s21, 1
      %p400 = scmp.lt.s32.totalorder %s22, 0
      %s401 = scalar_select %p400, %s22, 0
      %p402 = scmp.lt.s32.totalorder %s23, 0
      %s403 = scalar_select %p402, %s23, 0
      %s404 = sadd.s32 %s403, %s401
      %s405 = sadd.s32 %s404, %s399
      %s406 = smul.addr %s405, 8
      %s407 = scalar_lea.vmem %s5, %s406
      %p408 = scmp.eq.s32.totalorder %s23, 0
      // Predicated region
      $region41: #{rwkv_forward.39} parent=39 // pred_check
        %p409 = pneg %p408
      $region42: #{rwkv_forward.39} parent=39 // pred_check_branch
        %411 = sbr.rel (%p409) target = $region44
      $region43: #{rwkv_forward.39} parent=39 // pred_region
        %vm412 = vcmask 523264
        %413 = vst.msk [vmem:[#allocation2] sm:$0xff] %vm412, 0.0
        %414 = vst.msk [vmem:[#allocation2 + $0x8] sm:$0xff] %vm412, 0.0
        %415 = vst.msk [vmem:[#allocation2 + $0x10] sm:$0xff] %vm412, 0.0
        %416 = vst.msk [vmem:[#allocation2 + $0x18] sm:$0xff] %vm412, 0.0
        %417 = vst.msk [vmem:[#allocation2 + $0x20] sm:$0xff] %vm412, 0.0
        %418 = vst.msk [vmem:[#allocation2 + $0x28] sm:$0xff] %vm412, 0.0
        %419 = vst.msk [vmem:[#allocation2 + $0x30] sm:$0xff] %vm412, 0.0
        %420 = vst.msk [vmem:[#allocation2 + $0x38] sm:$0xff] %vm412, 0.0
      $region44: #{rwkv_forward.39} parent=39 // pred_fallthru
        _
      %v421 = vld [vmem:[%s364] sm:$0xf]
      %v422 = vunpack.c.l.bf16 %v421
      %v423 = vld [vmem:[%s374] sm:$0xf]
      %v424 = vunpack.c.l.bf16 %v423
      %v425 = vld [vmem:[%s384] sm:$0xf]
      %v426 = vunpack.c.l.bf16 %v425
      %v427 = vld [vmem:[%s394] sm:$0xf]
      %v428 = vunpack.c.l.bf16 %v427
      %v429 = vld [vmem:[%s397] sm:$0x1]
      %v430 = vunpack.c.l.bf16 %v429
      %v431 = vmul.f32 %v428, 1.442695
      %v432 = vpow.pop %v431
      %v433 = vsub.f32 0.0, %v432
      %v434 = vlaneseq
      %v435 = vshrl.u32 %v434, 7
      %v436 = vlaneseq
      %v437 = vand.u32 %v436, 127
      %vm438 = vcmp.ge.s32.totalorder %v435, %v437
      %v439 = vsel %vm438, 1, 0
      %v440 = vcvt.s32.f32 %v439
      %vm441 = vcmask 64512
      %v443 = vsel %vm441, %v440, 0
      %445 = vmatprep.subr.mxu0 0.0
      %446 = vmatpush1.msra.mxu0 %v433
      %447 = vmatprep.subr.mxu0 0.0
      %448 = vmatpush1.msra.mxu0 0.0
      %449 = vmatprep.subr.mxu0 0.0
      %450 = vmatpush1.msra.mxu0 0.0
      %451 = vmatprep.subr.mxu0 0.0
      %452 = vmatpush1.msra.mxu0 0.0
      %453 = vmatprep.subr.mxu0 0.0
      %454 = vmatpush1.msra.mxu0 0.0
      %455 = vmatprep.subr.mxu0 0.0
      %456 = vmatpush1.msra.mxu0 0.0
      %457 = vmatprep.subr.mxu0 0.0
      %458 = vmatpush1.msra.mxu0 0.0
      %459 = vmatprep.subr.mxu0 0.0
      %460 = vmatpush1.msra.mxu0 0.0
      %461 = vmatprep.subr.mxu0 0.0
      %462 = vmatpush1.msra.mxu0 0.0
      %463 = vmatprep.subr.mxu0 0.0
      %464 = vmatpush1.msra.mxu0 0.0
      %465 = vmatprep.subr.mxu0 0.0
      %466 = vmatpush1.msra.mxu0 0.0
      %467 = vmatprep.subr.mxu0 0.0
      %468 = vmatpush1.msra.mxu0 0.0
      %469 = vmatprep.subr.mxu0 0.0
      %470 = vmatpush1.msra.mxu0 0.0
      %471 = vmatprep.subr.mxu0 0.0
      %472 = vmatpush1.msra.mxu0 0.0
      %473 = vmatprep.subr.mxu0 0.0
      %474 = vmatpush1.msra.mxu0 0.0
      %475 = vmatprep.subr.mxu0 0.0
      %476 = vmatpush1.msra.mxu0 0.0
      %477 = vmatprep.subr.mxu0 0.0
      %478 = vmatpush1.msra.mxu0 0.0
      %479 = vmatprep.subr.mxu0 0.0
      %480 = vmatpush1.msra.mxu0 0.0
      %481 = vmatprep.subr.mxu0 0.0
      %482 = vmatpush1.msra.mxu0 0.0
      %483 = vmatprep.subr.mxu0 0.0
      %484 = vmatpush1.msra.mxu0 0.0
      %485 = vmatprep.subr.mxu0 0.0
      %486 = vmatpush1.msra.mxu0 0.0
      %487 = vmatprep.subr.mxu0 0.0
      %488 = vmatpush1.msra.mxu0 0.0
      %489 = vmatprep.subr.mxu0 0.0
      %490 = vmatpush1.msra.mxu0 0.0
      %491 = vmatprep.subr.mxu0 0.0
      %492 = vmatpush1.msra.mxu0 0.0
      %493 = vmatprep.subr.mxu0 0.0
      %494 = vmatpush1.msra.mxu0 0.0
      %495 = vmatprep.subr.mxu0 0.0
      %496 = vmatpush1.msra.mxu0 0.0
      %497 = vmatprep.subr.mxu0 0.0
      %498 = vmatpush1.msra.mxu0 0.0
      %499 = vmatprep.subr.mxu0 0.0
      %500 = vmatpush1.msra.mxu0 0.0
      %501 = vmatprep.subr.mxu0 0.0
      %502 = vmatpush1.msra.mxu0 0.0
      %503 = vmatprep.subr.mxu0 0.0
      %504 = vmatpush1.msra.mxu0 0.0
      %505 = vmatprep.subr.mxu0 0.0
      %506 = vmatpush1.msra.mxu0 0.0
      %507 = vmatprep.subr.mxu0 0.0
      %508 = vmatpush1.msra.mxu0 0.0
      %509 = vmatprep.mubr.f32.mxu0 0.0
      %510 = vmatmul.mubr.f32.gmra.mrb[0].mxu0 %v443
      %v511 = vpop.f32.mrb[0].mxu0
      %v512 = vadd.f32 0.0, %v511
      %v513 = vpop.f32.mrb[0].mxu0
      %514 = vdwg.mxu0
      %v515 = vsub.f32 %v512, %v433
      %v516 = vmul.f32 %v515, 1.442695
      %v517 = vpow.pop %v516
      %v518 = vmul.f32 %v422, %v517
      %v519 = vld [vmem:[#allocation2] sm:$0xff]
      %v520 = vld [vmem:[#allocation2 + $0x8] sm:$0xff]
      %v521 = vld [vmem:[#allocation2 + $0x10] sm:$0xff]
      %v522 = vld [vmem:[#allocation2 + $0x18] sm:$0xff]
      %v523 = vld [vmem:[#allocation2 + $0x20] sm:$0xff]
      %v524 = vld [vmem:[#allocation2 + $0x28] sm:$0xff]
      %v525 = vld [vmem:[#allocation2 + $0x30] sm:$0xff]
      %v526 = vld [vmem:[#allocation2 + $0x38] sm:$0xff]
      %v527 = vlaneseq
      %v528 = vshrl.u32 %v527, 7
      %v529 = vsub.s32 4, %v528
      %v530 = vrot.slane %v515, %v529
      %v531 = vsub.f32 %v515, %v530
      %v532 = vmin.f32 %v531, 80.0
      %v533 = vmul.f32 %v532, 1.442695
      %v534 = vpow.pop %v533
      %v535 = vmul.f32 %v422, %v534
      %v536 = vsub.f32 %v530, %v512
      %v537 = vmin.f32 %v536, 80.0
      %v538 = vmul.f32 %v537, 1.442695
      %v539 = vpow.pop %v538
      %v540 = vmul.f32 %v424, %v539
      %vm541 = vcmask 523264
      %v543 = vsel %vm541, %v535, 0
      %v546 = vsel %vm541, %v540, 0
      %548 = vmatprep.subr.mxu0 0.0
      %549 = vmatpush1.xpose.msra.mxu0 %v546
      %550 = vmatprep.subr.mxu0 0.0
      %551 = vmatpush1.xpose.msra.mxu0 0.0
      %552 = vmatprep.subr.mxu0 0.0
      %553 = vmatpush1.xpose.msra.mxu0 0.0
      %554 = vmatprep.subr.mxu0 0.0
      %555 = vmatpush1.xpose.msra.mxu0 0.0
      %556 = vmatprep.subr.mxu0 0.0
      %557 = vmatpush1.xpose.msra.mxu0 0.0
      %558 = vmatprep.subr.mxu0 0.0
      %559 = vmatpush1.xpose.msra.mxu0 0.0
      %560 = vmatprep.subr.mxu0 0.0
      %561 = vmatpush1.xpose.msra.mxu0 0.0
      %562 = vmatprep.subr.mxu0 0.0
      %563 = vmatpush1.xpose.msra.mxu0 0.0
      %564 = vmatprep.subr.mxu0 0.0
      %565 = vmatpush1.xpose.msra.mxu0 0.0
      %566 = vmatprep.subr.mxu0 0.0
      %567 = vmatpush1.xpose.msra.mxu0 0.0
      %568 = vmatprep.subr.mxu0 0.0
      %569 = vmatpush1.xpose.msra.mxu0 0.0
      %570 = vmatprep.subr.mxu0 0.0
      %571 = vmatpush1.xpose.msra.mxu0 0.0
      %572 = vmatprep.subr.mxu0 0.0
      %573 = vmatpush1.xpose.msra.mxu0 0.0
      %574 = vmatprep.subr.mxu0 0.0
      %575 = vmatpush1.xpose.msra.mxu0 0.0
      %576 = vmatprep.subr.mxu0 0.0
      %577 = vmatpush1.xpose.msra.mxu0 0.0
      %578 = vmatprep.subr.mxu0 0.0
      %579 = vmatpush1.xpose.msra.mxu0 0.0
      %580 = vmatprep.subr.mxu0 0.0
      %581 = vmatpush1.xpose.msra.mxu0 0.0
      %582 = vmatprep.subr.mxu0 0.0
      %583 = vmatpush1.xpose.msra.mxu0 0.0
      %584 = vmatprep.subr.mxu0 0.0
      %585 = vmatpush1.xpose.msra.mxu0 0.0
      %586 = vmatprep.subr.mxu0 0.0
      %587 = vmatpush1.xpose.msra.mxu0 0.0
      %588 = vmatprep.subr.mxu0 0.0
      %589 = vmatpush1.xpose.msra.mxu0 0.0
      %590 = vmatprep.subr.mxu0 0.0
      %591 = vmatpush1.xpose.msra.mxu0 0.0
      %592 = vmatprep.subr.mxu0 0.0
      %593 = vmatpush1.xpose.msra.mxu0 0.0
      %594 = vmatprep.subr.mxu0 0.0
      %595 = vmatpush1.xpose.msra.mxu0 0.0
      %596 = vmatprep.subr.mxu0 0.0
      %597 = vmatpush1.xpose.msra.mxu0 0.0
      %598 = vmatprep.subr.mxu0 0.0
      %599 = vmatpush1.xpose.msra.mxu0 0.0
      %600 = vmatprep.subr.mxu0 0.0
      %601 = vmatpush1.xpose.msra.mxu0 0.0
      %602 = vmatprep.subr.mxu0 0.0
      %603 = vmatpush1.xpose.msra.mxu0 0.0
      %604 = vmatprep.subr.mxu0 0.0
      %605 = vmatpush1.xpose.msra.mxu0 0.0
      %606 = vmatprep.subr.mxu0 0.0
      %607 = vmatpush1.xpose.msra.mxu0 0.0
      %608 = vmatprep.subr.mxu0 0.0
      %609 = vmatpush1.xpose.msra.mxu0 0.0
      %610 = vmatprep.subr.mxu0 0.0
      %611 = vmatpush1.xpose.msra.mxu0 0.0
      %612 = vmatprep.mubr.f32.mxu0 0.0
      %613 = vmatmul.mubr.f32.gmra.mrb[0].mxu0 %v543
      %v614 = vpop.f32.mrb[0].mxu0
      %v615 = vadd.f32 0.0, %v614
      %v616 = vpop.f32.mrb[0].mxu0
      %617 = vdwg.mxu0
      %v618 = vlaneseq
      %v619 = vshrl.u32 %v618, 7
      %v620 = vsub.s32 0, %v619
      %v621 = vrot.slane %v430, %v620
      %v622 = vmul.f32 %v422, %v621
      %v623 = vmul.f32 %v622, %v424
      %v624 = vsel %vm541, %v623, 0.0
      %625 = vadd.xlane.f32.xlu0 %v624
      %v626 = vpop.xlane.xlu0 %625
      %vm627 = vcmp.gt.s32.totalorder %v435, %v437
      %v628 = vsel %vm627, %v615, 0.0
      %vm629 = vcmp.eq.s32.totalorder %v435, %v437
      %v630 = vsel %vm629, %v626, %v628
      %v632 = vsel %vm441, %v630, 0
      %634 = vmatprep.subr.mxu0 0.0
      %635 = vmatpush1.msra.mxu0 %v426
      %636 = vmatprep.subr.mxu0 0.0
      %637 = vmatpush1.msra.mxu0 0.0
      %638 = vmatprep.subr.mxu0 0.0
      %639 = vmatpush1.msra.mxu0 0.0
      %640 = vmatprep.subr.mxu0 0.0
      %641 = vmatpush1.msra.mxu0 0.0
      %642 = vmatprep.subr.mxu0 0.0
      %643 = vmatpush1.msra.mxu0 0.0
      %644 = vmatprep.subr.mxu0 0.0
      %645 = vmatpush1.msra.mxu0 0.0
      %646 = vmatprep.subr.mxu0 0.0
      %647 = vmatpush1.msra.mxu0 0.0
      %648 = vmatprep.subr.mxu0 0.0
      %649 = vmatpush1.msra.mxu0 0.0
      %650 = vmatprep.subr.mxu0 0.0
      %651 = vmatpush1.msra.mxu0 0.0
      %652 = vmatprep.subr.mxu0 0.0
      %653 = vmatpush1.msra.mxu0 0.0
      %654 = vmatprep.subr.mxu0 0.0
      %655 = vmatpush1.msra.mxu0 0.0
      %656 = vmatprep.subr.mxu0 0.0
      %657 = vmatpush1.msra.mxu0 0.0
      %658 = vmatprep.subr.mxu0 0.0
      %659 = vmatpush1.msra.mxu0 0.0
      %660 = vmatprep.subr.mxu0 0.0
      %661 = vmatpush1.msra.mxu0 0.0
      %662 = vmatprep.subr.mxu0 0.0
      %663 = vmatpush1.msra.mxu0 0.0
      %664 = vmatprep.subr.mxu0 0.0
      %665 = vmatpush1.msra.mxu0 0.0
      %666 = vmatprep.subr.mxu0 0.0
      %667 = vmatpush1.msra.mxu0 0.0
      %668 = vmatprep.subr.mxu0 0.0
      %669 = vmatpush1.msra.mxu0 0.0
      %670 = vmatprep.subr.mxu0 0.0
      %671 = vmatpush1.msra.mxu0 0.0
      %672 = vmatprep.subr.mxu0 0.0
      %673 = vmatpush1.msra.mxu0 0.0
      %674 = vmatprep.subr.mxu0 0.0
      %675 = vmatpush1.msra.mxu0 0.0
      %676 = vmatprep.subr.mxu0 0.0
      %677 = vmatpush1.msra.mxu0 0.0
      %678 = vmatprep.subr.mxu0 0.0
      %679 = vmatpush1.msra.mxu0 0.0
      %680 = vmatprep.subr.mxu0 0.0
      %681 = vmatpush1.msra.mxu0 0.0
      %682 = vmatprep.subr.mxu0 0.0
      %683 = vmatpush1.msra.mxu0 0.0
      %684 = vmatprep.subr.mxu0 0.0
      %685 = vmatpush1.msra.mxu0 0.0
      %686 = vmatprep.subr.mxu0 0.0
      %687 = vmatpush1.msra.mxu0 0.0
      %688 = vmatprep.subr.mxu0 0.0
      %689 = vmatpush1.msra.mxu0 0.0
      %690 = vmatprep.subr.mxu0 0.0
      %691 = vmatpush1.msra.mxu0 0.0
      %692 = vmatprep.subr.mxu0 0.0
      %693 = vmatpush1.msra.mxu0 0.0
      %694 = vmatprep.subr.mxu0 0.0
      %695 = vmatpush1.msra.mxu0 0.0
      %696 = vmatprep.subr.mxu0 0.0
      %697 = vmatpush1.msra.mxu0 0.0
      %698 = vmatprep.mubr.f32.mxu0 0.0
      %699 = vmatmul.mubr.f32.gmra.mrb[0].mxu0 %v632
      %v700 = vpop.f32.mrb[0].mxu0
      %v701 = vadd.f32 0.0, %v700
      %v702 = vpop.f32.mrb[0].mxu0
      %703 = vdwg.mxu0
      %v705 = vsel %vm541, %v518, 0
      %v708 = vsel %vm541, %v519, 0
      %v711 = vsel %vm541, %v520, 0
      %v714 = vsel %vm541, %v521, 0
      %v717 = vsel %vm541, %v522, 0
      %v720 = vsel %vm541, %v523, 0
      %v723 = vsel %vm541, %v524, 0
      %v726 = vsel %vm541, %v525, 0
      %v729 = vsel %vm541, %v526, 0
      %731 = vmatprep.subr.mxu0 0.0
      %732 = vmatpush1.xpose.msra.mxu0 %v708
      %733 = vmatprep.subr.mxu0 0.0
      %734 = vmatpush1.xpose.msra.mxu0 %v711
      %735 = vmatprep.subr.mxu0 0.0
      %736 = vmatpush1.xpose.msra.mxu0 %v714
      %737 = vmatprep.subr.mxu0 0.0
      %738 = vmatpush1.xpose.msra.mxu0 %v717
      %739 = vmatprep.subr.mxu0 0.0
      %740 = vmatpush1.xpose.msra.mxu0 %v720
      %741 = vmatprep.subr.mxu0 0.0
      %742 = vmatpush1.xpose.msra.mxu0 %v723
      %743 = vmatprep.subr.mxu0 0.0
      %744 = vmatpush1.xpose.msra.mxu0 %v726
      %745 = vmatprep.subr.mxu0 0.0
      %746 = vmatpush1.xpose.msra.mxu0 %v729
      %747 = vmatprep.subr.mxu0 0.0
      %748 = vmatpush1.xpose.msra.mxu0 0.0
      %749 = vmatprep.subr.mxu0 0.0
      %750 = vmatpush1.xpose.msra.mxu0 0.0
      %751 = vmatprep.subr.mxu0 0.0
      %752 = vmatpush1.xpose.msra.mxu0 0.0
      %753 = vmatprep.subr.mxu0 0.0
      %754 = vmatpush1.xpose.msra.mxu0 0.0
      %755 = vmatprep.subr.mxu0 0.0
      %756 = vmatpush1.xpose.msra.mxu0 0.0
      %757 = vmatprep.subr.mxu0 0.0
      %758 = vmatpush1.xpose.msra.mxu0 0.0
      %759 = vmatprep.subr.mxu0 0.0
      %760 = vmatpush1.xpose.msra.mxu0 0.0
      %761 = vmatprep.subr.mxu0 0.0
      %762 = vmatpush1.xpose.msra.mxu0 0.0
      %763 = vmatprep.subr.mxu0 0.0
      %764 = vmatpush1.xpose.msra.mxu0 0.0
      %765 = vmatprep.subr.mxu0 0.0
      %766 = vmatpush1.xpose.msra.mxu0 0.0
      %767 = vmatprep.subr.mxu0 0.0
      %768 = vmatpush1.xpose.msra.mxu0 0.0
      %769 = vmatprep.subr.mxu0 0.0
      %770 = vmatpush1.xpose.msra.mxu0 0.0
      %771 = vmatprep.subr.mxu0 0.0
      %772 = vmatpush1.xpose.msra.mxu0 0.0
      %773 = vmatprep.subr.mxu0 0.0
      %774 = vmatpush1.xpose.msra.mxu0 0.0
      %775 = vmatprep.subr.mxu0 0.0
      %776 = vmatpush1.xpose.msra.mxu0 0.0
      %777 = vmatprep.subr.mxu0 0.0
      %778 = vmatpush1.xpose.msra.mxu0 0.0
      %779 = vmatprep.subr.mxu0 0.0
      %780 = vmatpush1.xpose.msra.mxu0 0.0
      %781 = vmatprep.subr.mxu0 0.0
      %782 = vmatpush1.xpose.msra.mxu0 0.0
      %783 = vmatprep.subr.mxu0 0.0
      %784 = vmatpush1.xpose.msra.mxu0 0.0
      %785 = vmatprep.subr.mxu0 0.0
      %786 = vmatpush1.xpose.msra.mxu0 0.0
      %787 = vmatprep.subr.mxu0 0.0
      %788 = vmatpush1.xpose.msra.mxu0 0.0
      %789 = vmatprep.subr.mxu0 0.0
      %790 = vmatpush1.xpose.msra.mxu0 0.0
      %791 = vmatprep.subr.mxu0 0.0
      %792 = vmatpush1.xpose.msra.mxu0 0.0
      %793 = vmatprep.subr.mxu0 0.0
      %794 = vmatpush1.xpose.msra.mxu0 0.0
      %795 = vmatprep.mubr.f32.mxu0 0.0
      %796 = vmatmul.mubr.f32.gmra.mrb[0].mxu0 %v705
      %v797 = vpop.f32.mrb[0].mxu0
      %v798 = vadd.f32 %v701, %v797
      %v799 = vpop.f32.mrb[0].mxu0
      %800 = vdwg.mxu0
      %801 = vst.msk [vmem:[%s407] sm:$0xff] %vm541, %v798
      %v802 = vlaneseq
      %v803 = vshrl.u32 %v802, 7
      %v804 = vsub.s32 7, %v803
      %v805 = vrot.slane %v512, %v804
      %v806 = vsub.f32 %v805, %v512
      %v807 = vmul.f32 %v806, 1.442695
      %v808 = vpow.pop %v807
      %v809 = vmul.f32 %v424, %v808
      %v810 = vmul.f32 %v512, 1.442695
      %v811 = vpow.pop %v810
      %v812 = vld [vmem:[#allocation2] sm:$0xff]
      %v813 = vld [vmem:[#allocation2 + $0x8] sm:$0xff]
      %v814 = vld [vmem:[#allocation2 + $0x10] sm:$0xff]
      %v815 = vld [vmem:[#allocation2 + $0x18] sm:$0xff]
      %v816 = vld [vmem:[#allocation2 + $0x20] sm:$0xff]
      %v817 = vld [vmem:[#allocation2 + $0x28] sm:$0xff]
      %v818 = vld [vmem:[#allocation2 + $0x30] sm:$0xff]
      %v819 = vld [vmem:[#allocation2 + $0x38] sm:$0xff]
      %v820 = vlaneseq
      %v821 = vshrl.u32 %v820, 7
      %v822 = vsub.s32 7, %v821
      %v823 = vrot.slane %v811, %v822
      %v824 = vmul.f32 %v823, %v812
      %v825 = vmul.f32 %v823, %v813
      %v826 = vmul.f32 %v823, %v814
      %v827 = vmul.f32 %v823, %v815
      %v828 = vmul.f32 %v823, %v816
      %v829 = vmul.f32 %v823, %v817
      %v830 = vmul.f32 %v823, %v818
      %v831 = vmul.f32 %v823, %v819
      %832 = vxpose.xlu0.b32.start [1/16] %v426, 128
      %833 = vxpose.xlu0.b32.cont [2/16] 0.0, 128
      %834 = vxpose.xlu0.b32.cont [3/16] 0.0, 128
      %835 = vxpose.xlu0.b32.cont [4/16] 0.0, 128
      %836 = vxpose.xlu0.b32.cont [5/16] 0.0, 128
      %837 = vxpose.xlu0.b32.cont [6/16] 0.0, 128
      %838 = vxpose.xlu0.b32.cont [7/16] 0.0, 128
      %839 = vxpose.xlu0.b32.cont [8/16] 0.0, 128
      %840 = vxpose.xlu0.b32.cont [9/16] 0.0, 128
      %841 = vxpose.xlu0.b32.cont [10/16] 0.0, 128
      %842 = vxpose.xlu0.b32.cont [11/16] 0.0, 128
      %843 = vxpose.xlu0.b32.cont [12/16] 0.0, 128
      %844 = vxpose.xlu0.b32.cont [13/16] 0.0, 128
      %845 = vxpose.xlu0.b32.cont [14/16] 0.0, 128
      %846 = vxpose.xlu0.b32.cont [15/16] 0.0, 128
      %847 = vxpose.xlu0.b32.end [16/16] 0.0, 128
      %v848 = vpop.trf.xlu0
      %v849 = vpop.trf.xlu0
      %v850 = vpop.trf.xlu0
      %v851 = vpop.trf.xlu0
      %v852 = vpop.trf.xlu0
      %v853 = vpop.trf.xlu0
      %v854 = vpop.trf.xlu0
      %v855 = vpop.trf.xlu0
      %v856 = vpop.trf.xlu0
      %v857 = vpop.trf.xlu0
      %v858 = vpop.trf.xlu0
      %v859 = vpop.trf.xlu0
      %v860 = vpop.trf.xlu0
      %v861 = vpop.trf.xlu0
      %v862 = vpop.trf.xlu0
      %v863 = vpop.trf.xlu0
      %v865 = vsel %vm441, %v848, 0
      %v868 = vsel %vm441, %v849, 0
      %v871 = vsel %vm441, %v850, 0
      %v874 = vsel %vm441, %v851, 0
      %v877 = vsel %vm441, %v852, 0
      %v880 = vsel %vm441, %v853, 0
      %v883 = vsel %vm441, %v854, 0
      %v886 = vsel %vm441, %v855, 0
      %888 = vmatprep.subr.mxu0 0.0
      %889 = vmatpush1.msra.mxu0 %v809
      %890 = vmatprep.subr.mxu0 0.0
      %891 = vmatpush1.msra.mxu0 0.0
      %892 = vmatprep.subr.mxu0 0.0
      %893 = vmatpush1.msra.mxu0 0.0
      %894 = vmatprep.subr.mxu0 0.0
      %895 = vmatpush1.msra.mxu0 0.0
      %896 = vmatprep.subr.mxu0 0.0
      %897 = vmatpush1.msra.mxu0 0.0
      %898 = vmatprep.subr.mxu0 0.0
      %899 = vmatpush1.msra.mxu0 0.0
      %900 = vmatprep.subr.mxu0 0.0
      %901 = vmatpush1.msra.mxu0 0.0
      %902 = vmatprep.subr.mxu0 0.0
      %903 = vmatpush1.msra.mxu0 0.0
      %904 = vmatprep.subr.mxu0 0.0
      %905 = vmatpush1.msra.mxu0 0.0
      %906 = vmatprep.subr.mxu0 0.0
      %907 = vmatpush1.msra.mxu0 0.0
      %908 = vmatprep.subr.mxu0 0.0
      %909 = vmatpush1.msra.mxu0 0.0
      %910 = vmatprep.subr.mxu0 0.0
      %911 = vmatpush1.msra.mxu0 0.0
      %912 = vmatprep.subr.mxu0 0.0
      %913 = vmatpush1.msra.mxu0 0.0
      %914 = vmatprep.subr.mxu0 0.0
      %915 = vmatpush1.msra.mxu0 0.0
      %916 = vmatprep.subr.mxu0 0.0
      %917 = vmatpush1.msra.mxu0 0.0
      %918 = vmatprep.subr.mxu0 0.0
      %919 = vmatpush1.msra.mxu0 0.0
      %920 = vmatprep.subr.mxu0 0.0
      %921 = vmatpush1.msra.mxu0 0.0
      %922 = vmatprep.subr.mxu0 0.0
      %923 = vmatpush1.msra.mxu0 0.0
      %924 = vmatprep.subr.mxu0 0.0
      %925 = vmatpush1.msra.mxu0 0.0
      %926 = vmatprep.subr.mxu0 0.0
      %927 = vmatpush1.msra.mxu0 0.0
      %928 = vmatprep.subr.mxu0 0.0
      %929 = vmatpush1.msra.mxu0 0.0
      %930 = vmatprep.subr.mxu0 0.0
      %931 = vmatpush1.msra.mxu0 0.0
      %932 = vmatprep.subr.mxu0 0.0
      %933 = vmatpush1.msra.mxu0 0.0
      %934 = vmatprep.subr.mxu0 0.0
      %935 = vmatpush1.msra.mxu0 0.0
      %936 = vmatprep.subr.mxu0 0.0
      %937 = vmatpush1.msra.mxu0 0.0
      %938 = vmatprep.subr.mxu0 0.0
      %939 = vmatpush1.msra.mxu0 0.0
      %940 = vmatprep.subr.mxu0 0.0
      %941 = vmatpush1.msra.mxu0 0.0
      %942 = vmatprep.subr.mxu0 0.0
      %943 = vmatpush1.msra.mxu0 0.0
      %944 = vmatprep.subr.mxu0 0.0
      %945 = vmatpush1.msra.mxu0 0.0
      %946 = vmatprep.subr.mxu0 0.0
      %947 = vmatpush1.msra.mxu0 0.0
      %948 = vmatprep.subr.mxu0 0.0
      %949 = vmatpush1.msra.mxu0 0.0
      %950 = vmatprep.subr.mxu0 0.0
      %951 = vmatpush1.msra.mxu0 0.0
      %952 = vmatprep.mubr.f32.mxu0 0.0
      %953 = vmatmul.mubr.f32.gmra.mrb[0].mxu0 %v865
      %v954 = vpop.f32.mrb[0].mxu0
      %v955 = vadd.f32 0.0, %v954
      %v956 = vpop.f32.mrb[0].mxu0
      %957 = vmatprep.mubr.f32.mxu0 0.0
      %958 = vmatmul.mubr.f32.gmra.mrb[0].mxu0 %v868
      %v959 = vpop.f32.mrb[0].mxu0
      %v960 = vadd.f32 0.0, %v959
      %v961 = vpop.f32.mrb[0].mxu0
      %962 = vmatprep.mubr.f32.mxu0 0.0
      %963 = vmatmul.mubr.f32.gmra.mrb[0].mxu0 %v871
      %v964 = vpop.f32.mrb[0].mxu0
      %v965 = vadd.f32 0.0, %v964
      %v966 = vpop.f32.mrb[0].mxu0
      %967 = vmatprep.mubr.f32.mxu0 0.0
      %968 = vmatmul.mubr.f32.gmra.mrb[0].mxu0 %v874
      %v969 = vpop.f32.mrb[0].mxu0
      %v970 = vadd.f32 0.0, %v969
      %v971 = vpop.f32.mrb[0].mxu0
      %972 = vmatprep.mubr.f32.mxu0 0.0
      %973 = vmatmul.mubr.f32.gmra.mrb[0].mxu0 %v877
      %v974 = vpop.f32.mrb[0].mxu0
      %v975 = vadd.f32 0.0, %v974
      %v976 = vpop.f32.mrb[0].mxu0
      %977 = vmatprep.mubr.f32.mxu0 0.0
      %978 = vmatmul.mubr.f32.gmra.mrb[0].mxu0 %v880
      %v979 = vpop.f32.mrb[0].mxu0
      %v980 = vadd.f32 0.0, %v979
      %v981 = vpop.f32.mrb[0].mxu0
      %982 = vmatprep.mubr.f32.mxu0 0.0
      %983 = vmatmul.mubr.f32.gmra.mrb[0].mxu0 %v883
      %v984 = vpop.f32.mrb[0].mxu0
      %v985 = vadd.f32 0.0, %v984
      %v986 = vpop.f32.mrb[0].mxu0
      %987 = vmatprep.mubr.f32.mxu0 0.0
      %988 = vmatmul.mubr.f32.gmra.mrb[0].mxu0 %v886
      %v989 = vpop.f32.mrb[0].mxu0
      %v990 = vadd.f32 0.0, %v989
      %v991 = vpop.f32.mrb[0].mxu0
      %992 = vdwg.mxu0
      %v993 = vadd.f32 %v824, %v955
      %v994 = vadd.f32 %v825, %v960
      %v995 = vadd.f32 %v826, %v965
      %v996 = vadd.f32 %v827, %v970
      %v997 = vadd.f32 %v828, %v975
      %v998 = vadd.f32 %v829, %v980
      %v999 = vadd.f32 %v830, %v985
      %v1000 = vadd.f32 %v831, %v990
      %1001 = vst.msk [vmem:[#allocation2] sm:$0xff] %vm541, %v993
      %1002 = vst.msk [vmem:[#allocation2 + $0x8] sm:$0xff] %vm541, %v994
      %1003 = vst.msk [vmem:[#allocation2 + $0x10] sm:$0xff] %vm541, %v995
      %1004 = vst.msk [vmem:[#allocation2 + $0x18] sm:$0xff] %vm541, %v996
      %1005 = vst.msk [vmem:[#allocation2 + $0x20] sm:$0xff] %vm541, %v997
      %1006 = vst.msk [vmem:[#allocation2 + $0x28] sm:$0xff] %vm541, %v998
      %1007 = vst.msk [vmem:[#allocation2 + $0x30] sm:$0xff] %vm541, %v999
      %1008 = vst.msk [vmem:[#allocation2 + $0x38] sm:$0xff] %vm541, %v1000
      %p1009 = scmp.lt.s32.totalorder %s21, 1
      %s1010 = scalar_select %p1009, %s21, 1
      %p1011 = scmp.lt.s32.totalorder %s22, 0
      %s1012 = scalar_select %p1011, %s22, 0
      %p1013 = scmp.lt.s32.totalorder %s23, 0
      %s1014 = scalar_select %p1013, %s23, 0
      %s1015 = sadd.s32 %s1014, %s1012
      %s1016 = sadd.s32 %s1015, %s1010
      %s1017 = smul.addr %s1016, 8
      %s1018 = scalar_lea.vmem %s5, %s1017
      // Predicated region
      $region45: #{rwkv_forward.39} parent=39 // pred_check
        %p1019 = pneg %p203
      $region46: #{rwkv_forward.39} parent=39 // pred_check_branch
        %1021 = sbr.rel (%p1019) target = $region48
      $region47: #{rwkv_forward.39} parent=39 // pred_region
        _
      $region48: #{rwkv_forward.39} parent=39 // pred_fallthru
        _
    $region40: #{rwkv_forward.39} parent=5 // pred_fallthru
      _
    %p1022 = scmp.le.s32.totalorder 2, %s11
    // Predicated region
    $region49: #{rwkv_forward.39} parent=5 // pred_check
      %p1023 = pneg %p1022
    $region50: #{rwkv_forward.39} parent=5 // pred_check_branch
      %1025 = sbr.rel (%p1023) target = $region52
    $region51: #{rwkv_forward.39} parent=5 // pred_region
      %s1026 = ssub.s32 %s11, 2
      // Predicated region
      $region53: #{rwkv_forward.39} parent=51 // pred_check
        %p1027 = pneg %p209
      $region54: #{rwkv_forward.39} parent=51 // pred_check_branch
        %1029 = sbr.rel (%p1027) target = $region56
      $region55: #{rwkv_forward.39} parent=51 // pred_region
        %p1030 = scmp.lt.s32.totalorder %s24, 1
        %s1031 = scalar_select %p1030, %s24, 1
        %p1032 = scmp.lt.s32.totalorder %s25, 0
        %s1033 = scalar_select %p1032, %s25, 0
        %p1034 = scmp.lt.s32.totalorder %s26, 0
        %s1035 = scalar_select %p1034, %s26, 0
        %s1036 = sadd.s32 %s1035, %s1033
        %s1037 = sadd.s32 %s1036, %s1031
        %s1038 = smul.addr %s1037, 8
        %s1039 = scalar_lea.vmem %s5, %s1038
      $region56: #{rwkv_forward.39} parent=51 // pred_fallthru
        _
    $region52: #{rwkv_forward.39} parent=5 // pred_fallthru
      _
  $region6: #{rwkv_forward.39} parent=0 // loop_footer
    %s15 = sadd.s32 1, %s11
  $region7: #{rwkv_forward.39} parent=0 // loop_footer_branch
    %10 = sbr.rel target = $region3
  $region8: #{rwkv_forward.39} parent=0 // loop_exit
    _

// kernel: rwkv_forward.43
$region0: #{rwkv_forward.43}
  #allocation0 [shape = 'u32[]', space=smem, size = 0x4, offset = 0x4, fixed_abs, tag = 'smem constant byte address 0x4 - core index']
  #allocation1 [shape = 'u32[144,128]{1,0:T(1,128)}', space=vmem, size = 0x12000, scoped, tag = 'internal scratch']
  #allocation2 [shape = 'f32[16,256]{1,0:T(8,128)}', space=vmem, size = 0x4000, scoped, tag = 'scratch operand']
  #allocation3 [shape = 'f32[16,64]{1,0:T(8,128)}', space=vmem, size = 0x2000, scoped, tag = 'scratch operand']
  %s0 = inlined_call_operand.vmem [shape: bf16[16,64], index: 0, kind: input, shape index: {}]
  %s1 = inlined_call_operand.vmem [shape: bf16[64,256], index: 1, kind: input, shape index: {}]
  %s2 = inlined_call_operand.vmem [shape: bf16[64,64], index: 2, kind: input, shape index: {}]
  %s3 = inlined_call_operand.vmem [shape: bf16[64,256], index: 3, kind: input, shape index: {}]
  %s4 = inlined_call_operand.vmem [shape: f32[16,256], index: 4, kind: output, shape index: {}]
  %s5 = sld [smem:[#allocation0]]
  $region34: #{rwkv_forward.43} parent=0
    _
  %s7 = ssub.s32 1, %s5
  %s8 = scalar_select 0, %s7, %s5
  // Predicated region
  $region2: #{rwkv_forward.43} parent=0 // pred_check
    _
  $region3: #{rwkv_forward.43} parent=0 // pred_check_branch
    %10 = sbr.rel (0) target = $region5
  $region4: #{rwkv_forward.43} parent=0 // pred_region
    _
  $region5: #{rwkv_forward.43} parent=0 // pred_fallthru
    _
  // Predicated region
  $region6: #{rwkv_forward.43} parent=0 // pred_check
    _
  $region7: #{rwkv_forward.43} parent=0 // pred_check_branch
    %12 = sbr.rel (0) target = $region9
  $region8: #{rwkv_forward.43} parent=0 // pred_region
    _
  $region9: #{rwkv_forward.43} parent=0 // pred_fallthru
    _
  // Predicated region
  $region10: #{rwkv_forward.43} parent=0 // pred_check
    _
  $region11: #{rwkv_forward.43} parent=0 // pred_check_branch
    %14 = sbr.rel (0) target = $region13
  $region12: #{rwkv_forward.43} parent=0 // pred_region
    _
  $region13: #{rwkv_forward.43} parent=0 // pred_fallthru
    _
  // Predicated region
  $region14: #{rwkv_forward.43} parent=0 // pred_check
    _
  $region15: #{rwkv_forward.43} parent=0 // pred_check_branch
    %16 = sbr.rel (0) target = $region17
  $region16: #{rwkv_forward.43} parent=0 // pred_region
    _
  $region17: #{rwkv_forward.43} parent=0 // pred_fallthru
    _
  %p18 = scmp.eq.s32.totalorder 0, 0
  // Predicated region
  $region18: #{rwkv_forward.43} parent=0 // pred_check
    %p19 = pneg %p18
  $region19: #{rwkv_forward.43} parent=0 // pred_check_branch
    %21 = sbr.rel (%p19) target = $region21
  $region20: #{rwkv_forward.43} parent=0 // pred_region
    %22 = vst [vmem:[#allocation2] sm:$0xff] 0.0
    %23 = vst [vmem:[#allocation2 + $0x8] sm:$0xff] 0.0
    %24 = vst [vmem:[#allocation2 + $0x10] sm:$0xff] 0.0
    %25 = vst [vmem:[#allocation2 + $0x18] sm:$0xff] 0.0
    %vm26 = vcmask 523264
    %27 = vst.msk [vmem:[#allocation3] sm:$0xff] %vm26, 0.0
    %28 = vst.msk [vmem:[#allocation3 + $0x8] sm:$0xff] %vm26, 0.0
  $region21: #{rwkv_forward.43} parent=0 // pred_fallthru
    _
  %v29 = vld [vmem:[%s0] sm:$0xf]
  %v30 = vld [vmem:[%s0 + $0x4] sm:$0xf]
  %v31 = vld [vmem:[#allocation2] sm:$0xff]
  %v32 = vld [vmem:[#allocation2 + $0x8] sm:$0xff]
  %v33 = vld [vmem:[#allocation2 + $0x10] sm:$0xff]
  %v34 = vld [vmem:[#allocation2 + $0x18] sm:$0xff]
  %v35 = vld [vmem:[%s1] sm:$0xff]
  %v36 = vld [vmem:[%s1 + $0x8] sm:$0xff]
  %v37 = vld [vmem:[%s1 + $0x10] sm:$0xff]
  %v38 = vld [vmem:[%s1 + $0x18] sm:$0xff]
  %v39 = vld [vmem:[%s1 + $0x20] sm:$0xff]
  %v40 = vld [vmem:[%s1 + $0x28] sm:$0xff]
  %v41 = vld [vmem:[%s1 + $0x30] sm:$0xff]
  %v42 = vld [vmem:[%s1 + $0x38] sm:$0xff]
  %v45 = vunpack.c.l.b16 %v29
  %v46 = vunpack.c.l.b16 %v30
  %v47 = vpack.c.b16 %v46, %v45
  %v56 = vunpack.c.l.b16 %v35
  %v57 = vunpack.c.h.b16 %v35
  %v58 = vunpack.c.l.b16 %v36
  %v59 = vunpack.c.h.b16 %v36
  %v60 = vunpack.c.l.b16 %v37
  %v61 = vunpack.c.h.b16 %v37
  %v62 = vunpack.c.l.b16 %v38
  %v63 = vunpack.c.h.b16 %v38
  %v64 = vunpack.c.l.b16 %v39
  %v65 = vunpack.c.h.b16 %v39
  %v66 = vunpack.c.l.b16 %v40
  %v67 = vunpack.c.h.b16 %v40
  %v68 = vunpack.c.l.b16 %v41
  %v69 = vunpack.c.h.b16 %v41
  %v70 = vunpack.c.l.b16 %v42
  %v71 = vunpack.c.h.b16 %v42
  %v72 = vpack.c.b16 %v58, %v56
  %v73 = vpack.c.b16 %v59, %v57
  %v74 = vpack.c.b16 %v62, %v60
  %v75 = vpack.c.b16 %v63, %v61
  %v76 = vpack.c.b16 %v66, %v64
  %v77 = vpack.c.b16 %v67, %v65
  %v78 = vpack.c.b16 %v70, %v68
  %v79 = vpack.c.b16 %v71, %v69
  %vm88 = vcmask 523264
  %v90 = vsel %vm88, %v47, 0
  %92 = vmatprep.subr.bf16.mxu0 %v73
  %93 = vmatpush1.bf16.msra.mxu0 %v72
  %94 = vmatprep.subr.bf16.mxu0 %v75
  %95 = vmatpush1.bf16.msra.mxu0 %v74
  %96 = vmatprep.subr.bf16.mxu0 %v77
  %97 = vmatpush1.bf16.msra.mxu0 %v76
  %98 = vmatprep.subr.bf16.mxu0 %v79
  %99 = vmatpush1.bf16.msra.mxu0 %v78
  %100 = vmatprep.subr.bf16.mxu0 0
  %101 = vmatpush1.bf16.msra.mxu0 0
  %102 = vmatprep.subr.bf16.mxu0 0
  %103 = vmatpush1.bf16.msra.mxu0 0
  %104 = vmatprep.subr.bf16.mxu0 0
  %105 = vmatpush1.bf16.msra.mxu0 0
  %106 = vmatprep.subr.bf16.mxu0 0
  %107 = vmatpush1.bf16.msra.mxu0 0
  %108 = vmatprep.subr.bf16.mxu0 0
  %109 = vmatpush1.bf16.msra.mxu0 0
  %110 = vmatprep.subr.bf16.mxu0 0
  %111 = vmatpush1.bf16.msra.mxu0 0
  %112 = vmatprep.subr.bf16.mxu0 0
  %113 = vmatpush1.bf16.msra.mxu0 0
  %114 = vmatprep.subr.bf16.mxu0 0
  %115 = vmatpush1.bf16.msra.mxu0 0
  %116 = vmatprep.subr.bf16.mxu0 0
  %117 = vmatpush1.bf16.msra.mxu0 0
  %118 = vmatprep.subr.bf16.mxu0 0
  %119 = vmatpush1.bf16.msra.mxu0 0
  %120 = vmatprep.subr.bf16.mxu0 0
  %121 = vmatpush1.bf16.msra.mxu0 0
  %122 = vmatprep.subr.bf16.mxu0 0
  %123 = vmatpush1.bf16.msra.mxu0 0
  %124 = vmatprep.mubr.bf16.mxu0 0
  %125 = vmatmul.mubr.bf16.gmra.mrb[0].mxu0 %v90
  %v126 = vpop.f32.mrb[0].mxu0
  %v127 = vadd.f32 0.0, %v126
  %v128 = vpop.f32.mrb[0].mxu0
  %v129 = vadd.f32 0.0, %v128
  %v130 = vpop.f32.mrb[0].mxu0
  %v131 = vadd.f32 0.0, %v130
  %v132 = vpop.f32.mrb[0].mxu0
  %v133 = vadd.f32 0.0, %v132
  %134 = vdwg.mxu0
  %v135 = vadd.f32 %v31, %v127
  %v136 = vadd.f32 %v32, %v129
  %v137 = vadd.f32 %v33, %v131
  %v138 = vadd.f32 %v34, %v133
  %139 = vst [vmem:[#allocation2] sm:$0xff] %v135
  %140 = vst [vmem:[#allocation2 + $0x8] sm:$0xff] %v136
  %141 = vst [vmem:[#allocation2 + $0x10] sm:$0xff] %v137
  %142 = vst [vmem:[#allocation2 + $0x18] sm:$0xff] %v138
  %v143 = vld [vmem:[#allocation3] sm:$0xff]
  %v144 = vld [vmem:[#allocation3 + $0x8] sm:$0xff]
  %v145 = vld [vmem:[%s2] sm:$0xf]
  %v146 = vld [vmem:[%s2 + $0x4] sm:$0xf]
  %v147 = vld [vmem:[%s2 + $0x8] sm:$0xf]
  %v148 = vld [vmem:[%s2 + $0xc] sm:$0xf]
  %v149 = vld [vmem:[%s2 + $0x10] sm:$0xf]
  %v150 = vld [vmem:[%s2 + $0x14] sm:$0xf]
  %v151 = vld [vmem:[%s2 + $0x18] sm:$0xf]
  %v152 = vld [vmem:[%s2 + $0x1c] sm:$0xf]
  %v161 = vunpack.c.l.b16 %v145
  %v162 = vunpack.c.l.b16 %v146
  %v163 = vunpack.c.l.b16 %v147
  %v164 = vunpack.c.l.b16 %v148
  %v165 = vunpack.c.l.b16 %v149
  %v166 = vunpack.c.l.b16 %v150
  %v167 = vunpack.c.l.b16 %v151
  %v168 = vunpack.c.l.b16 %v152
  %v169 = vpack.c.b16 %v162, %v161
  %v170 = vpack.c.b16 %v164, %v163
  %v171 = vpack.c.b16 %v166, %v165
  %v172 = vpack.c.b16 %v168, %v167
  %177 = vmatprep.subr.bf16.mxu0 0
  %178 = vmatpush1.bf16.msra.mxu0 %v169
  %179 = vmatprep.subr.bf16.mxu0 0
  %180 = vmatpush1.bf16.msra.mxu0 %v170
  %181 = vmatprep.subr.bf16.mxu0 0
  %182 = vmatpush1.bf16.msra.mxu0 %v171
  %183 = vmatprep.subr.bf16.mxu0 0
  %184 = vmatpush1.bf16.msra.mxu0 %v172
  %185 = vmatprep.subr.bf16.mxu0 0
  %186 = vmatpush1.bf16.msra.mxu0 0
  %187 = vmatprep.subr.bf16.mxu0 0
  %188 = vmatpush1.bf16.msra.mxu0 0
  %189 = vmatprep.subr.bf16.mxu0 0
  %190 = vmatpush1.bf16.msra.mxu0 0
  %191 = vmatprep.subr.bf16.mxu0 0
  %192 = vmatpush1.bf16.msra.mxu0 0
  %193 = vmatprep.subr.bf16.mxu0 0
  %194 = vmatpush1.bf16.msra.mxu0 0
  %195 = vmatprep.subr.bf16.mxu0 0
  %196 = vmatpush1.bf16.msra.mxu0 0
  %197 = vmatprep.subr.bf16.mxu0 0
  %198 = vmatpush1.bf16.msra.mxu0 0
  %199 = vmatprep.subr.bf16.mxu0 0
  %200 = vmatpush1.bf16.msra.mxu0 0
  %201 = vmatprep.subr.bf16.mxu0 0
  %202 = vmatpush1.bf16.msra.mxu0 0
  %203 = vmatprep.subr.bf16.mxu0 0
  %204 = vmatpush1.bf16.msra.mxu0 0
  %205 = vmatprep.subr.bf16.mxu0 0
  %206 = vmatpush1.bf16.msra.mxu0 0
  %207 = vmatprep.subr.bf16.mxu0 0
  %208 = vmatpush1.bf16.msra.mxu0 0
  %209 = vmatprep.mubr.bf16.mxu0 0
  %210 = vmatmul.mubr.bf16.gmra.mrb[0].mxu0 %v90
  %v211 = vpop.f32.mrb[0].mxu0
  %v212 = vadd.f32 0.0, %v211
  %v213 = vpop.f32.mrb[0].mxu0
  %v214 = vpop.f32.mrb[0].mxu0
  %v215 = vadd.f32 0.0, %v214
  %v216 = vpop.f32.mrb[0].mxu0
  %217 = vdwg.mxu0
  %v218 = vadd.f32 %v143, %v212
  %v219 = vadd.f32 %v144, %v215
  %220 = vst.msk [vmem:[#allocation3] sm:$0xff] %vm88, %v218
  %221 = vst.msk [vmem:[#allocation3 + $0x8] sm:$0xff] %vm88, %v219
  // Predicated region
  $region22: #{rwkv_forward.43} parent=0 // pred_check
    %p222 = pneg %p18
  $region23: #{rwkv_forward.43} parent=0 // pred_check_branch
    %224 = sbr.rel (%p222) target = $region25
  $region24: #{rwkv_forward.43} parent=0 // pred_region
    %v225 = vld [vmem:[#allocation3] sm:$0xff]
    %v226 = vld [vmem:[#allocation3 + $0x8] sm:$0xff]
    %v227 = vpack.c.bf16 %v226, %v225
    %v228 = vld [vmem:[%s3] sm:$0xff]
    %v229 = vld [vmem:[%s3 + $0x8] sm:$0xff]
    %v230 = vld [vmem:[%s3 + $0x10] sm:$0xff]
    %v231 = vld [vmem:[%s3 + $0x18] sm:$0xff]
    %v232 = vld [vmem:[%s3 + $0x20] sm:$0xff]
    %v233 = vld [vmem:[%s3 + $0x28] sm:$0xff]
    %v234 = vld [vmem:[%s3 + $0x30] sm:$0xff]
    %v235 = vld [vmem:[%s3 + $0x38] sm:$0xff]
    %v244 = vunpack.c.l.b16 %v228
    %v245 = vunpack.c.h.b16 %v228
    %v246 = vunpack.c.l.b16 %v229
    %v247 = vunpack.c.h.b16 %v229
    %v248 = vunpack.c.l.b16 %v230
    %v249 = vunpack.c.h.b16 %v230
    %v250 = vunpack.c.l.b16 %v231
    %v251 = vunpack.c.h.b16 %v231
    %v252 = vunpack.c.l.b16 %v232
    %v253 = vunpack.c.h.b16 %v232
    %v254 = vunpack.c.l.b16 %v233
    %v255 = vunpack.c.h.b16 %v233
    %v256 = vunpack.c.l.b16 %v234
    %v257 = vunpack.c.h.b16 %v234
    %v258 = vunpack.c.l.b16 %v235
    %v259 = vunpack.c.h.b16 %v235
    %v260 = vpack.c.b16 %v246, %v244
    %v261 = vpack.c.b16 %v247, %v245
    %v262 = vpack.c.b16 %v250, %v248
    %v263 = vpack.c.b16 %v251, %v249
    %v264 = vpack.c.b16 %v254, %v252
    %v265 = vpack.c.b16 %v255, %v253
    %v266 = vpack.c.b16 %v258, %v256
    %v267 = vpack.c.b16 %v259, %v257
    %v277 = vsel %vm88, %v227, 0
    %279 = vmatprep.subr.bf16.mxu0 %v261
    %280 = vmatpush1.bf16.msra.mxu0 %v260
    %281 = vmatprep.subr.bf16.mxu0 %v263
    %282 = vmatpush1.bf16.msra.mxu0 %v262
    %283 = vmatprep.subr.bf16.mxu0 %v265
    %284 = vmatpush1.bf16.msra.mxu0 %v264
    %285 = vmatprep.subr.bf16.mxu0 %v267
    %286 = vmatpush1.bf16.msra.mxu0 %v266
    %287 = vmatprep.subr.bf16.mxu0 0
    %288 = vmatpush1.bf16.msra.mxu0 0
    %289 = vmatprep.subr.bf16.mxu0 0
    %290 = vmatpush1.bf16.msra.mxu0 0
    %291 = vmatprep.subr.bf16.mxu0 0
    %292 = vmatpush1.bf16.msra.mxu0 0
    %293 = vmatprep.subr.bf16.mxu0 0
    %294 = vmatpush1.bf16.msra.mxu0 0
    %295 = vmatprep.subr.bf16.mxu0 0
    %296 = vmatpush1.bf16.msra.mxu0 0
    %297 = vmatprep.subr.bf16.mxu0 0
    %298 = vmatpush1.bf16.msra.mxu0 0
    %299 = vmatprep.subr.bf16.mxu0 0
    %300 = vmatpush1.bf16.msra.mxu0 0
    %301 = vmatprep.subr.bf16.mxu0 0
    %302 = vmatpush1.bf16.msra.mxu0 0
    %303 = vmatprep.subr.bf16.mxu0 0
    %304 = vmatpush1.bf16.msra.mxu0 0
    %305 = vmatprep.subr.bf16.mxu0 0
    %306 = vmatpush1.bf16.msra.mxu0 0
    %307 = vmatprep.subr.bf16.mxu0 0
    %308 = vmatpush1.bf16.msra.mxu0 0
    %309 = vmatprep.subr.bf16.mxu0 0
    %310 = vmatpush1.bf16.msra.mxu0 0
    %311 = vmatprep.mubr.bf16.mxu0 0
    %312 = vmatmul.mubr.bf16.gmra.mrb[0].mxu0 %v277
    %v313 = vpop.f32.mrb[0].mxu0
    %v314 = vadd.f32 0.0, %v313
    %v315 = vpop.f32.mrb[0].mxu0
    %v316 = vadd.f32 0.0, %v315
    %v317 = vpop.f32.mrb[0].mxu0
    %v318 = vadd.f32 0.0, %v317
    %v319 = vpop.f32.mrb[0].mxu0
    %v320 = vadd.f32 0.0, %v319
    %321 = vdwg.mxu0
    %v322 = vld [vmem:[#allocation2] sm:$0xff]
    %v323 = vld [vmem:[#allocation2 + $0x8] sm:$0xff]
    %v324 = vld [vmem:[#allocation2 + $0x10] sm:$0xff]
    %v325 = vld [vmem:[#allocation2 + $0x18] sm:$0xff]
    %v326 = vmul.f32 %v314, 2.0
    %v327 = vmul.f32 %v316, 2.0
    %v328 = vmul.f32 %v318, 2.0
    %v329 = vmul.f32 %v320, 2.0
    %v330 = vadd.f32 %v322, %v326
    %v331 = vadd.f32 %v323, %v327
    %v332 = vadd.f32 %v324, %v328
    %v333 = vadd.f32 %v325, %v329
    %334 = vst [vmem:[%s4] sm:$0xff] %v330
    %335 = vst [vmem:[%s4 + $0x8] sm:$0xff] %v331
    %336 = vst [vmem:[%s4 + $0x10] sm:$0xff] %v332
    %337 = vst [vmem:[%s4 + $0x18] sm:$0xff] %v333
  $region25: #{rwkv_forward.43} parent=0 // pred_fallthru
    _
  // Predicated region
  $region26: #{rwkv_forward.43} parent=0 // pred_check
    _
  $region27: #{rwkv_forward.43} parent=0 // pred_check_branch
    %339 = sbr.rel (0) target = $region29
  $region28: #{rwkv_forward.43} parent=0 // pred_region
    _
  $region29: #{rwkv_forward.43} parent=0 // pred_fallthru
    _
  // Predicated region
  $region30: #{rwkv_forward.43} parent=0 // pred_check
    _
  $region31: #{rwkv_forward.43} parent=0 // pred_check_branch
    %341 = sbr.rel (0) target = $region33
  $region32: #{rwkv_forward.43} parent=0 // pred_region
    _
  $region33: #{rwkv_forward.43} parent=0 // pred_fallthru
    _

// kernel: rwkv_forward.44
$region0: #{rwkv_forward.44}
  #allocation0 [shape = 'u32[]', space=smem, size = 0x4, offset = 0x4, fixed_abs, tag = 'smem constant byte address 0x4 - core index']
  #allocation1 [shape = 'u32[144,128]{1,0:T(1,128)}', space=vmem, size = 0x12000, scoped, tag = 'internal scratch']
  #allocation2 [shape = 'f32[16,64]{1,0:T(8,128)}', space=vmem, size = 0x2000, scoped, tag = 'scratch operand']
  #allocation3 [shape = 'f32[16,64]{1,0:T(8,128)}', space=vmem, size = 0x2000, scoped, tag = 'scratch operand']
  %s0 = inlined_call_operand.vmem [shape: bf16[16,256], index: 0, kind: input, shape index: {}]
  %s1 = inlined_call_operand.vmem [shape: bf16[256,64], index: 1, kind: input, shape index: {}]
  %s2 = inlined_call_operand.vmem [shape: bf16[256,64], index: 2, kind: input, shape index: {}]
  %s3 = inlined_call_operand.vmem [shape: bf16[64,64], index: 3, kind: input, shape index: {}]
  %s4 = inlined_call_operand.vmem [shape: f32[16,64], index: 4, kind: output, shape index: {}]
  %s5 = sld [smem:[#allocation0]]
  $region34: #{rwkv_forward.44} parent=0
    _
  %s7 = ssub.s32 1, %s5
  %s8 = scalar_select 0, %s7, %s5
  // Predicated region
  $region2: #{rwkv_forward.44} parent=0 // pred_check
    _
  $region3: #{rwkv_forward.44} parent=0 // pred_check_branch
    %10 = sbr.rel (0) target = $region5
  $region4: #{rwkv_forward.44} parent=0 // pred_region
    _
  $region5: #{rwkv_forward.44} parent=0 // pred_fallthru
    _
  // Predicated region
  $region6: #{rwkv_forward.44} parent=0 // pred_check
    _
  $region7: #{rwkv_forward.44} parent=0 // pred_check_branch
    %12 = sbr.rel (0) target = $region9
  $region8: #{rwkv_forward.44} parent=0 // pred_region
    _
  $region9: #{rwkv_forward.44} parent=0 // pred_fallthru
    _
  // Predicated region
  $region10: #{rwkv_forward.44} parent=0 // pred_check
    _
  $region11: #{rwkv_forward.44} parent=0 // pred_check_branch
    %14 = sbr.rel (0) target = $region13
  $region12: #{rwkv_forward.44} parent=0 // pred_region
    _
  $region13: #{rwkv_forward.44} parent=0 // pred_fallthru
    _
  // Predicated region
  $region14: #{rwkv_forward.44} parent=0 // pred_check
    _
  $region15: #{rwkv_forward.44} parent=0 // pred_check_branch
    %16 = sbr.rel (0) target = $region17
  $region16: #{rwkv_forward.44} parent=0 // pred_region
    _
  $region17: #{rwkv_forward.44} parent=0 // pred_fallthru
    _
  %p18 = scmp.eq.s32.totalorder 0, 0
  // Predicated region
  $region18: #{rwkv_forward.44} parent=0 // pred_check
    %p19 = pneg %p18
  $region19: #{rwkv_forward.44} parent=0 // pred_check_branch
    %21 = sbr.rel (%p19) target = $region21
  $region20: #{rwkv_forward.44} parent=0 // pred_region
    %vm22 = vcmask 523264
    %23 = vst.msk [vmem:[#allocation2] sm:$0xff] %vm22, 0.0
    %24 = vst.msk [vmem:[#allocation2 + $0x8] sm:$0xff] %vm22, 0.0
    %25 = vst.msk [vmem:[#allocation3] sm:$0xff] %vm22, 0.0
    %26 = vst.msk [vmem:[#allocation3 + $0x8] sm:$0xff] %vm22, 0.0
  $region21: #{rwkv_forward.44} parent=0 // pred_fallthru
    _
  %v27 = vld [vmem:[%s0] sm:$0xff]
  %v28 = vld [vmem:[%s0 + $0x8] sm:$0xff]
  %v29 = vld [vmem:[#allocation2] sm:$0xff]
  %v30 = vld [vmem:[#allocation2 + $0x8] sm:$0xff]
  %v31 = vld [vmem:[%s1] sm:$0xf]
  %v32 = vld [vmem:[%s1 + $0x4] sm:$0xf]
  %v33 = vld [vmem:[%s1 + $0x8] sm:$0xf]
  %v34 = vld [vmem:[%s1 + $0xc] sm:$0xf]
  %v35 = vld [vmem:[%s1 + $0x10] sm:$0xf]
  %v36 = vld [vmem:[%s1 + $0x14] sm:$0xf]
  %v37 = vld [vmem:[%s1 + $0x18] sm:$0xf]
  %v38 = vld [vmem:[%s1 + $0x1c] sm:$0xf]
  %v39 = vld [vmem:[%s1 + $0x20] sm:$0xf]
  %v40 = vld [vmem:[%s1 + $0x24] sm:$0xf]
  %v41 = vld [vmem:[%s1 + $0x28] sm:$0xf]
  %v42 = vld [vmem:[%s1 + $0x2c] sm:$0xf]
  %v43 = vld [vmem:[%s1 + $0x30] sm:$0xf]
  %v44 = vld [vmem:[%s1 + $0x34] sm:$0xf]
  %v45 = vld [vmem:[%s1 + $0x38] sm:$0xf]
  %v46 = vld [vmem:[%s1 + $0x3c] sm:$0xf]
  %v47 = vld [vmem:[%s1 + $0x40] sm:$0xf]
  %v48 = vld [vmem:[%s1 + $0x44] sm:$0xf]
  %v49 = vld [vmem:[%s1 + $0x48] sm:$0xf]
  %v50 = vld [vmem:[%s1 + $0x4c] sm:$0xf]
  %v51 = vld [vmem:[%s1 + $0x50] sm:$0xf]
  %v52 = vld [vmem:[%s1 + $0x54] sm:$0xf]
  %v53 = vld [vmem:[%s1 + $0x58] sm:$0xf]
  %v54 = vld [vmem:[%s1 + $0x5c] sm:$0xf]
  %v55 = vld [vmem:[%s1 + $0x60] sm:$0xf]
  %v56 = vld [vmem:[%s1 + $0x64] sm:$0xf]
  %v57 = vld [vmem:[%s1 + $0x68] sm:$0xf]
  %v58 = vld [vmem:[%s1 + $0x6c] sm:$0xf]
  %v59 = vld [vmem:[%s1 + $0x70] sm:$0xf]
  %v60 = vld [vmem:[%s1 + $0x74] sm:$0xf]
  %v61 = vld [vmem:[%s1 + $0x78] sm:$0xf]
  %v62 = vld [vmem:[%s1 + $0x7c] sm:$0xf]
  %v65 = vunpack.c.l.b16 %v27
  %v66 = vunpack.c.h.b16 %v27
  %v67 = vunpack.c.l.b16 %v28
  %v68 = vunpack.c.h.b16 %v28
  %v69 = vpack.c.b16 %v67, %v65
  %v70 = vpack.c.b16 %v68, %v66
  %v105 = vunpack.c.l.b16 %v31
  %v106 = vunpack.c.l.b16 %v32
  %v107 = vunpack.c.l.b16 %v33
  %v108 = vunpack.c.l.b16 %v34
  %v109 = vunpack.c.l.b16 %v35
  %v110 = vunpack.c.l.b16 %v36
  %v111 = vunpack.c.l.b16 %v37
  %v112 = vunpack.c.l.b16 %v38
  %v113 = vunpack.c.l.b16 %v39
  %v114 = vunpack.c.l.b16 %v40
  %v115 = vunpack.c.l.b16 %v41
  %v116 = vunpack.c.l.b16 %v42
  %v117 = vunpack.c.l.b16 %v43
  %v118 = vunpack.c.l.b16 %v44
  %v119 = vunpack.c.l.b16 %v45
  %v120 = vunpack.c.l.b16 %v46
  %v121 = vunpack.c.l.b16 %v47
  %v122 = vunpack.c.l.b16 %v48
  %v123 = vunpack.c.l.b16 %v49
  %v124 = vunpack.c.l.b16 %v50
  %v125 = vunpack.c.l.b16 %v51
  %v126 = vunpack.c.l.b16 %v52
  %v127 = vunpack.c.l.b16 %v53
  %v128 = vunpack.c.l.b16 %v54
  %v129 = vunpack.c.l.b16 %v55
  %v130 = vunpack.c.l.b16 %v56
  %v131 = vunpack.c.l.b16 %v57
  %v132 = vunpack.c.l.b16 %v58
  %v133 = vunpack.c.l.b16 %v59
  %v134 = vunpack.c.l.b16 %v60
  %v135 = vunpack.c.l.b16 %v61
  %v136 = vunpack.c.l.b16 %v62
  %v137 = vpack.c.b16 %v106, %v105
  %v138 = vpack.c.b16 %v108, %v107
  %v139 = vpack.c.b16 %v110, %v109
  %v140 = vpack.c.b16 %v112, %v111
  %v141 = vpack.c.b16 %v114, %v113
  %v142 = vpack.c.b16 %v116, %v115
  %v143 = vpack.c.b16 %v118, %v117
  %v144 = vpack.c.b16 %v120, %v119
  %v145 = vpack.c.b16 %v122, %v121
  %v146 = vpack.c.b16 %v124, %v123
  %v147 = vpack.c.b16 %v126, %v125
  %v148 = vpack.c.b16 %v128, %v127
  %v149 = vpack.c.b16 %v130, %v129
  %v150 = vpack.c.b16 %v132, %v131
  %v151 = vpack.c.b16 %v134, %v133
  %v152 = vpack.c.b16 %v136, %v135
  %169 = vmatprep.subr.bf16.mxu0 0
  %170 = vmatpush1.bf16.msra.mxu0 %v137
  %171 = vmatprep.subr.bf16.mxu0 0
  %172 = vmatpush1.bf16.msra.mxu0 %v138
  %173 = vmatprep.subr.bf16.mxu0 0
  %174 = vmatpush1.bf16.msra.mxu0 %v139
  %175 = vmatprep.subr.bf16.mxu0 0
  %176 = vmatpush1.bf16.msra.mxu0 %v140
  %177 = vmatprep.subr.bf16.mxu0 0
  %178 = vmatpush1.bf16.msra.mxu0 %v141
  %179 = vmatprep.subr.bf16.mxu0 0
  %180 = vmatpush1.bf16.msra.mxu0 %v142
  %181 = vmatprep.subr.bf16.mxu0 0
  %182 = vmatpush1.bf16.msra.mxu0 %v143
  %183 = vmatprep.subr.bf16.mxu0 0
  %184 = vmatpush1.bf16.msra.mxu0 %v144
  %185 = vmatprep.subr.bf16.mxu0 0
  %186 = vmatpush1.bf16.msra.mxu0 %v145
  %187 = vmatprep.subr.bf16.mxu0 0
  %188 = vmatpush1.bf16.msra.mxu0 %v146
  %189 = vmatprep.subr.bf16.mxu0 0
  %190 = vmatpush1.bf16.msra.mxu0 %v147
  %191 = vmatprep.subr.bf16.mxu0 0
  %192 = vmatpush1.bf16.msra.mxu0 %v148
  %193 = vmatprep.subr.bf16.mxu0 0
  %194 = vmatpush1.bf16.msra.mxu0 %v149
  %195 = vmatprep.subr.bf16.mxu0 0
  %196 = vmatpush1.bf16.msra.mxu0 %v150
  %197 = vmatprep.subr.bf16.mxu0 0
  %198 = vmatpush1.bf16.msra.mxu0 %v151
  %199 = vmatprep.subr.bf16.mxu0 0
  %200 = vmatpush1.bf16.msra.mxu0 %v152
  %201 = vmatprep.mubr.bf16.mxu0 %v70
  %202 = vmatmul.mubr.bf16.gmra.mrb[0].mxu0 %v69
  %v203 = vpop.f32.mrb[0].mxu0
  %v204 = vadd.f32 0.0, %v203
  %v205 = vpop.f32.mrb[0].mxu0
  %v206 = vpop.f32.mrb[0].mxu0
  %v207 = vadd.f32 0.0, %v206
  %v208 = vpop.f32.mrb[0].mxu0
  %209 = vdwg.mxu0
  %v210 = vadd.f32 %v29, %v204
  %v211 = vadd.f32 %v30, %v207
  %vm212 = vcmask 523264
  %213 = vst.msk [vmem:[#allocation2] sm:$0xff] %vm212, %v210
  %214 = vst.msk [vmem:[#allocation2 + $0x8] sm:$0xff] %vm212, %v211
  %v215 = vld [vmem:[#allocation3] sm:$0xff]
  %v216 = vld [vmem:[#allocation3 + $0x8] sm:$0xff]
  %v217 = vld [vmem:[%s2] sm:$0xf]
  %v218 = vld [vmem:[%s2 + $0x4] sm:$0xf]
  %v219 = vld [vmem:[%s2 + $0x8] sm:$0xf]
  %v220 = vld [vmem:[%s2 + $0xc] sm:$0xf]
  %v221 = vld [vmem:[%s2 + $0x10] sm:$0xf]
  %v222 = vld [vmem:[%s2 + $0x14] sm:$0xf]
  %v223 = vld [vmem:[%s2 + $0x18] sm:$0xf]
  %v224 = vld [vmem:[%s2 + $0x1c] sm:$0xf]
  %v225 = vld [vmem:[%s2 + $0x20] sm:$0xf]
  %v226 = vld [vmem:[%s2 + $0x24] sm:$0xf]
  %v227 = vld [vmem:[%s2 + $0x28] sm:$0xf]
  %v228 = vld [vmem:[%s2 + $0x2c] sm:$0xf]
  %v229 = vld [vmem:[%s2 + $0x30] sm:$0xf]
  %v230 = vld [vmem:[%s2 + $0x34] sm:$0xf]
  %v231 = vld [vmem:[%s2 + $0x38] sm:$0xf]
  %v232 = vld [vmem:[%s2 + $0x3c] sm:$0xf]
  %v233 = vld [vmem:[%s2 + $0x40] sm:$0xf]
  %v234 = vld [vmem:[%s2 + $0x44] sm:$0xf]
  %v235 = vld [vmem:[%s2 + $0x48] sm:$0xf]
  %v236 = vld [vmem:[%s2 + $0x4c] sm:$0xf]
  %v237 = vld [vmem:[%s2 + $0x50] sm:$0xf]
  %v238 = vld [vmem:[%s2 + $0x54] sm:$0xf]
  %v239 = vld [vmem:[%s2 + $0x58] sm:$0xf]
  %v240 = vld [vmem:[%s2 + $0x5c] sm:$0xf]
  %v241 = vld [vmem:[%s2 + $0x60] sm:$0xf]
  %v242 = vld [vmem:[%s2 + $0x64] sm:$0xf]
  %v243 = vld [vmem:[%s2 + $0x68] sm:$0xf]
  %v244 = vld [vmem:[%s2 + $0x6c] sm:$0xf]
  %v245 = vld [vmem:[%s2 + $0x70] sm:$0xf]
  %v246 = vld [vmem:[%s2 + $0x74] sm:$0xf]
  %v247 = vld [vmem:[%s2 + $0x78] sm:$0xf]
  %v248 = vld [vmem:[%s2 + $0x7c] sm:$0xf]
  %v281 = vunpack.c.l.b16 %v217
  %v282 = vunpack.c.l.b16 %v218
  %v283 = vunpack.c.l.b16 %v219
  %v284 = vunpack.c.l.b16 %v220
  %v285 = vunpack.c.l.b16 %v221
  %v286 = vunpack.c.l.b16 %v222
  %v287 = vunpack.c.l.b16 %v223
  %v288 = vunpack.c.l.b16 %v224
  %v289 = vunpack.c.l.b16 %v225
  %v290 = vunpack.c.l.b16 %v226
  %v291 = vunpack.c.l.b16 %v227
  %v292 = vunpack.c.l.b16 %v228
  %v293 = vunpack.c.l.b16 %v229
  %v294 = vunpack.c.l.b16 %v230
  %v295 = vunpack.c.l.b16 %v231
  %v296 = vunpack.c.l.b16 %v232
  %v297 = vunpack.c.l.b16 %v233
  %v298 = vunpack.c.l.b16 %v234
  %v299 = vunpack.c.l.b16 %v235
  %v300 = vunpack.c.l.b16 %v236
  %v301 = vunpack.c.l.b16 %v237
  %v302 = vunpack.c.l.b16 %v238
  %v303 = vunpack.c.l.b16 %v239
  %v304 = vunpack.c.l.b16 %v240
  %v305 = vunpack.c.l.b16 %v241
  %v306 = vunpack.c.l.b16 %v242
  %v307 = vunpack.c.l.b16 %v243
  %v308 = vunpack.c.l.b16 %v244
  %v309 = vunpack.c.l.b16 %v245
  %v310 = vunpack.c.l.b16 %v246
  %v311 = vunpack.c.l.b16 %v247
  %v312 = vunpack.c.l.b16 %v248
  %v313 = vpack.c.b16 %v282, %v281
  %v314 = vpack.c.b16 %v284, %v283
  %v315 = vpack.c.b16 %v286, %v285
  %v316 = vpack.c.b16 %v288, %v287
  %v317 = vpack.c.b16 %v290, %v289
  %v318 = vpack.c.b16 %v292, %v291
  %v319 = vpack.c.b16 %v294, %v293
  %v320 = vpack.c.b16 %v296, %v295
  %v321 = vpack.c.b16 %v298, %v297
  %v322 = vpack.c.b16 %v300, %v299
  %v323 = vpack.c.b16 %v302, %v301
  %v324 = vpack.c.b16 %v304, %v303
  %v325 = vpack.c.b16 %v306, %v305
  %v326 = vpack.c.b16 %v308, %v307
  %v327 = vpack.c.b16 %v310, %v309
  %v328 = vpack.c.b16 %v312, %v311
  %345 = vmatprep.subr.bf16.mxu0 0
  %346 = vmatpush1.bf16.msra.mxu0 %v313
  %347 = vmatprep.subr.bf16.mxu0 0
  %348 = vmatpush1.bf16.msra.mxu0 %v314
  %349 = vmatprep.subr.bf16.mxu0 0
  %350 = vmatpush1.bf16.msra.mxu0 %v315
  %351 = vmatprep.subr.bf16.mxu0 0
  %352 = vmatpush1.bf16.msra.mxu0 %v316
  %353 = vmatprep.subr.bf16.mxu0 0
  %354 = vmatpush1.bf16.msra.mxu0 %v317
  %355 = vmatprep.subr.bf16.mxu0 0
  %356 = vmatpush1.bf16.msra.mxu0 %v318
  %357 = vmatprep.subr.bf16.mxu0 0
  %358 = vmatpush1.bf16.msra.mxu0 %v319
  %359 = vmatprep.subr.bf16.mxu0 0
  %360 = vmatpush1.bf16.msra.mxu0 %v320
  %361 = vmatprep.subr.bf16.mxu0 0
  %362 = vmatpush1.bf16.msra.mxu0 %v321
  %363 = vmatprep.subr.bf16.mxu0 0
  %364 = vmatpush1.bf16.msra.mxu0 %v322
  %365 = vmatprep.subr.bf16.mxu0 0
  %366 = vmatpush1.bf16.msra.mxu0 %v323
  %367 = vmatprep.subr.bf16.mxu0 0
  %368 = vmatpush1.bf16.msra.mxu0 %v324
  %369 = vmatprep.subr.bf16.mxu0 0
  %370 = vmatpush1.bf16.msra.mxu0 %v325
  %371 = vmatprep.subr.bf16.mxu0 0
  %372 = vmatpush1.bf16.msra.mxu0 %v326
  %373 = vmatprep.subr.bf16.mxu0 0
  %374 = vmatpush1.bf16.msra.mxu0 %v327
  %375 = vmatprep.subr.bf16.mxu0 0
  %376 = vmatpush1.bf16.msra.mxu0 %v328
  %377 = vmatprep.mubr.bf16.mxu0 %v70
  %378 = vmatmul.mubr.bf16.gmra.mrb[0].mxu0 %v69
  %v379 = vpop.f32.mrb[0].mxu0
  %v380 = vadd.f32 0.0, %v379
  %v381 = vpop.f32.mrb[0].mxu0
  %v382 = vpop.f32.mrb[0].mxu0
  %v383 = vadd.f32 0.0, %v382
  %v384 = vpop.f32.mrb[0].mxu0
  %385 = vdwg.mxu0
  %v386 = vadd.f32 %v215, %v380
  %v387 = vadd.f32 %v216, %v383
  %388 = vst.msk [vmem:[#allocation3] sm:$0xff] %vm212, %v386
  %389 = vst.msk [vmem:[#allocation3 + $0x8] sm:$0xff] %vm212, %v387
  // Predicated region
  $region22: #{rwkv_forward.44} parent=0 // pred_check
    %p390 = pneg %p18
  $region23: #{rwkv_forward.44} parent=0 // pred_check_branch
    %392 = sbr.rel (%p390) target = $region25
  $region24: #{rwkv_forward.44} parent=0 // pred_region
    %v393 = vld [vmem:[#allocation3] sm:$0xff]
    %v394 = vld [vmem:[#allocation3 + $0x8] sm:$0xff]
    %v395 = vpack.c.bf16 %v394, %v393
    %v396 = vld [vmem:[%s3] sm:$0xf]
    %v397 = vld [vmem:[%s3 + $0x4] sm:$0xf]
    %v398 = vld [vmem:[%s3 + $0x8] sm:$0xf]
    %v399 = vld [vmem:[%s3 + $0xc] sm:$0xf]
    %v400 = vld [vmem:[%s3 + $0x10] sm:$0xf]
    %v401 = vld [vmem:[%s3 + $0x14] sm:$0xf]
    %v402 = vld [vmem:[%s3 + $0x18] sm:$0xf]
    %v403 = vld [vmem:[%s3 + $0x1c] sm:$0xf]
    %v412 = vunpack.c.l.b16 %v396
    %v413 = vunpack.c.l.b16 %v397
    %v414 = vunpack.c.l.b16 %v398
    %v415 = vunpack.c.l.b16 %v399
    %v416 = vunpack.c.l.b16 %v400
    %v417 = vunpack.c.l.b16 %v401
    %v418 = vunpack.c.l.b16 %v402
    %v419 = vunpack.c.l.b16 %v403
    %v420 = vpack.c.b16 %v413, %v412
    %v421 = vpack.c.b16 %v415, %v414
    %v422 = vpack.c.b16 %v417, %v416
    %v423 = vpack.c.b16 %v419, %v418
    %v429 = vsel %vm212, %v395, 0
    %431 = vmatprep.subr.bf16.mxu0 0
    %432 = vmatpush1.bf16.msra.mxu0 %v420
    %433 = vmatprep.subr.bf16.mxu0 0
    %434 = vmatpush1.bf16.msra.mxu0 %v421
    %435 = vmatprep.subr.bf16.mxu0 0
    %436 = vmatpush1.bf16.msra.mxu0 %v422
    %437 = vmatprep.subr.bf16.mxu0 0
    %438 = vmatpush1.bf16.msra.mxu0 %v423
    %439 = vmatprep.subr.bf16.mxu0 0
    %440 = vmatpush1.bf16.msra.mxu0 0
    %441 = vmatprep.subr.bf16.mxu0 0
    %442 = vmatpush1.bf16.msra.mxu0 0
    %443 = vmatprep.subr.bf16.mxu0 0
    %444 = vmatpush1.bf16.msra.mxu0 0
    %445 = vmatprep.subr.bf16.mxu0 0
    %446 = vmatpush1.bf16.msra.mxu0 0
    %447 = vmatprep.subr.bf16.mxu0 0
    %448 = vmatpush1.bf16.msra.mxu0 0
    %449 = vmatprep.subr.bf16.mxu0 0
    %450 = vmatpush1.bf16.msra.mxu0 0
    %451 = vmatprep.subr.bf16.mxu0 0
    %452 = vmatpush1.bf16.msra.mxu0 0
    %453 = vmatprep.subr.bf16.mxu0 0
    %454 = vmatpush1.bf16.msra.mxu0 0
    %455 = vmatprep.subr.bf16.mxu0 0
    %456 = vmatpush1.bf16.msra.mxu0 0
    %457 = vmatprep.subr.bf16.mxu0 0
    %458 = vmatpush1.bf16.msra.mxu0 0
    %459 = vmatprep.subr.bf16.mxu0 0
    %460 = vmatpush1.bf16.msra.mxu0 0
    %461 = vmatprep.subr.bf16.mxu0 0
    %462 = vmatpush1.bf16.msra.mxu0 0
    %463 = vmatprep.mubr.bf16.mxu0 0
    %464 = vmatmul.mubr.bf16.gmra.mrb[0].mxu0 %v429
    %v465 = vpop.f32.mrb[0].mxu0
    %v466 = vadd.f32 0.0, %v465
    %v467 = vpop.f32.mrb[0].mxu0
    %v468 = vpop.f32.mrb[0].mxu0
    %v469 = vadd.f32 0.0, %v468
    %v470 = vpop.f32.mrb[0].mxu0
    %471 = vdwg.mxu0
    %v472 = vld [vmem:[#allocation2] sm:$0xff]
    %v473 = vld [vmem:[#allocation2 + $0x8] sm:$0xff]
    %v474 = vmul.f32 %v466, 2.0
    %v475 = vmul.f32 %v469, 2.0
    %v476 = vadd.f32 %v472, %v474
    %v477 = vadd.f32 %v473, %v475
    %478 = vst.msk [vmem:[%s4] sm:$0xff] %vm212, %v476
    %479 = vst.msk [vmem:[%s4 + $0x8] sm:$0xff] %vm212, %v477
  $region25: #{rwkv_forward.44} parent=0 // pred_fallthru
    _
  // Predicated region
  $region26: #{rwkv_forward.44} parent=0 // pred_check
    _
  $region27: #{rwkv_forward.44} parent=0 // pred_check_branch
    %481 = sbr.rel (0) target = $region29
  $region28: #{rwkv_forward.44} parent=0 // pred_region
    _
  $region29: #{rwkv_forward.44} parent=0 // pred_fallthru
    _
  // Predicated region
  $region30: #{rwkv_forward.44} parent=0 // pred_check
    _
  $region31: #{rwkv_forward.44} parent=0 // pred_check_branch
    %483 = sbr.rel (0) target = $region33
  $region32: #{rwkv_forward.44} parent=0 // pred_region
    _
  $region33: #{rwkv_forward.44} parent=0 // pred_fallthru
    _

// kernel: rwkv_forward.61
$region0: #{rwkv_forward.61}
  #allocation0 [shape = 'u32[]', space=smem, size = 0x4, offset = 0x4, fixed_abs, tag = 'smem constant byte address 0x4 - core index']
  #allocation1 [shape = 'u32[144,128]{1,0:T(1,128)}', space=vmem, size = 0x12000, scoped, tag = 'internal scratch']
  #allocation2 [shape = 'f32[16,1]{1,0:T(8,128)}', space=vmem, size = 0x2000, scoped, tag = 'scratch operand']
  #allocation3 [shape = 'f32[16,1]{1,0:T(8,128)}', space=vmem, size = 0x2000, scoped, tag = 'scratch operand']
  #allocation4 [shape = 'f32[16,1]{1,0:T(8,128)}', space=vmem, size = 0x2000, scoped, tag = 'scratch operand']
  %s0 = inlined_call_operand.vmem [shape: bf16[16,64], index: 0, kind: input, shape index: {}]
  %s1 = inlined_call_operand.vmem [shape: bf16[64,128], index: 1, kind: input, shape index: {}]
  %s2 = inlined_call_operand.vmem [shape: s32[16,1], index: 2, kind: input, shape index: {}]
  %s3 = inlined_call_operand.vmem [shape: f32[16,1], index: 3, kind: output, shape index: {}]
  %s4 = sld [smem:[#allocation0]]
  $region30: #{rwkv_forward.61} parent=0
    _
  %s6 = ssub.s32 1, %s4
  %s7 = scalar_select 0, %s6, %s4
  // Predicated region
  $region2: #{rwkv_forward.61} parent=0 // pred_check
    _
  $region3: #{rwkv_forward.61} parent=0 // pred_check_branch
    %9 = sbr.rel (0) target = $region5
  $region4: #{rwkv_forward.61} parent=0 // pred_region
    _
  $region5: #{rwkv_forward.61} parent=0 // pred_fallthru
    _
  // Predicated region
  $region6: #{rwkv_forward.61} parent=0 // pred_check
    _
  $region7: #{rwkv_forward.61} parent=0 // pred_check_branch
    %11 = sbr.rel (0) target = $region9
  $region8: #{rwkv_forward.61} parent=0 // pred_region
    _
  $region9: #{rwkv_forward.61} parent=0 // pred_fallthru
    _
  // Predicated region
  $region10: #{rwkv_forward.61} parent=0 // pred_check
    _
  $region11: #{rwkv_forward.61} parent=0 // pred_check_branch
    %13 = sbr.rel (0) target = $region13
  $region12: #{rwkv_forward.61} parent=0 // pred_region
    _
  $region13: #{rwkv_forward.61} parent=0 // pred_fallthru
    _
  %p15 = scmp.eq.s32.totalorder 0, 0
  // Predicated region
  $region14: #{rwkv_forward.61} parent=0 // pred_check
    %p16 = pneg %p15
  $region15: #{rwkv_forward.61} parent=0 // pred_check_branch
    %18 = sbr.rel (%p16) target = $region17
  $region16: #{rwkv_forward.61} parent=0 // pred_region
    %vm19 = vcmask 7168
    %20 = vst.msk [vmem:[#allocation2] sm:$0xff] %vm19, -inf
    %21 = vst.msk [vmem:[#allocation2 + $0x8] sm:$0xff] %vm19, -inf
    %22 = vst.msk [vmem:[#allocation3] sm:$0xff] %vm19, 0.0
    %23 = vst.msk [vmem:[#allocation3 + $0x8] sm:$0xff] %vm19, 0.0
    %24 = vst.msk [vmem:[#allocation4] sm:$0xff] %vm19, 0.0
    %25 = vst.msk [vmem:[#allocation4 + $0x8] sm:$0xff] %vm19, 0.0
  $region17: #{rwkv_forward.61} parent=0 // pred_fallthru
    _
  %v26 = vld [vmem:[%s0] sm:$0xf]
  %v27 = vld [vmem:[%s0 + $0x4] sm:$0xf]
  %v28 = vld [vmem:[%s1] sm:$0xf]
  %v29 = vld [vmem:[%s1 + $0x4] sm:$0xf]
  %v30 = vld [vmem:[%s1 + $0x8] sm:$0xf]
  %v31 = vld [vmem:[%s1 + $0xc] sm:$0xf]
  %v32 = vld [vmem:[%s1 + $0x10] sm:$0xf]
  %v33 = vld [vmem:[%s1 + $0x14] sm:$0xf]
  %v34 = vld [vmem:[%s1 + $0x18] sm:$0xf]
  %v35 = vld [vmem:[%s1 + $0x1c] sm:$0xf]
  %v38 = vunpack.c.l.b16 %v26
  %v39 = vunpack.c.l.b16 %v27
  %v40 = vpack.c.b16 %v39, %v38
  %v49 = vunpack.c.l.b16 %v28
  %v50 = vunpack.c.l.b16 %v29
  %v51 = vunpack.c.l.b16 %v30
  %v52 = vunpack.c.l.b16 %v31
  %v53 = vunpack.c.l.b16 %v32
  %v54 = vunpack.c.l.b16 %v33
  %v55 = vunpack.c.l.b16 %v34
  %v56 = vunpack.c.l.b16 %v35
  %v57 = vpack.c.b16 %v50, %v49
  %v58 = vpack.c.b16 %v52, %v51
  %v59 = vpack.c.b16 %v54, %v53
  %v60 = vpack.c.b16 %v56, %v55
  %vm65 = vcmask 523264
  %v67 = vsel %vm65, %v40, 0
  %69 = vmatprep.subr.bf16.mxu0 0
  %70 = vmatpush1.bf16.msra.mxu0 %v57
  %71 = vmatprep.subr.bf16.mxu0 0
  %72 = vmatpush1.bf16.msra.mxu0 %v58
  %73 = vmatprep.subr.bf16.mxu0 0
  %74 = vmatpush1.bf16.msra.mxu0 %v59
  %75 = vmatprep.subr.bf16.mxu0 0
  %76 = vmatpush1.bf16.msra.mxu0 %v60
  %77 = vmatprep.subr.bf16.mxu0 0
  %78 = vmatpush1.bf16.msra.mxu0 0
  %79 = vmatprep.subr.bf16.mxu0 0
  %80 = vmatpush1.bf16.msra.mxu0 0
  %81 = vmatprep.subr.bf16.mxu0 0
  %82 = vmatpush1.bf16.msra.mxu0 0
  %83 = vmatprep.subr.bf16.mxu0 0
  %84 = vmatpush1.bf16.msra.mxu0 0
  %85 = vmatprep.subr.bf16.mxu0 0
  %86 = vmatpush1.bf16.msra.mxu0 0
  %87 = vmatprep.subr.bf16.mxu0 0
  %88 = vmatpush1.bf16.msra.mxu0 0
  %89 = vmatprep.subr.bf16.mxu0 0
  %90 = vmatpush1.bf16.msra.mxu0 0
  %91 = vmatprep.subr.bf16.mxu0 0
  %92 = vmatpush1.bf16.msra.mxu0 0
  %93 = vmatprep.subr.bf16.mxu0 0
  %94 = vmatpush1.bf16.msra.mxu0 0
  %95 = vmatprep.subr.bf16.mxu0 0
  %96 = vmatpush1.bf16.msra.mxu0 0
  %97 = vmatprep.subr.bf16.mxu0 0
  %98 = vmatpush1.bf16.msra.mxu0 0
  %99 = vmatprep.subr.bf16.mxu0 0
  %100 = vmatpush1.bf16.msra.mxu0 0
  %101 = vmatprep.mubr.bf16.mxu0 0
  %102 = vmatmul.mubr.bf16.gmra.mrb[0].mxu0 %v67
  %v103 = vpop.f32.mrb[0].mxu0
  %v104 = vadd.f32 0.0, %v103
  %v105 = vpop.f32.mrb[0].mxu0
  %v106 = vpop.f32.mrb[0].mxu0
  %v107 = vadd.f32 0.0, %v106
  %v108 = vpop.f32.mrb[0].mxu0
  %109 = vdwg.mxu0
  %s110 = smul.u32 0, 128
  %v111 = vlaneseq
  %v112 = vand.u32 %v111, 127
  %v113 = vstv %s110
  %v114 = vadd.s32 %v113, %v112
  %vm115 = vcmp.lt.s32.totalorder %v114, 128
  %v116 = vsel %vm115, %v104, -inf
  %v117 = vsel %vm115, %v107, -inf
  %v118 = vld [vmem:[%s2] sm:$0xff]
  %v119 = vld [vmem:[%s2 + $0x8] sm:$0xff]
  %v120 = vld [vmem:[#allocation4] sm:$0xff]
  %v121 = vld [vmem:[#allocation4 + $0x8] sm:$0xff]
  %122 = vset.pattern.permute.xlu0 0
  %123 = vperm.xlu0 %122, %v118
  %v124 = vpop.permute.xlu0 %123
  %125 = vset.pattern.permute.xlu0 0
  %126 = vperm.xlu0 %125, %v119
  %v127 = vpop.permute.xlu0 %126
  %vm128 = vcmp.eq.s32.totalorder %v114, %v124
  %vm129 = vcmp.eq.s32.totalorder %v114, %v127
  %v130 = vsel %vm128, %v116, 0.0
  %v131 = vsel %vm129, %v117, 0.0
  %132 = vadd.xlane.f32.xlu0 %v130
  %v133 = vpop.xlane.xlu0 %132
  %134 = vadd.xlane.f32.xlu0 %v131
  %v135 = vpop.xlane.xlu0 %134
  %v136 = vadd.f32 %v120, %v133
  %v137 = vadd.f32 %v121, %v135
  %vm138 = vcmask 7168
  %139 = vst.msk [vmem:[#allocation4] sm:$0xff] %vm138, %v136
  %140 = vst.msk [vmem:[#allocation4 + $0x8] sm:$0xff] %vm138, %v137
  %v141 = vld [vmem:[#allocation2] sm:$0xff]
  %v142 = vld [vmem:[#allocation2 + $0x8] sm:$0xff]
  %143 = vmax.xlane.f32.xlu0 %v116
  %v144 = vpop.xlane.xlu0 %143
  %145 = vmax.xlane.f32.xlu0 %v117
  %v146 = vpop.xlane.xlu0 %145
  %v147 = vmax.f32 %v141, %v144
  %v148 = vmax.f32 %v142, %v146
  %v149 = vld [vmem:[#allocation3] sm:$0xff]
  %v150 = vld [vmem:[#allocation3 + $0x8] sm:$0xff]
  %v151 = vsub.f32 %v141, %v147
  %v152 = vsub.f32 %v142, %v148
  %v153 = vmul.f32 %v151, 1.442695
  %v154 = vpow.pop %v153
  %v155 = vmul.f32 %v152, 1.442695
  %v156 = vpow.pop %v155
  %v157 = vmul.f32 %v149, %v154
  %v158 = vmul.f32 %v150, %v156
  %160 = vset.pattern.permute.xlu0 0
  %161 = vperm.xlu0 %160, %v147
  %v162 = vpop.permute.xlu0 %161
  %165 = vset.pattern.permute.xlu0 0
  %166 = vperm.xlu0 %165, %v148
  %v167 = vpop.permute.xlu0 %166
  %v169 = vsub.f32 %v116, %v162
  %v170 = vsub.f32 %v117, %v167
  %v171 = vmul.f32 %v169, 1.442695
  %v172 = vpow.pop %v171
  %v173 = vmul.f32 %v170, 1.442695
  %v174 = vpow.pop %v173
  %175 = vadd.xlane.f32.xlu0 %v172
  %v176 = vpop.xlane.xlu0 %175
  %177 = vadd.xlane.f32.xlu0 %v174
  %v178 = vpop.xlane.xlu0 %177
  %v179 = vadd.f32 %v157, %v176
  %v180 = vadd.f32 %v158, %v178
  %181 = vst.msk [vmem:[#allocation3] sm:$0xff] %vm138, %v179
  %182 = vst.msk [vmem:[#allocation3 + $0x8] sm:$0xff] %vm138, %v180
  %183 = vst.msk [vmem:[#allocation2] sm:$0xff] %vm138, %v147
  %184 = vst.msk [vmem:[#allocation2 + $0x8] sm:$0xff] %vm138, %v148
  // Predicated region
  $region18: #{rwkv_forward.61} parent=0 // pred_check
    %p185 = pneg %p15
  $region19: #{rwkv_forward.61} parent=0 // pred_check_branch
    %187 = sbr.rel (%p185) target = $region21
  $region20: #{rwkv_forward.61} parent=0 // pred_region
    %v188 = vld [vmem:[#allocation2] sm:$0xff]
    %v189 = vld [vmem:[#allocation2 + $0x8] sm:$0xff]
    %v190 = vld [vmem:[#allocation3] sm:$0xff]
    %v191 = vld [vmem:[#allocation3 + $0x8] sm:$0xff]
    %v192 = vlog2.pop %v190
    %v193 = vmul.f32 %v192, 0.6931472
    %v194 = vlog2.pop %v191
    %v195 = vmul.f32 %v194, 0.6931472
    %v196 = vadd.f32 %v188, %v193
    %v197 = vadd.f32 %v189, %v195
    %v198 = vld [vmem:[#allocation4] sm:$0xff]
    %v199 = vld [vmem:[#allocation4 + $0x8] sm:$0xff]
    %v200 = vsub.f32 %v196, %v198
    %v201 = vsub.f32 %v197, %v199
    %202 = vst.msk [vmem:[%s3] sm:$0xff] %vm138, %v200
    %203 = vst.msk [vmem:[%s3 + $0x8] sm:$0xff] %vm138, %v201
  $region21: #{rwkv_forward.61} parent=0 // pred_fallthru
    _
  // Predicated region
  $region22: #{rwkv_forward.61} parent=0 // pred_check
    _
  $region23: #{rwkv_forward.61} parent=0 // pred_check_branch
    %205 = sbr.rel (0) target = $region25
  $region24: #{rwkv_forward.61} parent=0 // pred_region
    _
  $region25: #{rwkv_forward.61} parent=0 // pred_fallthru
    _
  // Predicated region
  $region26: #{rwkv_forward.61} parent=0 // pred_check
    _
  $region27: #{rwkv_forward.61} parent=0 // pred_check_branch
    %207 = sbr.rel (0) target = $region29
  $region28: #{rwkv_forward.61} parent=0 // pred_region
    _
  $region29: #{rwkv_forward.61} parent=0 // pred_fallthru
    _

</llo_original>
